<compile_context>
chip_gen: v5e
topology: v5e:2x2
jax: 0.10.0
libtpu: 0.0.40
codegen_flags: <defaults>
</compile_context>

<pallas_src>
import jax
import jax.numpy as jnp
from jax import lax
from jax.experimental import pallas as pl
from jax.experimental.pallas import tpu as pltpu


def _round_up(x, m):
    return -(-x // m) * m


def _pick_b_tile(batch, cap=256):
    """Largest multiple-of-8 divisor of `batch` that is <= cap and leaves
    >= 2 batch tiles (v7x megacore needs a parallel axis of extent >= 2);
    falls back to the whole batch (full-dim block is always layout-legal)."""
    cands = [d for d in range(8, min(cap, batch // 2) + 1, 8) if batch % d == 0]
    return max(cands) if cands else batch


def fasttext_kernel(ids_ref, w_ref, b_ref, out_ref):
    # ids_ref : (b_tile, L)      int32     token ids for this batch tile
    # w_ref   : (v_tile, O_pad)  f32/bf16  fused table tile  (emb @ fc_w.T)
    # b_ref   : (1, O_pad)       f32       fc bias (padded cols = -1e30)
    # out_ref : (b_tile, O_pad)  f32       logit accumulator -> softmax probs
    k = pl.program_id(1)
    num_k = pl.num_programs(1)

    @pl.when(k == 0)
    def _init():
        out_ref[...] = jnp.zeros_like(out_ref)

    b_tile, seq_len = ids_ref.shape
    v_tile = w_ref.shape[0]

    # Bag-of-words counts for this vocab tile, built 2-D / lane-major on the
    # VPU.  Accumulate as int32 and cast once per tile.  Ids outside this
    # tile match no lane and contribute zero.
    ids_local = ids_ref[...] - k * v_tile                         # (b_tile, L)
    lane_iota = lax.broadcasted_iota(jnp.int32, (b_tile, v_tile), 1)
    counts = jnp.zeros((b_tile, v_tile), jnp.int32)
    for l in range(seq_len):            # static unroll; pure VPU, 2-D blocks
        counts = counts + (ids_local[:, l:l + 1] == lane_iota).astype(jnp.int32)
    # TODO(synk): for very large vocabularies replace this O(B*V*L) one-hot
    # build with a scalar-prefetch gather-accumulate (O(B*L*O) work).

    # counts <= L are small exact integers -> lossless cast to table dtype.
    out_ref[...] += jnp.dot(counts.astype(w_ref.dtype), w_ref[...],
                            preferred_element_type=jnp.float32)

    @pl.when(k == num_k - 1)
    def _finalize():
        logits = out_ref[...] * (1.0 / seq_len) + b_ref[...]      # (b_tile, O_pad)
        m = jnp.max(logits, axis=1, keepdims=True)
        e = jnp.exp(logits - m)                                   # pads -> 0
        denom = jnp.sum(e, axis=1, keepdims=True)
        out_ref[...] = e * pl.reciprocal(denom, approx=False)


def prepare_fasttext_params(emb_table, fc_weight, fc_bias, *,
                            param_dtype=None,
                            max_resident_table_bytes=8 * 1024 * 1024,
                            v_tile_stream=2048):
    """One-time (cacheable) parameter fusion + layout prep.

    Call this once per set of weights and reuse the result across forward
    calls; it does the 2*V*E*O-FLOP fusion, padding and optional bf16 cast
    that must NOT sit on the per-call path.
    """
    V, E = emb_table.shape
    O = fc_weight.shape[0]
    w_fused = jnp.dot(emb_table, fc_weight.T,
                      precision=lax.Precision.HIGHEST)            # (V, O)
    if param_dtype is not None:
        w_fused = w_fused.astype(param_dtype)
    itemsize = jnp.dtype(w_fused.dtype).itemsize

    # Resident, lane-dense layout when the padded table is small enough to sit
    # in VMEM (budget sized against v7x's 64 MiB, assuming double buffering).
    v_pad_res = _round_up(V, 128)
    o_pad_res = _round_up(O, 128)
    resident = v_pad_res * o_pad_res * itemsize <= max_resident_table_bytes

    if resident:
        v_pad, o_pad, v_tile = v_pad_res, o_pad_res, v_pad_res
    else:
        # Stream the table over a vocab-reduction axis; keep O unpadded so HBM
        # table traffic is not inflated by the lane padding.
        v_tile = v_tile_stream
        v_pad, o_pad = _round_up(V, v_tile), O

    if (v_pad, o_pad) != (V, O):
        w_fused = jnp.pad(w_fused, ((0, v_pad - V), (0, o_pad - O)))
    # Padded output columns get a huge negative bias so softmax assigns them
    # exactly zero probability; real columns get the true bias.
    bias = jnp.full((1, o_pad), -1e30, jnp.float32)
    bias = bias.at[0, :O].set(fc_bias.astype(jnp.float32))

    return {"table": w_fused, "bias": bias, "num_outputs": O, "v_tile": v_tile}


def fasttext_forward_fused(ids, fused, *, b_tile=256):
    """softmax(Linear(mean(Embedding(ids), axis=1)), axis=1) from fused params."""
    B, L = ids.shape
    table, bias, O = fused["table"], fused["bias"], fused["num_outputs"]
    v_pad, o_pad = table.shape
    v_tile = fused["v_tile"]
    num_v_tiles = v_pad // v_tile

    if table.dtype != jnp.float32:
        # counts <= L must survive the cast to the low-precision table dtype.
        assert L <= 256, "bag length too long for exact low-precision counts"

    b_tile = _pick_b_tile(B, cap=b_tile)
    grid = (B // b_tile, num_v_tiles)   # batch parallel, vocab reduction last

    out = pl.pallas_call(
        fasttext_kernel,
        out_shape=jax.ShapeDtypeStruct((B, o_pad), jnp.float32),
        grid_spec=pltpu.PrefetchScalarGridSpec(
            num_scalar_prefetch=0,
            grid=grid,
            in_specs=[
                pl.BlockSpec((b_tile, L), lambda i, k: (i, 0)),      # ids
                pl.BlockSpec((v_tile, o_pad), lambda i, k: (k, 0)),  # table
                pl.BlockSpec((1, o_pad), lambda i, k: (0, 0)),       # bias
            ],
            # Output block index ignores k -> resident accumulator across the
            # vocab reduction axis (no extra scratch buffer needed).
            out_specs=pl.BlockSpec((b_tile, o_pad), lambda i, k: (i, 0)),
        ),
        compiler_params=pltpu.CompilerParams(
            dimension_semantics=("parallel", "arbitrary"),
            # Above v5e's 16 MiB scoped default, safely under v7x's 64 MiB
            # physical VMEM; the 8 MiB resident-table budget (double-buffered)
            # plus ids/out tiles stays comfortably inside.
            vmem_limit_bytes=32 * 1024 * 1024,
        ),
    )(ids, table, bias)
    return out[:, :O] if o_pad != O else out


def fasttext_forward(ids, emb_table, fc_weight, fc_bias, **kwargs):
    """Convenience wrapper. NOTE: re-fuses the parameters every call; prefer
    prepare_fasttext_params(...) once + fasttext_forward_fused(...) per call."""
    prep_kw = {k: kwargs.pop(k) for k in
               ("param_dtype", "max_resident_table_bytes", "v_tile_stream")
               if k in kwargs}
    fused = prepare_fasttext_params(emb_table, fc_weight, fc_bias, **prep_kw)
    return fasttext_forward_fused(ids, fused, **kwargs)


def reference_forward(ids, emb_table, fc_weight, fc_bias):
    embedded = jnp.take(emb_table, ids, axis=0)                   # (B, L, E)
    averaged = jnp.mean(embedded, axis=1)                         # (B, E)
    logits = jnp.dot(averaged, fc_weight.T,
                     precision=lax.Precision.HIGHEST) + fc_bias
    return jax.nn.softmax(logits, axis=1)


if __name__ == "__main__":
    # Small but representative shapes: vocab big enough to exercise both the
    # resident and (forced) streaming paths; batch big enough for >= 2 tiles.
    B, L = 64, 16            # batch, bag length
    V, E, O = 2048, 64, 16   # vocab, embedding_size, output_size

    key = jax.random.PRNGKey(0)
    k_ids, k_emb, k_w, k_b = jax.random.split(key, 4)

    # Deterministic params mirroring PyTorch defaults:
    #   nn.Embedding ~ N(0, 1); nn.Linear ~ U(-1/sqrt(E), 1/sqrt(E)).
    emb_table = jax.random.normal(k_emb, (V, E), dtype=jnp.float32)
    bound = 1.0 / (E ** 0.5)
    fc_weight = jax.random.uniform(k_w, (O, E), minval=-bound, maxval=bound,
                                   dtype=jnp.float32)
    fc_bias = jax.random.uniform(k_b, (O,), minval=-bound, maxval=bound,
                                 dtype=jnp.float32)
    ids = jax.random.randint(k_ids, (B, L), 0, V, dtype=jnp.int32)

    ref = reference_forward(ids, emb_table, fc_weight, fc_bias)

    # 1) f32 fused table, VMEM-resident lane-dense path (default for this size).
    fused_f32 = prepare_fasttext_params(emb_table, fc_weight, fc_bias)
    out_f32 = jax.block_until_ready(fasttext_forward_fused(ids, fused_f32))
    assert out_f32.shape == (B, O)
    assert jnp.allclose(jnp.sum(out_f32, axis=1), 1.0, atol=1e-5)
    assert jnp.allclose(out_f32, ref, atol=1e-5, rtol=1e-5), "f32 resident mismatch"

    # 2) bf16 fused table (halves table bytes; MXU still accumulates in f32).
    fused_bf16 = prepare_fasttext_params(emb_table, fc_weight, fc_bias,
                                         param_dtype=jnp.bfloat16)
    out_bf16 = jax.block_until_ready(fasttext_forward_fused(ids, fused_bf16))
    assert jnp.allclose(out_bf16, ref, atol=2e-3), "bf16 resident mismatch"

    # 3) Forced streaming vocab-reduction path (exercises the large-vocab code).
    fused_stream = prepare_fasttext_params(emb_table, fc_weight, fc_bias,
                                           max_resident_table_bytes=0,
                                           v_tile_stream=512)
    out_stream = jax.block_until_ready(fasttext_forward_fused(ids, fused_stream))
    assert jnp.allclose(out_stream, ref, atol=1e-5, rtol=1e-5), "streaming mismatch"

    print("KERNEL_OK")
</pallas_src>

<mosaic_0001>
module attributes {stable_mosaic.version = 11 : i64} {
  func.func @fasttext_kernel(%arg0: i32, %arg1: i32, %arg2: memref<32x16xi32, #tpu.memory_space<vmem>>, %arg3: memref<2048x128xf32, #tpu.memory_space<vmem>>, %arg4: memref<1x128xf32, #tpu.memory_space<vmem>>, %arg5: memref<32x128xf32, #tpu.memory_space<vmem>>) attributes {dimension_semantics = [#tpu.dimension_semantics<parallel>, #tpu.dimension_semantics<arbitrary>], iteration_bounds = array<i64: 2, 1>, scalar_prefetch = 0 : i64, scratch_operands = 0 : i64, tpu.core_type = #tpu.core_type<tc>, window_params = [{transform_indices = @transform_0, window_bounds = array<i64: 32, 16>}, {transform_indices = @transform_1, window_bounds = array<i64: 2048, 128>}, {pipeline_mode = #tpu.pipeline_mode<synchronous>, transform_indices = @transform_2, window_bounds = array<i64: 1, 128>}, {transform_indices = @transform_3, window_bounds = array<i64: 32, 128>}]} {
    %c0_i32 = arith.constant 0 : i32
    %0 = arith.cmpi eq, %arg1, %c0_i32 : i32
    %1 = arith.extui %0 : i1 to i32
    %c0_i32_0 = arith.constant 0 : i32
    %2 = arith.cmpi ne, %1, %c0_i32_0 : i32
    scf.if %2 {
      %cst_11 = arith.constant 0.000000e+00 : f32
      %98 = vector.broadcast %cst_11 : f32 to vector<32x128xf32>
      %c0_12 = arith.constant 0 : index
      %c0_13 = arith.constant 0 : index
      %99 = vector.load %arg5[%c0_12, %c0_13] : memref<32x128xf32, #tpu.memory_space<vmem>>, vector<32x128xf32>
      tpu.vector_store %arg5[%c0_12, %c0_13], %98 {strides = array<i32>} : memref<32x128xf32, #tpu.memory_space<vmem>>, vector<32x128xf32>,
    } else {
    }
    %c0 = arith.constant 0 : index
    %c0_1 = arith.constant 0 : index
    %3 = vector.load %arg2[%c0, %c0_1] : memref<32x16xi32, #tpu.memory_space<vmem>>, vector<32x16xi32>
    %c2048_i32 = arith.constant 2048 : i32
    %4 = arith.muli %arg1, %c2048_i32 : i32
    %5 = vector.broadcast %4 : i32 to vector<32x16xi32>
    %6 = arith.subi %3, %5 : vector<32x16xi32>
    %7 = tpu.iota {dimensions = array<i32: 1>} : vector<32x2048xi32>
    %c0_i32_2 = arith.constant 0 : i32
    %8 = vector.broadcast %c0_i32_2 : i32 to vector<32x2048xi32>
    %9 = vector.extract_strided_slice %6 {offsets = [0, 0], sizes = [32, 1], strides = [1, 1]} : vector<32x16xi32> to vector<32x1xi32>
    %10 = vector.broadcast %9 : vector<32x1xi32> to vector<32x2048xi32>
    %11 = arith.cmpi eq, %10, %7 : vector<32x2048xi32>
    %12 = arith.extui %11 : vector<32x2048xi1> to vector<32x2048xi32>
    %13 = arith.addi %8, %12 : vector<32x2048xi32>
    %14 = vector.extract_strided_slice %6 {offsets = [0, 1], sizes = [32, 1], strides = [1, 1]} : vector<32x16xi32> to vector<32x1xi32>
    %15 = vector.broadcast %14 : vector<32x1xi32> to vector<32x2048xi32>
    %16 = arith.cmpi eq, %15, %7 : vector<32x2048xi32>
    %17 = arith.extui %16 : vector<32x2048xi1> to vector<32x2048xi32>
    %18 = arith.addi %13, %17 : vector<32x2048xi32>
    %19 = vector.extract_strided_slice %6 {offsets = [0, 2], sizes = [32, 1], strides = [1, 1]} : vector<32x16xi32> to vector<32x1xi32>
    %20 = vector.broadcast %19 : vector<32x1xi32> to vector<32x2048xi32>
    %21 = arith.cmpi eq, %20, %7 : vector<32x2048xi32>
    %22 = arith.extui %21 : vector<32x2048xi1> to vector<32x2048xi32>
    %23 = arith.addi %18, %22 : vector<32x2048xi32>
    %24 = vector.extract_strided_slice %6 {offsets = [0, 3], sizes = [32, 1], strides = [1, 1]} : vector<32x16xi32> to vector<32x1xi32>
    %25 = vector.broadcast %24 : vector<32x1xi32> to vector<32x2048xi32>
    %26 = arith.cmpi eq, %25, %7 : vector<32x2048xi32>
    %27 = arith.extui %26 : vector<32x2048xi1> to vector<32x2048xi32>
    %28 = arith.addi %23, %27 : vector<32x2048xi32>
    %29 = vector.extract_strided_slice %6 {offsets = [0, 4], sizes = [32, 1], strides = [1, 1]} : vector<32x16xi32> to vector<32x1xi32>
    %30 = vector.broadcast %29 : vector<32x1xi32> to vector<32x2048xi32>
    %31 = arith.cmpi eq, %30, %7 : vector<32x2048xi32>
    %32 = arith.extui %31 : vector<32x2048xi1> to vector<32x2048xi32>
    %33 = arith.addi %28, %32 : vector<32x2048xi32>
    %34 = vector.extract_strided_slice %6 {offsets = [0, 5], sizes = [32, 1], strides = [1, 1]} : vector<32x16xi32> to vector<32x1xi32>
    %35 = vector.broadcast %34 : vector<32x1xi32> to vector<32x2048xi32>
    %36 = arith.cmpi eq, %35, %7 : vector<32x2048xi32>
    %37 = arith.extui %36 : vector<32x2048xi1> to vector<32x2048xi32>
    %38 = arith.addi %33, %37 : vector<32x2048xi32>
    %39 = vector.extract_strided_slice %6 {offsets = [0, 6], sizes = [32, 1], strides = [1, 1]} : vector<32x16xi32> to vector<32x1xi32>
    %40 = vector.broadcast %39 : vector<32x1xi32> to vector<32x2048xi32>
    %41 = arith.cmpi eq, %40, %7 : vector<32x2048xi32>
    %42 = arith.extui %41 : vector<32x2048xi1> to vector<32x2048xi32>
    %43 = arith.addi %38, %42 : vector<32x2048xi32>
    %44 = vector.extract_strided_slice %6 {offsets = [0, 7], sizes = [32, 1], strides = [1, 1]} : vector<32x16xi32> to vector<32x1xi32>
    %45 = vector.broadcast %44 : vector<32x1xi32> to vector<32x2048xi32>
    %46 = arith.cmpi eq, %45, %7 : vector<32x2048xi32>
    %47 = arith.extui %46 : vector<32x2048xi1> to vector<32x2048xi32>
    %48 = arith.addi %43, %47 : vector<32x2048xi32>
    %49 = vector.extract_strided_slice %6 {offsets = [0, 8], sizes = [32, 1], strides = [1, 1]} : vector<32x16xi32> to vector<32x1xi32>
    %50 = vector.broadcast %49 : vector<32x1xi32> to vector<32x2048xi32>
    %51 = arith.cmpi eq, %50, %7 : vector<32x2048xi32>
    %52 = arith.extui %51 : vector<32x2048xi1> to vector<32x2048xi32>
    %53 = arith.addi %48, %52 : vector<32x2048xi32>
    %54 = vector.extract_strided_slice %6 {offsets = [0, 9], sizes = [32, 1], strides = [1, 1]} : vector<32x16xi32> to vector<32x1xi32>
    %55 = vector.broadcast %54 : vector<32x1xi32> to vector<32x2048xi32>
    %56 = arith.cmpi eq, %55, %7 : vector<32x2048xi32>
    %57 = arith.extui %56 : vector<32x2048xi1> to vector<32x2048xi32>
    %58 = arith.addi %53, %57 : vector<32x2048xi32>
    %59 = vector.extract_strided_slice %6 {offsets = [0, 10], sizes = [32, 1], strides = [1, 1]} : vector<32x16xi32> to vector<32x1xi32>
    %60 = vector.broadcast %59 : vector<32x1xi32> to vector<32x2048xi32>
    %61 = arith.cmpi eq, %60, %7 : vector<32x2048xi32>
    %62 = arith.extui %61 : vector<32x2048xi1> to vector<32x2048xi32>
    %63 = arith.addi %58, %62 : vector<32x2048xi32>
    %64 = vector.extract_strided_slice %6 {offsets = [0, 11], sizes = [32, 1], strides = [1, 1]} : vector<32x16xi32> to vector<32x1xi32>
    %65 = vector.broadcast %64 : vector<32x1xi32> to vector<32x2048xi32>
    %66 = arith.cmpi eq, %65, %7 : vector<32x2048xi32>
    %67 = arith.extui %66 : vector<32x2048xi1> to vector<32x2048xi32>
    %68 = arith.addi %63, %67 : vector<32x2048xi32>
    %69 = vector.extract_strided_slice %6 {offsets = [0, 12], sizes = [32, 1], strides = [1, 1]} : vector<32x16xi32> to vector<32x1xi32>
    %70 = vector.broadcast %69 : vector<32x1xi32> to vector<32x2048xi32>
    %71 = arith.cmpi eq, %70, %7 : vector<32x2048xi32>
    %72 = arith.extui %71 : vector<32x2048xi1> to vector<32x2048xi32>
    %73 = arith.addi %68, %72 : vector<32x2048xi32>
    %74 = vector.extract_strided_slice %6 {offsets = [0, 13], sizes = [32, 1], strides = [1, 1]} : vector<32x16xi32> to vector<32x1xi32>
    %75 = vector.broadcast %74 : vector<32x1xi32> to vector<32x2048xi32>
    %76 = arith.cmpi eq, %75, %7 : vector<32x2048xi32>
    %77 = arith.extui %76 : vector<32x2048xi1> to vector<32x2048xi32>
    %78 = arith.addi %73, %77 : vector<32x2048xi32>
    %79 = vector.extract_strided_slice %6 {offsets = [0, 14], sizes = [32, 1], strides = [1, 1]} : vector<32x16xi32> to vector<32x1xi32>
    %80 = vector.broadcast %79 : vector<32x1xi32> to vector<32x2048xi32>
    %81 = arith.cmpi eq, %80, %7 : vector<32x2048xi32>
    %82 = arith.extui %81 : vector<32x2048xi1> to vector<32x2048xi32>
    %83 = arith.addi %78, %82 : vector<32x2048xi32>
    %84 = vector.extract_strided_slice %6 {offsets = [0, 15], sizes = [32, 1], strides = [1, 1]} : vector<32x16xi32> to vector<32x1xi32>
    %85 = vector.broadcast %84 : vector<32x1xi32> to vector<32x2048xi32>
    %86 = arith.cmpi eq, %85, %7 : vector<32x2048xi32>
    %87 = arith.extui %86 : vector<32x2048xi1> to vector<32x2048xi32>
    %88 = arith.addi %83, %87 : vector<32x2048xi32>
    %c0_3 = arith.constant 0 : index
    %c0_4 = arith.constant 0 : index
    %89 = vector.load %arg5[%c0_3, %c0_4] : memref<32x128xf32, #tpu.memory_space<vmem>>, vector<32x128xf32>
    %90 = arith.sitofp %88 : vector<32x2048xi32> to vector<32x2048xf32>
    %c0_5 = arith.constant 0 : index
    %c0_6 = arith.constant 0 : index
    %91 = vector.load %arg3[%c0_5, %c0_6] : memref<2048x128xf32, #tpu.memory_space<vmem>>, vector<2048x128xf32>
    %cst = arith.constant dense<0.000000e+00> : vector<32x128xf32>
    %92 = tpu.matmul %90, %91, %cst {dimension_numbers = #tpu.dot_dimension_numbers<[1], [0], [0], [1], [0, 0, 1, 1], [], []>} : vector<32x2048xf32>, vector<2048x128xf32>, vector<32x128xf32> -> vector<32x128xf32>
    %93 = arith.addf %89, %92 : vector<32x128xf32>
    %c0_7 = arith.constant 0 : index
    %c0_8 = arith.constant 0 : index
    %94 = vector.load %arg5[%c0_7, %c0_8] : memref<32x128xf32, #tpu.memory_space<vmem>>, vector<32x128xf32>
    tpu.vector_store %arg5[%c0_7, %c0_8], %93 {strides = array<i32>} : memref<32x128xf32, #tpu.memory_space<vmem>>, vector<32x128xf32>,
    %c0_i32_9 = arith.constant 0 : i32
    %95 = arith.cmpi eq, %arg1, %c0_i32_9 : i32
    %96 = arith.extui %95 : i1 to i32
    %c0_i32_10 = arith.constant 0 : i32
    %97 = arith.cmpi ne, %96, %c0_i32_10 : i32
    scf.if %97 {
      %c0_11 = arith.constant 0 : index
      %c0_12 = arith.constant 0 : index
      %98 = vector.load %arg5[%c0_11, %c0_12] : memref<32x128xf32, #tpu.memory_space<vmem>>, vector<32x128xf32>
      %cst_13 = arith.constant 6.250000e-02 : f32
      %99 = vector.broadcast %cst_13 : f32 to vector<32x128xf32>
      %100 = arith.mulf %98, %99 : vector<32x128xf32>
      %c0_14 = arith.constant 0 : index
      %c0_15 = arith.constant 0 : index
      %101 = vector.load %arg4[%c0_14, %c0_15] : memref<1x128xf32, #tpu.memory_space<vmem>>, vector<1x128xf32>
      %102 = vector.broadcast %101 : vector<1x128xf32> to vector<32x128xf32>
      %103 = arith.addf %100, %102 : vector<32x128xf32>
      %cst_16 = arith.constant dense<0xFF800000> : vector<32xf32>
      %104 = vector.multi_reduction <maximumf>, %103, %cst_16 [1] : vector<32x128xf32> to vector<32xf32>
      %105 = vector.shape_cast %104 : vector<32xf32> to vector<32x1xf32>
      %106 = vector.broadcast %105 : vector<32x1xf32> to vector<32x128xf32>
      %107 = arith.subf %103, %106 : vector<32x128xf32>
      %108 = math.exp %107 : vector<32x128xf32>
      %cst_17 = arith.constant dense<0.000000e+00> : vector<32xf32>
      %109 = vector.multi_reduction <add>, %108, %cst_17 [1] : vector<32x128xf32> to vector<32xf32>
      %110 = vector.shape_cast %109 : vector<32xf32> to vector<32x1xf32>
      %111 = tpu.reciprocal %110 : vector<32x1xf32> -> vector<32x1xf32>
      %112 = vector.broadcast %111 : vector<32x1xf32> to vector<32x128xf32>
      %113 = arith.mulf %108, %112 : vector<32x128xf32>
      %c0_18 = arith.constant 0 : index
      %c0_19 = arith.constant 0 : index
      %114 = vector.load %arg5[%c0_18, %c0_19] : memref<32x128xf32, #tpu.memory_space<vmem>>, vector<32x128xf32>
      tpu.vector_store %arg5[%c0_18, %c0_19], %113 {strides = array<i32>} : memref<32x128xf32, #tpu.memory_space<vmem>>, vector<32x128xf32>,
    } else {
    }
    return
  }
  func.func @transform_0(%arg0: i32, %arg1: i32) -> (i32, i32) {
    %c0_i32 = arith.constant 0 : i32
    %c0_i32_0 = arith.constant 0 : i32
    return %arg0, %c0_i32 : i32, i32
  }
  func.func @transform_1(%arg0: i32, %arg1: i32) -> (i32, i32) {
    %c0_i32 = arith.constant 0 : i32
    %c0_i32_0 = arith.constant 0 : i32
    return %arg1, %c0_i32 : i32, i32
  }
  func.func @transform_2(%arg0: i32, %arg1: i32) -> (i32, i32) {
    %c0_i32 = arith.constant 0 : i32
    %c0_i32_0 = arith.constant 0 : i32
    %c0_i32_1 = arith.constant 0 : i32
    return %c0_i32, %c0_i32_0 : i32, i32
  }
  func.func @transform_3(%arg0: i32, %arg1: i32) -> (i32, i32) {
    %c0_i32 = arith.constant 0 : i32
    %c0_i32_0 = arith.constant 0 : i32
    return %arg0, %c0_i32 : i32, i32
  }
}

</mosaic_0001>

<llo_original>
// kernel: tpu_custom_call.1
$region0: #{tpu_custom_call.1}
  #allocation0 [shape = 'u32[]', space=smem, size = 0x4, offset = 0x4, fixed_abs, tag = 'smem constant byte address 0x4 - core index']
  #allocation1 [shape = 'u32[72,128]{1,0:T(1,128)}', space=vmem, size = 0x9000, scoped, tag = 'internal scratch']
  %s0 = inlined_call_operand.vmem [shape: s32[64,16], index: 0, kind: input, shape index: {}]
  %s1 = inlined_call_operand.hbm [shape: f32[2048,128], index: 1, kind: input, shape index: {}]
  %s2 = inlined_call_operand.vmem [shape: f32[1,128], index: 2, kind: input, shape index: {}]
  %s3 = inlined_call_operand.hbm [shape: f32[64,128], index: 3, kind: output, shape index: {}]
  %s4 = sld [smem:[#allocation0]]
  $region57: #{tpu_custom_call.1} parent=0
    _
  %s6 = ssub.s32 1, %s4
  %s7 = scalar_select 0, %s6, %s4
  $region1: #{tpu_custom_call.1} parent=0
    #allocation2 [shape = 'u8[1048576]{0}', space=vmem, size = 0x100000, scoped, tag = 'input window, operand 1, single buffered']
    #allocation3 [shape = 's32[2]{0}', space=sflag, size = 0x8, scoped, tag = 'scoped memory for tpu_custom_call.1']
    #allocation4 [shape = 's32[2]{0}', space=sflag, size = 0x8, scoped, tag = 'scoped memory for tpu_custom_call.1']
    #allocation5 [shape = 'u8[32768]{0}', space=vmem, size = 0x8000, scoped, tag = 'output window, operand 0']
    %8 = vsyncpa [#allocation3], 0
    %9 = vsyncpa [#allocation4], 0
    %s10 = scalar_lea.sflag [#allocation4], 1
    %11 = vsyncpa %s10, 0
    loop: start=0, step=1, limit=4
    $region2: #{tpu_custom_call.1} parent=1 // loop_pre_header
      _
    $region3: #{tpu_custom_call.1} parent=1 // loop_header
      %s13 = sphi 0, %s17
      %p14 = scmp.ge.s32.totalorder %s13, 4
      %s20 = sphi 0, %s32
      %s21 = sphi 0, %s28
      %s22 = sphi 0, %s20
      %s23 = sphi 0, %s21
      %s24 = sphi 0, %s22
      %s25 = sphi 0, %s23
      %s35 = sphi 0, %s37
      %s38 = sphi 0, %s35
      %s39 = sphi 0, %s38
      %s55 = sphi 0, %s39
      %s61 = sphi 0, %s63
      %s64 = sphi 0, %s61
      %s65 = sphi 0, %s64
      %s81 = sphi 0, %s65
      %s85 = sphi 0, %s85
      %s87 = sphi 0, %s85
      %s88 = sphi 0, %s87
      %s102 = sphi 0, %s88
      %s108 = sphi 0, %s110
      %s111 = sphi 0, %s108
      %s112 = sphi 0, %s111
      %s128 = sphi 0, %s112
    $region4: #{tpu_custom_call.1} parent=1 // loop_header_branch
      %16 = sbr.rel (%p14) target = $region8
    $region5: #{tpu_custom_call.1} parent=1 // loop_body
      %s18 = ssub.s32 %s13, 1
      %s19 = ssub.s32 %s13, 2
      %s26 = sadd.s32 1, %s21
      %p27 = scmp.ge.s32.totalorder %s26, 1
      %s28 = scalar_select %p27, 0, %s26
      %s29 = sadd.s32 1, %s20
      %s30 = scalar_select %p27, %s29, %s20
      %p31 = scmp.ge.s32.totalorder %s30, 2
      %s32 = scalar_select %p31, 0, %s30
      %s33 = ssub.s32 %s20, %s32
      %p34 = scmp.eq.s32.totalorder %s33, 0
      %s36 = sadd.s32 %s35, 1
      %s37 = scalar_select %p34, %s35, %s36
      %p40 = pneg %p34
      %p41 = scmp.eq.s32.totalorder %s13, 1
      %p42 = por %p40, %p41
      %p43 = scmp.ne.s32.totalorder %s35, %s38
      %p44 = scmp.eq.s32.totalorder %s13, 0
      %p45 = por %p43, %p44
      %p46 = scmp.ne.s32.totalorder %s35, %s38
      %p47 = scmp.eq.s32.totalorder %s18, 1
      %p48 = por %p46, %p47
      %p49 = scmp.ne.s32.totalorder %s38, %s39
      %p50 = scmp.eq.s32.totalorder %s18, 0
      %p51 = por %p49, %p50
      %p52 = scmp.ne.s32.totalorder %s38, %s39
      %p53 = scmp.eq.s32.totalorder %s19, 1
      %p54 = por %p52, %p53
      %p56 = scmp.ne.s32.totalorder %s39, %s55
      %p57 = scmp.eq.s32.totalorder %s19, 0
      %p58 = por %p56, %p57
      %s59 = ssub.s32 %s21, %s28
      %p60 = scmp.eq.s32.totalorder %s59, 0
      %s62 = sadd.s32 %s61, 1
      %s63 = scalar_select %p60, %s61, %s62
      %p66 = pneg %p60
      %p67 = scmp.eq.s32.totalorder %s13, 1
      %p68 = por %p66, %p67
      %p69 = scmp.ne.s32.totalorder %s61, %s64
      %p70 = scmp.eq.s32.totalorder %s13, 0
      %p71 = por %p69, %p70
      %p72 = scmp.ne.s32.totalorder %s61, %s64
      %p73 = scmp.eq.s32.totalorder %s18, 1
      %p74 = por %p72, %p73
      %p75 = scmp.ne.s32.totalorder %s64, %s65
      %p76 = scmp.eq.s32.totalorder %s18, 0
      %p77 = por %p75, %p76
      %p78 = scmp.ne.s32.totalorder %s64, %s65
      %p79 = scmp.eq.s32.totalorder %s19, 1
      %p80 = por %p78, %p79
      %p82 = scmp.ne.s32.totalorder %s65, %s81
      %p83 = scmp.eq.s32.totalorder %s19, 0
      %p84 = por %p82, %p83
      %s86 = sadd.s32 %s85, 1
      %p89 = scmp.eq.s32.totalorder %s13, 1
      %p90 = scmp.ne.s32.totalorder %s85, %s87
      %p91 = scmp.eq.s32.totalorder %s13, 0
      %p92 = por %p90, %p91
      %p93 = scmp.ne.s32.totalorder %s85, %s87
      %p94 = scmp.eq.s32.totalorder %s18, 1
      %p95 = por %p93, %p94
      %p96 = scmp.ne.s32.totalorder %s87, %s88
      %p97 = scmp.eq.s32.totalorder %s18, 0
      %p98 = por %p96, %p97
      %p99 = scmp.ne.s32.totalorder %s87, %s88
      %p100 = scmp.eq.s32.totalorder %s19, 1
      %p101 = por %p99, %p100
      %p103 = scmp.ne.s32.totalorder %s88, %s102
      %p104 = scmp.eq.s32.totalorder %s19, 0
      %p105 = por %p103, %p104
      %s106 = ssub.s32 %s20, %s32
      %p107 = scmp.eq.s32.totalorder %s106, 0
      %s109 = sadd.s32 %s108, 1
      %s110 = scalar_select %p107, %s108, %s109
      %p113 = pneg %p107
      %p114 = scmp.eq.s32.totalorder %s13, 1
      %p115 = por %p113, %p114
      %p116 = scmp.ne.s32.totalorder %s108, %s111
      %p117 = scmp.eq.s32.totalorder %s13, 0
      %p118 = por %p116, %p117
      %p119 = scmp.ne.s32.totalorder %s108, %s111
      %p120 = scmp.eq.s32.totalorder %s18, 1
      %p121 = por %p119, %p120
      %p122 = scmp.ne.s32.totalorder %s111, %s112
      %p123 = scmp.eq.s32.totalorder %s18, 0
      %p124 = por %p122, %p123
      %p125 = scmp.ne.s32.totalorder %s111, %s112
      %p126 = scmp.eq.s32.totalorder %s19, 1
      %p127 = por %p125, %p126
      %p129 = scmp.ne.s32.totalorder %s112, %s128
      %p130 = scmp.eq.s32.totalorder %s19, 0
      %p131 = por %p129, %p130
      %p132 = scmp.le.s32.totalorder 1, %s13
      %p133 = scmp.lt.s32.totalorder %s13, 3
      %p134 = pnand %p132, %p133
      %p135 = pneg %p134
      // Predicated region
      $region9: #{tpu_custom_call.1} parent=5 // pred_check
        _
      $region10: #{tpu_custom_call.1} parent=5 // pred_check_branch
        %137 = sbr.rel (%p134) target = $region12
      $region11: #{tpu_custom_call.1} parent=5 // pred_region
        %s138 = ssub.s32 %s13, 1
        // Predicated region
        $region13: #{tpu_custom_call.1} parent=11 // pred_check
          %p139 = pneg %p77
        $region14: #{tpu_custom_call.1} parent=11 // pred_check_branch
          %141 = sbr.rel (%p139) target = $region16
        $region15: #{tpu_custom_call.1} parent=11 // pred_region
          %s142 = smul.u32 256, %s23
          %144 = vsyncadd [#allocation3], 0
          %s145 = smul.addr %s142, 8
          %s146 = scalar_lea.hbm %s1, %s145
          %s147 = sshll.u32 %s146, 4
          %s148 = int_to_ptr.hbm [resolvable:$true] %s147
          %s149 = sshll.u32 [#allocation2], 4
          %s150 = int_to_ptr.vmem [resolvable:$true] %s149
          %155 = dma.hbm_to_vmem [thread:$0]  %s148, 32768, %s150, [#allocation3], 128, 128, 8
        $region16: #{tpu_custom_call.1} parent=11 // pred_fallthru
          _
        // Predicated region
        $region17: #{tpu_custom_call.1} parent=11 // pred_check
          %p156 = pneg %p98
        $region18: #{tpu_custom_call.1} parent=11 // pred_check_branch
          %158 = sbr.rel (%p156) target = $region20
        $region19: #{tpu_custom_call.1} parent=11 // pred_region
          _
        $region20: #{tpu_custom_call.1} parent=11 // pred_fallthru
          _
      $region12: #{tpu_custom_call.1} parent=5 // pred_fallthru
        _
      %p159 = scmp.lt.s32.totalorder %s13, 2
      // Predicated region
      $region21: #{tpu_custom_call.1} parent=5 // pred_check
        %p160 = pneg %p159
      $region22: #{tpu_custom_call.1} parent=5 // pred_check_branch
        %162 = sbr.rel (%p160) target = $region24
      $region23: #{tpu_custom_call.1} parent=5 // pred_region
        // Predicated region
        $region25: #{tpu_custom_call.1} parent=23 // pred_check
          %p163 = pneg %p45
        $region26: #{tpu_custom_call.1} parent=23 // pred_check_branch
          %165 = sbr.rel (%p163) target = $region28
        $region27: #{tpu_custom_call.1} parent=23 // pred_region
          %s166 = smul.u32 4, %s20
          %p167 = scmp.lt.s32.totalorder %s166, 7
          %s168 = scalar_select %p167, %s166, 7
          %s169 = smul.addr %s168, 8
          %s170 = scalar_lea.vmem %s0, %s169
          %s171 = smul.u32 4, %s20
        $region28: #{tpu_custom_call.1} parent=23 // pred_fallthru
          _
      $region24: #{tpu_custom_call.1} parent=5 // pred_fallthru
        _
      %p172 = scmp.le.s32.totalorder 1, %s13
      %p173 = scmp.lt.s32.totalorder %s13, 3
      %p174 = pnand %p172, %p173
      %p175 = pneg %p174
      // Predicated region
      $region29: #{tpu_custom_call.1} parent=5 // pred_check
        _
      $region30: #{tpu_custom_call.1} parent=5 // pred_check_branch
        %177 = sbr.rel (%p174) target = $region32
      $region31: #{tpu_custom_call.1} parent=5 // pred_region
        %s178 = ssub.s32 %s13, 1
        // Predicated region
        $region33: #{tpu_custom_call.1} parent=31 // pred_check
          %p179 = pneg %p77
        $region34: #{tpu_custom_call.1} parent=31 // pred_check_branch
          %181 = sbr.rel (%p179) target = $region36
        $region35: #{tpu_custom_call.1} parent=31 // pred_region
          %183 = dma.done [#allocation3], 32768
        $region36: #{tpu_custom_call.1} parent=31 // pred_fallthru
          _
        %s184 = smul.u32 4, %s22
        %p185 = scmp.lt.s32.totalorder %s184, 7
        %s186 = scalar_select %p185, %s184, 7
        %s187 = smul.addr %s186, 8
        %s188 = scalar_lea.vmem %s0, %s187
        %p189 = pneg %p51
        %p190 = pneg %p48
        %p191 = pneg %p77
        %p192 = pneg %p74
        %p193 = pneg %p98
        %p194 = pneg %p95
        %p195 = pneg %p124
        %p196 = pneg %p121
        %s197 = sand.u32 %s111, 1
        %s198 = scalar_lea.sflag [#allocation4], %s197
        %s199 = sand.u32 %s111, 1
        %s200 = smul.addr %s199, 32
        %s201 = scalar_lea.vmem [#allocation5], %s200
        %s202 = smul.u32 4, %s22
        %p203 = scmp.lt.s32.totalorder %s202, 7
        %s204 = scalar_select %p203, %s202, 7
        %s205 = smul.addr %s204, 8
        %s206 = scalar_lea.vmem %s0, %s205
        %s207 = smul.u32 4, %s22
        %s208 = smul.u32 256, %s23
        %s209 = smul.u32 4, %s22
        %p210 = scmp.eq.s32.totalorder %s23, 0
        // Predicated region
        $region37: #{tpu_custom_call.1} parent=31 // pred_check
          %p211 = pneg %p210
        $region38: #{tpu_custom_call.1} parent=31 // pred_check_branch
          %213 = sbr.rel (%p211) target = $region40
        $region39: #{tpu_custom_call.1} parent=31 // pred_region
          %214 = vst [vmem:[%s201] sm:$0xff] 0.0
          %215 = vst [vmem:[%s201 + $0x8] sm:$0xff] 0.0
          %216 = vst [vmem:[%s201 + $0x10] sm:$0xff] 0.0
          %217 = vst [vmem:[%s201 + $0x18] sm:$0xff] 0.0
        $region40: #{tpu_custom_call.1} parent=31 // pred_fallthru
          _
        %v218 = vld [vmem:[%s206] sm:$0xff]
        %v219 = vld [vmem:[%s206 + $0x8] sm:$0xff]
        %v220 = vld [vmem:[%s206 + $0x10] sm:$0xff]
        %v221 = vld [vmem:[%s206 + $0x18] sm:$0xff]
        %s222 = smul.u32 %s23, 2048
        %v223 = vstv %s222
        %v224 = vsub.s32 %v218, %v223
        %v225 = vsub.s32 %v219, %v223
        %v226 = vsub.s32 %v220, %v223
        %v227 = vsub.s32 %v221, %v223
        %v228 = vlaneseq
        %v229 = vand.u32 %v228, 127
        %v230 = vadd.s32 %v229, 128
        %v231 = vadd.s32 %v229, 256
        %v232 = vadd.s32 %v229, 384
        %v233 = vadd.s32 %v229, 512
        %v234 = vadd.s32 %v229, 640
        %v235 = vadd.s32 %v229, 768
        %v236 = vadd.s32 %v229, 896
        %v237 = vadd.s32 %v229, 1024
        %v238 = vadd.s32 %v229, 1152
        %v239 = vadd.s32 %v229, 1280
        %v240 = vadd.s32 %v229, 1408
        %v241 = vadd.s32 %v229, 1536
        %v242 = vadd.s32 %v229, 1664
        %v243 = vadd.s32 %v229, 1792
        %v244 = vadd.s32 %v229, 1920
        %245 = vset.pattern.permute.xlu0 0
        %246 = vperm.xlu0 %245, %v224
        %v247 = vpop.permute.xlu0 %246
        %248 = vset.pattern.permute.xlu0 0
        %249 = vperm.xlu0 %248, %v225
        %v250 = vpop.permute.xlu0 %249
        %251 = vset.pattern.permute.xlu0 0
        %252 = vperm.xlu0 %251, %v226
        %v253 = vpop.permute.xlu0 %252
        %254 = vset.pattern.permute.xlu0 0
        %255 = vperm.xlu0 %254, %v227
        %v256 = vpop.permute.xlu0 %255
        %vm257 = vcmp.eq.s32.totalorder %v247, %v229
        %vm258 = vcmp.eq.s32.totalorder %v247, %v230
        %vm259 = vcmp.eq.s32.totalorder %v247, %v231
        %vm260 = vcmp.eq.s32.totalorder %v247, %v232
        %vm261 = vcmp.eq.s32.totalorder %v247, %v233
        %vm262 = vcmp.eq.s32.totalorder %v247, %v234
        %vm263 = vcmp.eq.s32.totalorder %v247, %v235
        %vm264 = vcmp.eq.s32.totalorder %v247, %v236
        %vm265 = vcmp.eq.s32.totalorder %v247, %v237
        %vm266 = vcmp.eq.s32.totalorder %v247, %v238
        %vm267 = vcmp.eq.s32.totalorder %v247, %v239
        %vm268 = vcmp.eq.s32.totalorder %v247, %v240
        %vm269 = vcmp.eq.s32.totalorder %v247, %v241
        %vm270 = vcmp.eq.s32.totalorder %v247, %v242
        %vm271 = vcmp.eq.s32.totalorder %v247, %v243
        %vm272 = vcmp.eq.s32.totalorder %v247, %v244
        %vm273 = vcmp.eq.s32.totalorder %v250, %v229
        %vm274 = vcmp.eq.s32.totalorder %v250, %v230
        %vm275 = vcmp.eq.s32.totalorder %v250, %v231
        %vm276 = vcmp.eq.s32.totalorder %v250, %v232
        %vm277 = vcmp.eq.s32.totalorder %v250, %v233
        %vm278 = vcmp.eq.s32.totalorder %v250, %v234
        %vm279 = vcmp.eq.s32.totalorder %v250, %v235
        %vm280 = vcmp.eq.s32.totalorder %v250, %v236
        %vm281 = vcmp.eq.s32.totalorder %v250, %v237
        %vm282 = vcmp.eq.s32.totalorder %v250, %v238
        %vm283 = vcmp.eq.s32.totalorder %v250, %v239
        %vm284 = vcmp.eq.s32.totalorder %v250, %v240
        %vm285 = vcmp.eq.s32.totalorder %v250, %v241
        %vm286 = vcmp.eq.s32.totalorder %v250, %v242
        %vm287 = vcmp.eq.s32.totalorder %v250, %v243
        %vm288 = vcmp.eq.s32.totalorder %v250, %v244
        %vm289 = vcmp.eq.s32.totalorder %v253, %v229
        %vm290 = vcmp.eq.s32.totalorder %v253, %v230
        %vm291 = vcmp.eq.s32.totalorder %v253, %v231
        %vm292 = vcmp.eq.s32.totalorder %v253, %v232
        %vm293 = vcmp.eq.s32.totalorder %v253, %v233
        %vm294 = vcmp.eq.s32.totalorder %v253, %v234
        %vm295 = vcmp.eq.s32.totalorder %v253, %v235
        %vm296 = vcmp.eq.s32.totalorder %v253, %v236
        %vm297 = vcmp.eq.s32.totalorder %v253, %v237
        %vm298 = vcmp.eq.s32.totalorder %v253, %v238
        %vm299 = vcmp.eq.s32.totalorder %v253, %v239
        %vm300 = vcmp.eq.s32.totalorder %v253, %v240
        %vm301 = vcmp.eq.s32.totalorder %v253, %v241
        %vm302 = vcmp.eq.s32.totalorder %v253, %v242
        %vm303 = vcmp.eq.s32.totalorder %v253, %v243
        %vm304 = vcmp.eq.s32.totalorder %v253, %v244
        %vm305 = vcmp.eq.s32.totalorder %v256, %v229
        %vm306 = vcmp.eq.s32.totalorder %v256, %v230
        %vm307 = vcmp.eq.s32.totalorder %v256, %v231
        %vm308 = vcmp.eq.s32.totalorder %v256, %v232
        %vm309 = vcmp.eq.s32.totalorder %v256, %v233
        %vm310 = vcmp.eq.s32.totalorder %v256, %v234
        %vm311 = vcmp.eq.s32.totalorder %v256, %v235
        %vm312 = vcmp.eq.s32.totalorder %v256, %v236
        %vm313 = vcmp.eq.s32.totalorder %v256, %v237
        %vm314 = vcmp.eq.s32.totalorder %v256, %v238
        %vm315 = vcmp.eq.s32.totalorder %v256, %v239
        %vm316 = vcmp.eq.s32.totalorder %v256, %v240
        %vm317 = vcmp.eq.s32.totalorder %v256, %v241
        %vm318 = vcmp.eq.s32.totalorder %v256, %v242
        %vm319 = vcmp.eq.s32.totalorder %v256, %v243
        %vm320 = vcmp.eq.s32.totalorder %v256, %v244
        %v321 = vsel %vm257, 1, 0
        %v322 = vsel %vm258, 1, 0
        %v323 = vsel %vm259, 1, 0
        %v324 = vsel %vm260, 1, 0
        %v325 = vsel %vm261, 1, 0
        %v326 = vsel %vm262, 1, 0
        %v327 = vsel %vm263, 1, 0
        %v328 = vsel %vm264, 1, 0
        %v329 = vsel %vm265, 1, 0
        %v330 = vsel %vm266, 1, 0
        %v331 = vsel %vm267, 1, 0
        %v332 = vsel %vm268, 1, 0
        %v333 = vsel %vm269, 1, 0
        %v334 = vsel %vm270, 1, 0
        %v335 = vsel %vm271, 1, 0
        %v336 = vsel %vm272, 1, 0
        %v337 = vsel %vm273, 1, 0
        %v338 = vsel %vm274, 1, 0
        %v339 = vsel %vm275, 1, 0
        %v340 = vsel %vm276, 1, 0
        %v341 = vsel %vm277, 1, 0
        %v342 = vsel %vm278, 1, 0
        %v343 = vsel %vm279, 1, 0
        %v344 = vsel %vm280, 1, 0
        %v345 = vsel %vm281, 1, 0
        %v346 = vsel %vm282, 1, 0
        %v347 = vsel %vm283, 1, 0
        %v348 = vsel %vm284, 1, 0
        %v349 = vsel %vm285, 1, 0
        %v350 = vsel %vm286, 1, 0
        %v351 = vsel %vm287, 1, 0
        %v352 = vsel %vm288, 1, 0
        %v353 = vsel %vm289, 1, 0
        %v354 = vsel %vm290, 1, 0
        %v355 = vsel %vm291, 1, 0
        %v356 = vsel %vm292, 1, 0
        %v357 = vsel %vm293, 1, 0
        %v358 = vsel %vm294, 1, 0
        %v359 = vsel %vm295, 1, 0
        %v360 = vsel %vm296, 1, 0
        %v361 = vsel %vm297, 1, 0
        %v362 = vsel %vm298, 1, 0
        %v363 = vsel %vm299, 1, 0
        %v364 = vsel %vm300, 1, 0
        %v365 = vsel %vm301, 1, 0
        %v366 = vsel %vm302, 1, 0
        %v367 = vsel %vm303, 1, 0
        %v368 = vsel %vm304, 1, 0
        %v369 = vsel %vm305, 1, 0
        %v370 = vsel %vm306, 1, 0
        %v371 = vsel %vm307, 1, 0
        %v372 = vsel %vm308, 1, 0
        %v373 = vsel %vm309, 1, 0
        %v374 = vsel %vm310, 1, 0
        %v375 = vsel %vm311, 1, 0
        %v376 = vsel %vm312, 1, 0
        %v377 = vsel %vm313, 1, 0
        %v378 = vsel %vm314, 1, 0
        %v379 = vsel %vm315, 1, 0
        %v380 = vsel %vm316, 1, 0
        %v381 = vsel %vm317, 1, 0
        %v382 = vsel %vm318, 1, 0
        %v383 = vsel %vm319, 1, 0
        %v384 = vsel %vm320, 1, 0
        %385 = vset.pattern.permute.xlu0 1
        %386 = vperm.xlu0 %385, %v224
        %v387 = vpop.permute.xlu0 %386
        %388 = vset.pattern.permute.xlu0 1
        %389 = vperm.xlu0 %388, %v225
        %v390 = vpop.permute.xlu0 %389
        %391 = vset.pattern.permute.xlu0 1
        %392 = vperm.xlu0 %391, %v226
        %v393 = vpop.permute.xlu0 %392
        %394 = vset.pattern.permute.xlu0 1
        %395 = vperm.xlu0 %394, %v227
        %v396 = vpop.permute.xlu0 %395
        %vm397 = vcmp.eq.s32.totalorder %v387, %v229
        %vm398 = vcmp.eq.s32.totalorder %v387, %v230
        %vm399 = vcmp.eq.s32.totalorder %v387, %v231
        %vm400 = vcmp.eq.s32.totalorder %v387, %v232
        %vm401 = vcmp.eq.s32.totalorder %v387, %v233
        %vm402 = vcmp.eq.s32.totalorder %v387, %v234
        %vm403 = vcmp.eq.s32.totalorder %v387, %v235
        %vm404 = vcmp.eq.s32.totalorder %v387, %v236
        %vm405 = vcmp.eq.s32.totalorder %v387, %v237
        %vm406 = vcmp.eq.s32.totalorder %v387, %v238
        %vm407 = vcmp.eq.s32.totalorder %v387, %v239
        %vm408 = vcmp.eq.s32.totalorder %v387, %v240
        %vm409 = vcmp.eq.s32.totalorder %v387, %v241
        %vm410 = vcmp.eq.s32.totalorder %v387, %v242
        %vm411 = vcmp.eq.s32.totalorder %v387, %v243
        %vm412 = vcmp.eq.s32.totalorder %v387, %v244
        %vm413 = vcmp.eq.s32.totalorder %v390, %v229
        %vm414 = vcmp.eq.s32.totalorder %v390, %v230
        %vm415 = vcmp.eq.s32.totalorder %v390, %v231
        %vm416 = vcmp.eq.s32.totalorder %v390, %v232
        %vm417 = vcmp.eq.s32.totalorder %v390, %v233
        %vm418 = vcmp.eq.s32.totalorder %v390, %v234
        %vm419 = vcmp.eq.s32.totalorder %v390, %v235
        %vm420 = vcmp.eq.s32.totalorder %v390, %v236
        %vm421 = vcmp.eq.s32.totalorder %v390, %v237
        %vm422 = vcmp.eq.s32.totalorder %v390, %v238
        %vm423 = vcmp.eq.s32.totalorder %v390, %v239
        %vm424 = vcmp.eq.s32.totalorder %v390, %v240
        %vm425 = vcmp.eq.s32.totalorder %v390, %v241
        %vm426 = vcmp.eq.s32.totalorder %v390, %v242
        %vm427 = vcmp.eq.s32.totalorder %v390, %v243
        %vm428 = vcmp.eq.s32.totalorder %v390, %v244
        %vm429 = vcmp.eq.s32.totalorder %v393, %v229
        %vm430 = vcmp.eq.s32.totalorder %v393, %v230
        %vm431 = vcmp.eq.s32.totalorder %v393, %v231
        %vm432 = vcmp.eq.s32.totalorder %v393, %v232
        %vm433 = vcmp.eq.s32.totalorder %v393, %v233
        %vm434 = vcmp.eq.s32.totalorder %v393, %v234
        %vm435 = vcmp.eq.s32.totalorder %v393, %v235
        %vm436 = vcmp.eq.s32.totalorder %v393, %v236
        %vm437 = vcmp.eq.s32.totalorder %v393, %v237
        %vm438 = vcmp.eq.s32.totalorder %v393, %v238
        %vm439 = vcmp.eq.s32.totalorder %v393, %v239
        %vm440 = vcmp.eq.s32.totalorder %v393, %v240
        %vm441 = vcmp.eq.s32.totalorder %v393, %v241
        %vm442 = vcmp.eq.s32.totalorder %v393, %v242
        %vm443 = vcmp.eq.s32.totalorder %v393, %v243
        %vm444 = vcmp.eq.s32.totalorder %v393, %v244
        %vm445 = vcmp.eq.s32.totalorder %v396, %v229
        %vm446 = vcmp.eq.s32.totalorder %v396, %v230
        %vm447 = vcmp.eq.s32.totalorder %v396, %v231
        %vm448 = vcmp.eq.s32.totalorder %v396, %v232
        %vm449 = vcmp.eq.s32.totalorder %v396, %v233
        %vm450 = vcmp.eq.s32.totalorder %v396, %v234
        %vm451 = vcmp.eq.s32.totalorder %v396, %v235
        %vm452 = vcmp.eq.s32.totalorder %v396, %v236
        %vm453 = vcmp.eq.s32.totalorder %v396, %v237
        %vm454 = vcmp.eq.s32.totalorder %v396, %v238
        %vm455 = vcmp.eq.s32.totalorder %v396, %v239
        %vm456 = vcmp.eq.s32.totalorder %v396, %v240
        %vm457 = vcmp.eq.s32.totalorder %v396, %v241
        %vm458 = vcmp.eq.s32.totalorder %v396, %v242
        %vm459 = vcmp.eq.s32.totalorder %v396, %v243
        %vm460 = vcmp.eq.s32.totalorder %v396, %v244
        %v461 = vsel %vm397, 1, 0
        %v462 = vsel %vm398, 1, 0
        %v463 = vsel %vm399, 1, 0
        %v464 = vsel %vm400, 1, 0
        %v465 = vsel %vm401, 1, 0
        %v466 = vsel %vm402, 1, 0
        %v467 = vsel %vm403, 1, 0
        %v468 = vsel %vm404, 1, 0
        %v469 = vsel %vm405, 1, 0
        %v470 = vsel %vm406, 1, 0
        %v471 = vsel %vm407, 1, 0
        %v472 = vsel %vm408, 1, 0
        %v473 = vsel %vm409, 1, 0
        %v474 = vsel %vm410, 1, 0
        %v475 = vsel %vm411, 1, 0
        %v476 = vsel %vm412, 1, 0
        %v477 = vsel %vm413, 1, 0
        %v478 = vsel %vm414, 1, 0
        %v479 = vsel %vm415, 1, 0
        %v480 = vsel %vm416, 1, 0
        %v481 = vsel %vm417, 1, 0
        %v482 = vsel %vm418, 1, 0
        %v483 = vsel %vm419, 1, 0
        %v484 = vsel %vm420, 1, 0
        %v485 = vsel %vm421, 1, 0
        %v486 = vsel %vm422, 1, 0
        %v487 = vsel %vm423, 1, 0
        %v488 = vsel %vm424, 1, 0
        %v489 = vsel %vm425, 1, 0
        %v490 = vsel %vm426, 1, 0
        %v491 = vsel %vm427, 1, 0
        %v492 = vsel %vm428, 1, 0
        %v493 = vsel %vm429, 1, 0
        %v494 = vsel %vm430, 1, 0
        %v495 = vsel %vm431, 1, 0
        %v496 = vsel %vm432, 1, 0
        %v497 = vsel %vm433, 1, 0
        %v498 = vsel %vm434, 1, 0
        %v499 = vsel %vm435, 1, 0
        %v500 = vsel %vm436, 1, 0
        %v501 = vsel %vm437, 1, 0
        %v502 = vsel %vm438, 1, 0
        %v503 = vsel %vm439, 1, 0
        %v504 = vsel %vm440, 1, 0
        %v505 = vsel %vm441, 1, 0
        %v506 = vsel %vm442, 1, 0
        %v507 = vsel %vm443, 1, 0
        %v508 = vsel %vm444, 1, 0
        %v509 = vsel %vm445, 1, 0
        %v510 = vsel %vm446, 1, 0
        %v511 = vsel %vm447, 1, 0
        %v512 = vsel %vm448, 1, 0
        %v513 = vsel %vm449, 1, 0
        %v514 = vsel %vm450, 1, 0
        %v515 = vsel %vm451, 1, 0
        %v516 = vsel %vm452, 1, 0
        %v517 = vsel %vm453, 1, 0
        %v518 = vsel %vm454, 1, 0
        %v519 = vsel %vm455, 1, 0
        %v520 = vsel %vm456, 1, 0
        %v521 = vsel %vm457, 1, 0
        %v522 = vsel %vm458, 1, 0
        %v523 = vsel %vm459, 1, 0
        %v524 = vsel %vm460, 1, 0
        %v525 = vadd.s32 %v321, %v461
        %v526 = vadd.s32 %v322, %v462
        %v527 = vadd.s32 %v323, %v463
        %v528 = vadd.s32 %v324, %v464
        %v529 = vadd.s32 %v325, %v465
        %v530 = vadd.s32 %v326, %v466
        %v531 = vadd.s32 %v327, %v467
        %v532 = vadd.s32 %v328, %v468
        %v533 = vadd.s32 %v329, %v469
        %v534 = vadd.s32 %v330, %v470
        %v535 = vadd.s32 %v331, %v471
        %v536 = vadd.s32 %v332, %v472
        %v537 = vadd.s32 %v333, %v473
        %v538 = vadd.s32 %v334, %v474
        %v539 = vadd.s32 %v335, %v475
        %v540 = vadd.s32 %v336, %v476
        %v541 = vadd.s32 %v337, %v477
        %v542 = vadd.s32 %v338, %v478
        %v543 = vadd.s32 %v339, %v479
        %v544 = vadd.s32 %v340, %v480
        %v545 = vadd.s32 %v341, %v481
        %v546 = vadd.s32 %v342, %v482
        %v547 = vadd.s32 %v343, %v483
        %v548 = vadd.s32 %v344, %v484
        %v549 = vadd.s32 %v345, %v485
        %v550 = vadd.s32 %v346, %v486
        %v551 = vadd.s32 %v347, %v487
        %v552 = vadd.s32 %v348, %v488
        %v553 = vadd.s32 %v349, %v489
        %v554 = vadd.s32 %v350, %v490
        %v555 = vadd.s32 %v351, %v491
        %v556 = vadd.s32 %v352, %v492
        %v557 = vadd.s32 %v353, %v493
        %v558 = vadd.s32 %v354, %v494
        %v559 = vadd.s32 %v355, %v495
        %v560 = vadd.s32 %v356, %v496
        %v561 = vadd.s32 %v357, %v497
        %v562 = vadd.s32 %v358, %v498
        %v563 = vadd.s32 %v359, %v499
        %v564 = vadd.s32 %v360, %v500
        %v565 = vadd.s32 %v361, %v501
        %v566 = vadd.s32 %v362, %v502
        %v567 = vadd.s32 %v363, %v503
        %v568 = vadd.s32 %v364, %v504
        %v569 = vadd.s32 %v365, %v505
        %v570 = vadd.s32 %v366, %v506
        %v571 = vadd.s32 %v367, %v507
        %v572 = vadd.s32 %v368, %v508
        %v573 = vadd.s32 %v369, %v509
        %v574 = vadd.s32 %v370, %v510
        %v575 = vadd.s32 %v371, %v511
        %v576 = vadd.s32 %v372, %v512
        %v577 = vadd.s32 %v373, %v513
        %v578 = vadd.s32 %v374, %v514
        %v579 = vadd.s32 %v375, %v515
        %v580 = vadd.s32 %v376, %v516
        %v581 = vadd.s32 %v377, %v517
        %v582 = vadd.s32 %v378, %v518
        %v583 = vadd.s32 %v379, %v519
        %v584 = vadd.s32 %v380, %v520
        %v585 = vadd.s32 %v381, %v521
        %v586 = vadd.s32 %v382, %v522
        %v587 = vadd.s32 %v383, %v523
        %v588 = vadd.s32 %v384, %v524
        %589 = vset.pattern.permute.xlu0 2
        %590 = vperm.xlu0 %589, %v224
        %v591 = vpop.permute.xlu0 %590
        %592 = vset.pattern.permute.xlu0 2
        %593 = vperm.xlu0 %592, %v225
        %v594 = vpop.permute.xlu0 %593
        %595 = vset.pattern.permute.xlu0 2
        %596 = vperm.xlu0 %595, %v226
        %v597 = vpop.permute.xlu0 %596
        %598 = vset.pattern.permute.xlu0 2
        %599 = vperm.xlu0 %598, %v227
        %v600 = vpop.permute.xlu0 %599
        %vm601 = vcmp.eq.s32.totalorder %v591, %v229
        %vm602 = vcmp.eq.s32.totalorder %v591, %v230
        %vm603 = vcmp.eq.s32.totalorder %v591, %v231
        %vm604 = vcmp.eq.s32.totalorder %v591, %v232
        %vm605 = vcmp.eq.s32.totalorder %v591, %v233
        %vm606 = vcmp.eq.s32.totalorder %v591, %v234
        %vm607 = vcmp.eq.s32.totalorder %v591, %v235
        %vm608 = vcmp.eq.s32.totalorder %v591, %v236
        %vm609 = vcmp.eq.s32.totalorder %v591, %v237
        %vm610 = vcmp.eq.s32.totalorder %v591, %v238
        %vm611 = vcmp.eq.s32.totalorder %v591, %v239
        %vm612 = vcmp.eq.s32.totalorder %v591, %v240
        %vm613 = vcmp.eq.s32.totalorder %v591, %v241
        %vm614 = vcmp.eq.s32.totalorder %v591, %v242
        %vm615 = vcmp.eq.s32.totalorder %v591, %v243
        %vm616 = vcmp.eq.s32.totalorder %v591, %v244
        %vm617 = vcmp.eq.s32.totalorder %v594, %v229
        %vm618 = vcmp.eq.s32.totalorder %v594, %v230
        %vm619 = vcmp.eq.s32.totalorder %v594, %v231
        %vm620 = vcmp.eq.s32.totalorder %v594, %v232
        %vm621 = vcmp.eq.s32.totalorder %v594, %v233
        %vm622 = vcmp.eq.s32.totalorder %v594, %v234
        %vm623 = vcmp.eq.s32.totalorder %v594, %v235
        %vm624 = vcmp.eq.s32.totalorder %v594, %v236
        %vm625 = vcmp.eq.s32.totalorder %v594, %v237
        %vm626 = vcmp.eq.s32.totalorder %v594, %v238
        %vm627 = vcmp.eq.s32.totalorder %v594, %v239
        %vm628 = vcmp.eq.s32.totalorder %v594, %v240
        %vm629 = vcmp.eq.s32.totalorder %v594, %v241
        %vm630 = vcmp.eq.s32.totalorder %v594, %v242
        %vm631 = vcmp.eq.s32.totalorder %v594, %v243
        %vm632 = vcmp.eq.s32.totalorder %v594, %v244
        %vm633 = vcmp.eq.s32.totalorder %v597, %v229
        %vm634 = vcmp.eq.s32.totalorder %v597, %v230
        %vm635 = vcmp.eq.s32.totalorder %v597, %v231
        %vm636 = vcmp.eq.s32.totalorder %v597, %v232
        %vm637 = vcmp.eq.s32.totalorder %v597, %v233
        %vm638 = vcmp.eq.s32.totalorder %v597, %v234
        %vm639 = vcmp.eq.s32.totalorder %v597, %v235
        %vm640 = vcmp.eq.s32.totalorder %v597, %v236
        %vm641 = vcmp.eq.s32.totalorder %v597, %v237
        %vm642 = vcmp.eq.s32.totalorder %v597, %v238
        %vm643 = vcmp.eq.s32.totalorder %v597, %v239
        %vm644 = vcmp.eq.s32.totalorder %v597, %v240
        %vm645 = vcmp.eq.s32.totalorder %v597, %v241
        %vm646 = vcmp.eq.s32.totalorder %v597, %v242
        %vm647 = vcmp.eq.s32.totalorder %v597, %v243
        %vm648 = vcmp.eq.s32.totalorder %v597, %v244
        %vm649 = vcmp.eq.s32.totalorder %v600, %v229
        %vm650 = vcmp.eq.s32.totalorder %v600, %v230
        %vm651 = vcmp.eq.s32.totalorder %v600, %v231
        %vm652 = vcmp.eq.s32.totalorder %v600, %v232
        %vm653 = vcmp.eq.s32.totalorder %v600, %v233
        %vm654 = vcmp.eq.s32.totalorder %v600, %v234
        %vm655 = vcmp.eq.s32.totalorder %v600, %v235
        %vm656 = vcmp.eq.s32.totalorder %v600, %v236
        %vm657 = vcmp.eq.s32.totalorder %v600, %v237
        %vm658 = vcmp.eq.s32.totalorder %v600, %v238
        %vm659 = vcmp.eq.s32.totalorder %v600, %v239
        %vm660 = vcmp.eq.s32.totalorder %v600, %v240
        %vm661 = vcmp.eq.s32.totalorder %v600, %v241
        %vm662 = vcmp.eq.s32.totalorder %v600, %v242
        %vm663 = vcmp.eq.s32.totalorder %v600, %v243
        %vm664 = vcmp.eq.s32.totalorder %v600, %v244
        %v665 = vsel %vm601, 1, 0
        %v666 = vsel %vm602, 1, 0
        %v667 = vsel %vm603, 1, 0
        %v668 = vsel %vm604, 1, 0
        %v669 = vsel %vm605, 1, 0
        %v670 = vsel %vm606, 1, 0
        %v671 = vsel %vm607, 1, 0
        %v672 = vsel %vm608, 1, 0
        %v673 = vsel %vm609, 1, 0
        %v674 = vsel %vm610, 1, 0
        %v675 = vsel %vm611, 1, 0
        %v676 = vsel %vm612, 1, 0
        %v677 = vsel %vm613, 1, 0
        %v678 = vsel %vm614, 1, 0
        %v679 = vsel %vm615, 1, 0
        %v680 = vsel %vm616, 1, 0
        %v681 = vsel %vm617, 1, 0
        %v682 = vsel %vm618, 1, 0
        %v683 = vsel %vm619, 1, 0
        %v684 = vsel %vm620, 1, 0
        %v685 = vsel %vm621, 1, 0
        %v686 = vsel %vm622, 1, 0
        %v687 = vsel %vm623, 1, 0
        %v688 = vsel %vm624, 1, 0
        %v689 = vsel %vm625, 1, 0
        %v690 = vsel %vm626, 1, 0
        %v691 = vsel %vm627, 1, 0
        %v692 = vsel %vm628, 1, 0
        %v693 = vsel %vm629, 1, 0
        %v694 = vsel %vm630, 1, 0
        %v695 = vsel %vm631, 1, 0
        %v696 = vsel %vm632, 1, 0
        %v697 = vsel %vm633, 1, 0
        %v698 = vsel %vm634, 1, 0
        %v699 = vsel %vm635, 1, 0
        %v700 = vsel %vm636, 1, 0
        %v701 = vsel %vm637, 1, 0
        %v702 = vsel %vm638, 1, 0
        %v703 = vsel %vm639, 1, 0
        %v704 = vsel %vm640, 1, 0
        %v705 = vsel %vm641, 1, 0
        %v706 = vsel %vm642, 1, 0
        %v707 = vsel %vm643, 1, 0
        %v708 = vsel %vm644, 1, 0
        %v709 = vsel %vm645, 1, 0
        %v710 = vsel %vm646, 1, 0
        %v711 = vsel %vm647, 1, 0
        %v712 = vsel %vm648, 1, 0
        %v713 = vsel %vm649, 1, 0
        %v714 = vsel %vm650, 1, 0
        %v715 = vsel %vm651, 1, 0
        %v716 = vsel %vm652, 1, 0
        %v717 = vsel %vm653, 1, 0
        %v718 = vsel %vm654, 1, 0
        %v719 = vsel %vm655, 1, 0
        %v720 = vsel %vm656, 1, 0
        %v721 = vsel %vm657, 1, 0
        %v722 = vsel %vm658, 1, 0
        %v723 = vsel %vm659, 1, 0
        %v724 = vsel %vm660, 1, 0
        %v725 = vsel %vm661, 1, 0
        %v726 = vsel %vm662, 1, 0
        %v727 = vsel %vm663, 1, 0
        %v728 = vsel %vm664, 1, 0
        %v729 = vadd.s32 %v525, %v665
        %v730 = vadd.s32 %v526, %v666
        %v731 = vadd.s32 %v527, %v667
        %v732 = vadd.s32 %v528, %v668
        %v733 = vadd.s32 %v529, %v669
        %v734 = vadd.s32 %v530, %v670
        %v735 = vadd.s32 %v531, %v671
        %v736 = vadd.s32 %v532, %v672
        %v737 = vadd.s32 %v533, %v673
        %v738 = vadd.s32 %v534, %v674
        %v739 = vadd.s32 %v535, %v675
        %v740 = vadd.s32 %v536, %v676
        %v741 = vadd.s32 %v537, %v677
        %v742 = vadd.s32 %v538, %v678
        %v743 = vadd.s32 %v539, %v679
        %v744 = vadd.s32 %v540, %v680
        %v745 = vadd.s32 %v541, %v681
        %v746 = vadd.s32 %v542, %v682
        %v747 = vadd.s32 %v543, %v683
        %v748 = vadd.s32 %v544, %v684
        %v749 = vadd.s32 %v545, %v685
        %v750 = vadd.s32 %v546, %v686
        %v751 = vadd.s32 %v547, %v687
        %v752 = vadd.s32 %v548, %v688
        %v753 = vadd.s32 %v549, %v689
        %v754 = vadd.s32 %v550, %v690
        %v755 = vadd.s32 %v551, %v691
        %v756 = vadd.s32 %v552, %v692
        %v757 = vadd.s32 %v553, %v693
        %v758 = vadd.s32 %v554, %v694
        %v759 = vadd.s32 %v555, %v695
        %v760 = vadd.s32 %v556, %v696
        %v761 = vadd.s32 %v557, %v697
        %v762 = vadd.s32 %v558, %v698
        %v763 = vadd.s32 %v559, %v699
        %v764 = vadd.s32 %v560, %v700
        %v765 = vadd.s32 %v561, %v701
        %v766 = vadd.s32 %v562, %v702
        %v767 = vadd.s32 %v563, %v703
        %v768 = vadd.s32 %v564, %v704
        %v769 = vadd.s32 %v565, %v705
        %v770 = vadd.s32 %v566, %v706
        %v771 = vadd.s32 %v567, %v707
        %v772 = vadd.s32 %v568, %v708
        %v773 = vadd.s32 %v569, %v709
        %v774 = vadd.s32 %v570, %v710
        %v775 = vadd.s32 %v571, %v711
        %v776 = vadd.s32 %v572, %v712
        %v777 = vadd.s32 %v573, %v713
        %v778 = vadd.s32 %v574, %v714
        %v779 = vadd.s32 %v575, %v715
        %v780 = vadd.s32 %v576, %v716
        %v781 = vadd.s32 %v577, %v717
        %v782 = vadd.s32 %v578, %v718
        %v783 = vadd.s32 %v579, %v719
        %v784 = vadd.s32 %v580, %v720
        %v785 = vadd.s32 %v581, %v721
        %v786 = vadd.s32 %v582, %v722
        %v787 = vadd.s32 %v583, %v723
        %v788 = vadd.s32 %v584, %v724
        %v789 = vadd.s32 %v585, %v725
        %v790 = vadd.s32 %v586, %v726
        %v791 = vadd.s32 %v587, %v727
        %v792 = vadd.s32 %v588, %v728
        %793 = vset.pattern.permute.xlu0 3
        %794 = vperm.xlu0 %793, %v224
        %v795 = vpop.permute.xlu0 %794
        %796 = vset.pattern.permute.xlu0 3
        %797 = vperm.xlu0 %796, %v225
        %v798 = vpop.permute.xlu0 %797
        %799 = vset.pattern.permute.xlu0 3
        %800 = vperm.xlu0 %799, %v226
        %v801 = vpop.permute.xlu0 %800
        %802 = vset.pattern.permute.xlu0 3
        %803 = vperm.xlu0 %802, %v227
        %v804 = vpop.permute.xlu0 %803
        %vm805 = vcmp.eq.s32.totalorder %v795, %v229
        %vm806 = vcmp.eq.s32.totalorder %v795, %v230
        %vm807 = vcmp.eq.s32.totalorder %v795, %v231
        %vm808 = vcmp.eq.s32.totalorder %v795, %v232
        %vm809 = vcmp.eq.s32.totalorder %v795, %v233
        %vm810 = vcmp.eq.s32.totalorder %v795, %v234
        %vm811 = vcmp.eq.s32.totalorder %v795, %v235
        %vm812 = vcmp.eq.s32.totalorder %v795, %v236
        %vm813 = vcmp.eq.s32.totalorder %v795, %v237
        %vm814 = vcmp.eq.s32.totalorder %v795, %v238
        %vm815 = vcmp.eq.s32.totalorder %v795, %v239
        %vm816 = vcmp.eq.s32.totalorder %v795, %v240
        %vm817 = vcmp.eq.s32.totalorder %v795, %v241
        %vm818 = vcmp.eq.s32.totalorder %v795, %v242
        %vm819 = vcmp.eq.s32.totalorder %v795, %v243
        %vm820 = vcmp.eq.s32.totalorder %v795, %v244
        %vm821 = vcmp.eq.s32.totalorder %v798, %v229
        %vm822 = vcmp.eq.s32.totalorder %v798, %v230
        %vm823 = vcmp.eq.s32.totalorder %v798, %v231
        %vm824 = vcmp.eq.s32.totalorder %v798, %v232
        %vm825 = vcmp.eq.s32.totalorder %v798, %v233
        %vm826 = vcmp.eq.s32.totalorder %v798, %v234
        %vm827 = vcmp.eq.s32.totalorder %v798, %v235
        %vm828 = vcmp.eq.s32.totalorder %v798, %v236
        %vm829 = vcmp.eq.s32.totalorder %v798, %v237
        %vm830 = vcmp.eq.s32.totalorder %v798, %v238
        %vm831 = vcmp.eq.s32.totalorder %v798, %v239
        %vm832 = vcmp.eq.s32.totalorder %v798, %v240
        %vm833 = vcmp.eq.s32.totalorder %v798, %v241
        %vm834 = vcmp.eq.s32.totalorder %v798, %v242
        %vm835 = vcmp.eq.s32.totalorder %v798, %v243
        %vm836 = vcmp.eq.s32.totalorder %v798, %v244
        %vm837 = vcmp.eq.s32.totalorder %v801, %v229
        %vm838 = vcmp.eq.s32.totalorder %v801, %v230
        %vm839 = vcmp.eq.s32.totalorder %v801, %v231
        %vm840 = vcmp.eq.s32.totalorder %v801, %v232
        %vm841 = vcmp.eq.s32.totalorder %v801, %v233
        %vm842 = vcmp.eq.s32.totalorder %v801, %v234
        %vm843 = vcmp.eq.s32.totalorder %v801, %v235
        %vm844 = vcmp.eq.s32.totalorder %v801, %v236
        %vm845 = vcmp.eq.s32.totalorder %v801, %v237
        %vm846 = vcmp.eq.s32.totalorder %v801, %v238
        %vm847 = vcmp.eq.s32.totalorder %v801, %v239
        %vm848 = vcmp.eq.s32.totalorder %v801, %v240
        %vm849 = vcmp.eq.s32.totalorder %v801, %v241
        %vm850 = vcmp.eq.s32.totalorder %v801, %v242
        %vm851 = vcmp.eq.s32.totalorder %v801, %v243
        %vm852 = vcmp.eq.s32.totalorder %v801, %v244
        %vm853 = vcmp.eq.s32.totalorder %v804, %v229
        %vm854 = vcmp.eq.s32.totalorder %v804, %v230
        %vm855 = vcmp.eq.s32.totalorder %v804, %v231
        %vm856 = vcmp.eq.s32.totalorder %v804, %v232
        %vm857 = vcmp.eq.s32.totalorder %v804, %v233
        %vm858 = vcmp.eq.s32.totalorder %v804, %v234
        %vm859 = vcmp.eq.s32.totalorder %v804, %v235
        %vm860 = vcmp.eq.s32.totalorder %v804, %v236
        %vm861 = vcmp.eq.s32.totalorder %v804, %v237
        %vm862 = vcmp.eq.s32.totalorder %v804, %v238
        %vm863 = vcmp.eq.s32.totalorder %v804, %v239
        %vm864 = vcmp.eq.s32.totalorder %v804, %v240
        %vm865 = vcmp.eq.s32.totalorder %v804, %v241
        %vm866 = vcmp.eq.s32.totalorder %v804, %v242
        %vm867 = vcmp.eq.s32.totalorder %v804, %v243
        %vm868 = vcmp.eq.s32.totalorder %v804, %v244
        %v869 = vsel %vm805, 1, 0
        %v870 = vsel %vm806, 1, 0
        %v871 = vsel %vm807, 1, 0
        %v872 = vsel %vm808, 1, 0
        %v873 = vsel %vm809, 1, 0
        %v874 = vsel %vm810, 1, 0
        %v875 = vsel %vm811, 1, 0
        %v876 = vsel %vm812, 1, 0
        %v877 = vsel %vm813, 1, 0
        %v878 = vsel %vm814, 1, 0
        %v879 = vsel %vm815, 1, 0
        %v880 = vsel %vm816, 1, 0
        %v881 = vsel %vm817, 1, 0
        %v882 = vsel %vm818, 1, 0
        %v883 = vsel %vm819, 1, 0
        %v884 = vsel %vm820, 1, 0
        %v885 = vsel %vm821, 1, 0
        %v886 = vsel %vm822, 1, 0
        %v887 = vsel %vm823, 1, 0
        %v888 = vsel %vm824, 1, 0
        %v889 = vsel %vm825, 1, 0
        %v890 = vsel %vm826, 1, 0
        %v891 = vsel %vm827, 1, 0
        %v892 = vsel %vm828, 1, 0
        %v893 = vsel %vm829, 1, 0
        %v894 = vsel %vm830, 1, 0
        %v895 = vsel %vm831, 1, 0
        %v896 = vsel %vm832, 1, 0
        %v897 = vsel %vm833, 1, 0
        %v898 = vsel %vm834, 1, 0
        %v899 = vsel %vm835, 1, 0
        %v900 = vsel %vm836, 1, 0
        %v901 = vsel %vm837, 1, 0
        %v902 = vsel %vm838, 1, 0
        %v903 = vsel %vm839, 1, 0
        %v904 = vsel %vm840, 1, 0
        %v905 = vsel %vm841, 1, 0
        %v906 = vsel %vm842, 1, 0
        %v907 = vsel %vm843, 1, 0
        %v908 = vsel %vm844, 1, 0
        %v909 = vsel %vm845, 1, 0
        %v910 = vsel %vm846, 1, 0
        %v911 = vsel %vm847, 1, 0
        %v912 = vsel %vm848, 1, 0
        %v913 = vsel %vm849, 1, 0
        %v914 = vsel %vm850, 1, 0
        %v915 = vsel %vm851, 1, 0
        %v916 = vsel %vm852, 1, 0
        %v917 = vsel %vm853, 1, 0
        %v918 = vsel %vm854, 1, 0
        %v919 = vsel %vm855, 1, 0
        %v920 = vsel %vm856, 1, 0
        %v921 = vsel %vm857, 1, 0
        %v922 = vsel %vm858, 1, 0
        %v923 = vsel %vm859, 1, 0
        %v924 = vsel %vm860, 1, 0
        %v925 = vsel %vm861, 1, 0
        %v926 = vsel %vm862, 1, 0
        %v927 = vsel %vm863, 1, 0
        %v928 = vsel %vm864, 1, 0
        %v929 = vsel %vm865, 1, 0
        %v930 = vsel %vm866, 1, 0
        %v931 = vsel %vm867, 1, 0
        %v932 = vsel %vm868, 1, 0
        %v933 = vadd.s32 %v729, %v869
        %v934 = vadd.s32 %v730, %v870
        %v935 = vadd.s32 %v731, %v871
        %v936 = vadd.s32 %v732, %v872
        %v937 = vadd.s32 %v733, %v873
        %v938 = vadd.s32 %v734, %v874
        %v939 = vadd.s32 %v735, %v875
        %v940 = vadd.s32 %v736, %v876
        %v941 = vadd.s32 %v737, %v877
        %v942 = vadd.s32 %v738, %v878
        %v943 = vadd.s32 %v739, %v879
        %v944 = vadd.s32 %v740, %v880
        %v945 = vadd.s32 %v741, %v881
        %v946 = vadd.s32 %v742, %v882
        %v947 = vadd.s32 %v743, %v883
        %v948 = vadd.s32 %v744, %v884
        %v949 = vadd.s32 %v745, %v885
        %v950 = vadd.s32 %v746, %v886
        %v951 = vadd.s32 %v747, %v887
        %v952 = vadd.s32 %v748, %v888
        %v953 = vadd.s32 %v749, %v889
        %v954 = vadd.s32 %v750, %v890
        %v955 = vadd.s32 %v751, %v891
        %v956 = vadd.s32 %v752, %v892
        %v957 = vadd.s32 %v753, %v893
        %v958 = vadd.s32 %v754, %v894
        %v959 = vadd.s32 %v755, %v895
        %v960 = vadd.s32 %v756, %v896
        %v961 = vadd.s32 %v757, %v897
        %v962 = vadd.s32 %v758, %v898
        %v963 = vadd.s32 %v759, %v899
        %v964 = vadd.s32 %v760, %v900
        %v965 = vadd.s32 %v761, %v901
        %v966 = vadd.s32 %v762, %v902
        %v967 = vadd.s32 %v763, %v903
        %v968 = vadd.s32 %v764, %v904
        %v969 = vadd.s32 %v765, %v905
        %v970 = vadd.s32 %v766, %v906
        %v971 = vadd.s32 %v767, %v907
        %v972 = vadd.s32 %v768, %v908
        %v973 = vadd.s32 %v769, %v909
        %v974 = vadd.s32 %v770, %v910
        %v975 = vadd.s32 %v771, %v911
        %v976 = vadd.s32 %v772, %v912
        %v977 = vadd.s32 %v773, %v913
        %v978 = vadd.s32 %v774, %v914
        %v979 = vadd.s32 %v775, %v915
        %v980 = vadd.s32 %v776, %v916
        %v981 = vadd.s32 %v777, %v917
        %v982 = vadd.s32 %v778, %v918
        %v983 = vadd.s32 %v779, %v919
        %v984 = vadd.s32 %v780, %v920
        %v985 = vadd.s32 %v781, %v921
        %v986 = vadd.s32 %v782, %v922
        %v987 = vadd.s32 %v783, %v923
        %v988 = vadd.s32 %v784, %v924
        %v989 = vadd.s32 %v785, %v925
        %v990 = vadd.s32 %v786, %v926
        %v991 = vadd.s32 %v787, %v927
        %v992 = vadd.s32 %v788, %v928
        %v993 = vadd.s32 %v789, %v929
        %v994 = vadd.s32 %v790, %v930
        %v995 = vadd.s32 %v791, %v931
        %v996 = vadd.s32 %v792, %v932
        %997 = vset.pattern.permute.xlu0 4
        %998 = vperm.xlu0 %997, %v224
        %v999 = vpop.permute.xlu0 %998
        %1000 = vset.pattern.permute.xlu0 4
        %1001 = vperm.xlu0 %1000, %v225
        %v1002 = vpop.permute.xlu0 %1001
        %1003 = vset.pattern.permute.xlu0 4
        %1004 = vperm.xlu0 %1003, %v226
        %v1005 = vpop.permute.xlu0 %1004
        %1006 = vset.pattern.permute.xlu0 4
        %1007 = vperm.xlu0 %1006, %v227
        %v1008 = vpop.permute.xlu0 %1007
        %vm1009 = vcmp.eq.s32.totalorder %v999, %v229
        %vm1010 = vcmp.eq.s32.totalorder %v999, %v230
        %vm1011 = vcmp.eq.s32.totalorder %v999, %v231
        %vm1012 = vcmp.eq.s32.totalorder %v999, %v232
        %vm1013 = vcmp.eq.s32.totalorder %v999, %v233
        %vm1014 = vcmp.eq.s32.totalorder %v999, %v234
        %vm1015 = vcmp.eq.s32.totalorder %v999, %v235
        %vm1016 = vcmp.eq.s32.totalorder %v999, %v236
        %vm1017 = vcmp.eq.s32.totalorder %v999, %v237
        %vm1018 = vcmp.eq.s32.totalorder %v999, %v238
        %vm1019 = vcmp.eq.s32.totalorder %v999, %v239
        %vm1020 = vcmp.eq.s32.totalorder %v999, %v240
        %vm1021 = vcmp.eq.s32.totalorder %v999, %v241
        %vm1022 = vcmp.eq.s32.totalorder %v999, %v242
        %vm1023 = vcmp.eq.s32.totalorder %v999, %v243
        %vm1024 = vcmp.eq.s32.totalorder %v999, %v244
        %vm1025 = vcmp.eq.s32.totalorder %v1002, %v229
        %vm1026 = vcmp.eq.s32.totalorder %v1002, %v230
        %vm1027 = vcmp.eq.s32.totalorder %v1002, %v231
        %vm1028 = vcmp.eq.s32.totalorder %v1002, %v232
        %vm1029 = vcmp.eq.s32.totalorder %v1002, %v233
        %vm1030 = vcmp.eq.s32.totalorder %v1002, %v234
        %vm1031 = vcmp.eq.s32.totalorder %v1002, %v235
        %vm1032 = vcmp.eq.s32.totalorder %v1002, %v236
        %vm1033 = vcmp.eq.s32.totalorder %v1002, %v237
        %vm1034 = vcmp.eq.s32.totalorder %v1002, %v238
        %vm1035 = vcmp.eq.s32.totalorder %v1002, %v239
        %vm1036 = vcmp.eq.s32.totalorder %v1002, %v240
        %vm1037 = vcmp.eq.s32.totalorder %v1002, %v241
        %vm1038 = vcmp.eq.s32.totalorder %v1002, %v242
        %vm1039 = vcmp.eq.s32.totalorder %v1002, %v243
        %vm1040 = vcmp.eq.s32.totalorder %v1002, %v244
        %vm1041 = vcmp.eq.s32.totalorder %v1005, %v229
        %vm1042 = vcmp.eq.s32.totalorder %v1005, %v230
        %vm1043 = vcmp.eq.s32.totalorder %v1005, %v231
        %vm1044 = vcmp.eq.s32.totalorder %v1005, %v232
        %vm1045 = vcmp.eq.s32.totalorder %v1005, %v233
        %vm1046 = vcmp.eq.s32.totalorder %v1005, %v234
        %vm1047 = vcmp.eq.s32.totalorder %v1005, %v235
        %vm1048 = vcmp.eq.s32.totalorder %v1005, %v236
        %vm1049 = vcmp.eq.s32.totalorder %v1005, %v237
        %vm1050 = vcmp.eq.s32.totalorder %v1005, %v238
        %vm1051 = vcmp.eq.s32.totalorder %v1005, %v239
        %vm1052 = vcmp.eq.s32.totalorder %v1005, %v240
        %vm1053 = vcmp.eq.s32.totalorder %v1005, %v241
        %vm1054 = vcmp.eq.s32.totalorder %v1005, %v242
        %vm1055 = vcmp.eq.s32.totalorder %v1005, %v243
        %vm1056 = vcmp.eq.s32.totalorder %v1005, %v244
        %vm1057 = vcmp.eq.s32.totalorder %v1008, %v229
        %vm1058 = vcmp.eq.s32.totalorder %v1008, %v230
        %vm1059 = vcmp.eq.s32.totalorder %v1008, %v231
        %vm1060 = vcmp.eq.s32.totalorder %v1008, %v232
        %vm1061 = vcmp.eq.s32.totalorder %v1008, %v233
        %vm1062 = vcmp.eq.s32.totalorder %v1008, %v234
        %vm1063 = vcmp.eq.s32.totalorder %v1008, %v235
        %vm1064 = vcmp.eq.s32.totalorder %v1008, %v236
        %vm1065 = vcmp.eq.s32.totalorder %v1008, %v237
        %vm1066 = vcmp.eq.s32.totalorder %v1008, %v238
        %vm1067 = vcmp.eq.s32.totalorder %v1008, %v239
        %vm1068 = vcmp.eq.s32.totalorder %v1008, %v240
        %vm1069 = vcmp.eq.s32.totalorder %v1008, %v241
        %vm1070 = vcmp.eq.s32.totalorder %v1008, %v242
        %vm1071 = vcmp.eq.s32.totalorder %v1008, %v243
        %vm1072 = vcmp.eq.s32.totalorder %v1008, %v244
        %v1073 = vsel %vm1009, 1, 0
        %v1074 = vsel %vm1010, 1, 0
        %v1075 = vsel %vm1011, 1, 0
        %v1076 = vsel %vm1012, 1, 0
        %v1077 = vsel %vm1013, 1, 0
        %v1078 = vsel %vm1014, 1, 0
        %v1079 = vsel %vm1015, 1, 0
        %v1080 = vsel %vm1016, 1, 0
        %v1081 = vsel %vm1017, 1, 0
        %v1082 = vsel %vm1018, 1, 0
        %v1083 = vsel %vm1019, 1, 0
        %v1084 = vsel %vm1020, 1, 0
        %v1085 = vsel %vm1021, 1, 0
        %v1086 = vsel %vm1022, 1, 0
        %v1087 = vsel %vm1023, 1, 0
        %v1088 = vsel %vm1024, 1, 0
        %v1089 = vsel %vm1025, 1, 0
        %v1090 = vsel %vm1026, 1, 0
        %v1091 = vsel %vm1027, 1, 0
        %v1092 = vsel %vm1028, 1, 0
        %v1093 = vsel %vm1029, 1, 0
        %v1094 = vsel %vm1030, 1, 0
        %v1095 = vsel %vm1031, 1, 0
        %v1096 = vsel %vm1032, 1, 0
        %v1097 = vsel %vm1033, 1, 0
        %v1098 = vsel %vm1034, 1, 0
        %v1099 = vsel %vm1035, 1, 0
        %v1100 = vsel %vm1036, 1, 0
        %v1101 = vsel %vm1037, 1, 0
        %v1102 = vsel %vm1038, 1, 0
        %v1103 = vsel %vm1039, 1, 0
        %v1104 = vsel %vm1040, 1, 0
        %v1105 = vsel %vm1041, 1, 0
        %v1106 = vsel %vm1042, 1, 0
        %v1107 = vsel %vm1043, 1, 0
        %v1108 = vsel %vm1044, 1, 0
        %v1109 = vsel %vm1045, 1, 0
        %v1110 = vsel %vm1046, 1, 0
        %v1111 = vsel %vm1047, 1, 0
        %v1112 = vsel %vm1048, 1, 0
        %v1113 = vsel %vm1049, 1, 0
        %v1114 = vsel %vm1050, 1, 0
        %v1115 = vsel %vm1051, 1, 0
        %v1116 = vsel %vm1052, 1, 0
        %v1117 = vsel %vm1053, 1, 0
        %v1118 = vsel %vm1054, 1, 0
        %v1119 = vsel %vm1055, 1, 0
        %v1120 = vsel %vm1056, 1, 0
        %v1121 = vsel %vm1057, 1, 0
        %v1122 = vsel %vm1058, 1, 0
        %v1123 = vsel %vm1059, 1, 0
        %v1124 = vsel %vm1060, 1, 0
        %v1125 = vsel %vm1061, 1, 0
        %v1126 = vsel %vm1062, 1, 0
        %v1127 = vsel %vm1063, 1, 0
        %v1128 = vsel %vm1064, 1, 0
        %v1129 = vsel %vm1065, 1, 0
        %v1130 = vsel %vm1066, 1, 0
        %v1131 = vsel %vm1067, 1, 0
        %v1132 = vsel %vm1068, 1, 0
        %v1133 = vsel %vm1069, 1, 0
        %v1134 = vsel %vm1070, 1, 0
        %v1135 = vsel %vm1071, 1, 0
        %v1136 = vsel %vm1072, 1, 0
        %v1137 = vadd.s32 %v933, %v1073
        %v1138 = vadd.s32 %v934, %v1074
        %v1139 = vadd.s32 %v935, %v1075
        %v1140 = vadd.s32 %v936, %v1076
        %v1141 = vadd.s32 %v937, %v1077
        %v1142 = vadd.s32 %v938, %v1078
        %v1143 = vadd.s32 %v939, %v1079
        %v1144 = vadd.s32 %v940, %v1080
        %v1145 = vadd.s32 %v941, %v1081
        %v1146 = vadd.s32 %v942, %v1082
        %v1147 = vadd.s32 %v943, %v1083
        %v1148 = vadd.s32 %v944, %v1084
        %v1149 = vadd.s32 %v945, %v1085
        %v1150 = vadd.s32 %v946, %v1086
        %v1151 = vadd.s32 %v947, %v1087
        %v1152 = vadd.s32 %v948, %v1088
        %v1153 = vadd.s32 %v949, %v1089
        %v1154 = vadd.s32 %v950, %v1090
        %v1155 = vadd.s32 %v951, %v1091
        %v1156 = vadd.s32 %v952, %v1092
        %v1157 = vadd.s32 %v953, %v1093
        %v1158 = vadd.s32 %v954, %v1094
        %v1159 = vadd.s32 %v955, %v1095
        %v1160 = vadd.s32 %v956, %v1096
        %v1161 = vadd.s32 %v957, %v1097
        %v1162 = vadd.s32 %v958, %v1098
        %v1163 = vadd.s32 %v959, %v1099
        %v1164 = vadd.s32 %v960, %v1100
        %v1165 = vadd.s32 %v961, %v1101
        %v1166 = vadd.s32 %v962, %v1102
        %v1167 = vadd.s32 %v963, %v1103
        %v1168 = vadd.s32 %v964, %v1104
        %v1169 = vadd.s32 %v965, %v1105
        %v1170 = vadd.s32 %v966, %v1106
        %v1171 = vadd.s32 %v967, %v1107
        %v1172 = vadd.s32 %v968, %v1108
        %v1173 = vadd.s32 %v969, %v1109
        %v1174 = vadd.s32 %v970, %v1110
        %v1175 = vadd.s32 %v971, %v1111
        %v1176 = vadd.s32 %v972, %v1112
        %v1177 = vadd.s32 %v973, %v1113
        %v1178 = vadd.s32 %v974, %v1114
        %v1179 = vadd.s32 %v975, %v1115
        %v1180 = vadd.s32 %v976, %v1116
        %v1181 = vadd.s32 %v977, %v1117
        %v1182 = vadd.s32 %v978, %v1118
        %v1183 = vadd.s32 %v979, %v1119
        %v1184 = vadd.s32 %v980, %v1120
        %v1185 = vadd.s32 %v981, %v1121
        %v1186 = vadd.s32 %v982, %v1122
        %v1187 = vadd.s32 %v983, %v1123
        %v1188 = vadd.s32 %v984, %v1124
        %v1189 = vadd.s32 %v985, %v1125
        %v1190 = vadd.s32 %v986, %v1126
        %v1191 = vadd.s32 %v987, %v1127
        %v1192 = vadd.s32 %v988, %v1128
        %v1193 = vadd.s32 %v989, %v1129
        %v1194 = vadd.s32 %v990, %v1130
        %v1195 = vadd.s32 %v991, %v1131
        %v1196 = vadd.s32 %v992, %v1132
        %v1197 = vadd.s32 %v993, %v1133
        %v1198 = vadd.s32 %v994, %v1134
        %v1199 = vadd.s32 %v995, %v1135
        %v1200 = vadd.s32 %v996, %v1136
        %1201 = vset.pattern.permute.xlu0 5
        %1202 = vperm.xlu0 %1201, %v224
        %v1203 = vpop.permute.xlu0 %1202
        %1204 = vset.pattern.permute.xlu0 5
        %1205 = vperm.xlu0 %1204, %v225
        %v1206 = vpop.permute.xlu0 %1205
        %1207 = vset.pattern.permute.xlu0 5
        %1208 = vperm.xlu0 %1207, %v226
        %v1209 = vpop.permute.xlu0 %1208
        %1210 = vset.pattern.permute.xlu0 5
        %1211 = vperm.xlu0 %1210, %v227
        %v1212 = vpop.permute.xlu0 %1211
        %vm1213 = vcmp.eq.s32.totalorder %v1203, %v229
        %vm1214 = vcmp.eq.s32.totalorder %v1203, %v230
        %vm1215 = vcmp.eq.s32.totalorder %v1203, %v231
        %vm1216 = vcmp.eq.s32.totalorder %v1203, %v232
        %vm1217 = vcmp.eq.s32.totalorder %v1203, %v233
        %vm1218 = vcmp.eq.s32.totalorder %v1203, %v234
        %vm1219 = vcmp.eq.s32.totalorder %v1203, %v235
        %vm1220 = vcmp.eq.s32.totalorder %v1203, %v236
        %vm1221 = vcmp.eq.s32.totalorder %v1203, %v237
        %vm1222 = vcmp.eq.s32.totalorder %v1203, %v238
        %vm1223 = vcmp.eq.s32.totalorder %v1203, %v239
        %vm1224 = vcmp.eq.s32.totalorder %v1203, %v240
        %vm1225 = vcmp.eq.s32.totalorder %v1203, %v241
        %vm1226 = vcmp.eq.s32.totalorder %v1203, %v242
        %vm1227 = vcmp.eq.s32.totalorder %v1203, %v243
        %vm1228 = vcmp.eq.s32.totalorder %v1203, %v244
        %vm1229 = vcmp.eq.s32.totalorder %v1206, %v229
        %vm1230 = vcmp.eq.s32.totalorder %v1206, %v230
        %vm1231 = vcmp.eq.s32.totalorder %v1206, %v231
        %vm1232 = vcmp.eq.s32.totalorder %v1206, %v232
        %vm1233 = vcmp.eq.s32.totalorder %v1206, %v233
        %vm1234 = vcmp.eq.s32.totalorder %v1206, %v234
        %vm1235 = vcmp.eq.s32.totalorder %v1206, %v235
        %vm1236 = vcmp.eq.s32.totalorder %v1206, %v236
        %vm1237 = vcmp.eq.s32.totalorder %v1206, %v237
        %vm1238 = vcmp.eq.s32.totalorder %v1206, %v238
        %vm1239 = vcmp.eq.s32.totalorder %v1206, %v239
        %vm1240 = vcmp.eq.s32.totalorder %v1206, %v240
        %vm1241 = vcmp.eq.s32.totalorder %v1206, %v241
        %vm1242 = vcmp.eq.s32.totalorder %v1206, %v242
        %vm1243 = vcmp.eq.s32.totalorder %v1206, %v243
        %vm1244 = vcmp.eq.s32.totalorder %v1206, %v244
        %vm1245 = vcmp.eq.s32.totalorder %v1209, %v229
        %vm1246 = vcmp.eq.s32.totalorder %v1209, %v230
        %vm1247 = vcmp.eq.s32.totalorder %v1209, %v231
        %vm1248 = vcmp.eq.s32.totalorder %v1209, %v232
        %vm1249 = vcmp.eq.s32.totalorder %v1209, %v233
        %vm1250 = vcmp.eq.s32.totalorder %v1209, %v234
        %vm1251 = vcmp.eq.s32.totalorder %v1209, %v235
        %vm1252 = vcmp.eq.s32.totalorder %v1209, %v236
        %vm1253 = vcmp.eq.s32.totalorder %v1209, %v237
        %vm1254 = vcmp.eq.s32.totalorder %v1209, %v238
        %vm1255 = vcmp.eq.s32.totalorder %v1209, %v239
        %vm1256 = vcmp.eq.s32.totalorder %v1209, %v240
        %vm1257 = vcmp.eq.s32.totalorder %v1209, %v241
        %vm1258 = vcmp.eq.s32.totalorder %v1209, %v242
        %vm1259 = vcmp.eq.s32.totalorder %v1209, %v243
        %vm1260 = vcmp.eq.s32.totalorder %v1209, %v244
        %vm1261 = vcmp.eq.s32.totalorder %v1212, %v229
        %vm1262 = vcmp.eq.s32.totalorder %v1212, %v230
        %vm1263 = vcmp.eq.s32.totalorder %v1212, %v231
        %vm1264 = vcmp.eq.s32.totalorder %v1212, %v232
        %vm1265 = vcmp.eq.s32.totalorder %v1212, %v233
        %vm1266 = vcmp.eq.s32.totalorder %v1212, %v234
        %vm1267 = vcmp.eq.s32.totalorder %v1212, %v235
        %vm1268 = vcmp.eq.s32.totalorder %v1212, %v236
        %vm1269 = vcmp.eq.s32.totalorder %v1212, %v237
        %vm1270 = vcmp.eq.s32.totalorder %v1212, %v238
        %vm1271 = vcmp.eq.s32.totalorder %v1212, %v239
        %vm1272 = vcmp.eq.s32.totalorder %v1212, %v240
        %vm1273 = vcmp.eq.s32.totalorder %v1212, %v241
        %vm1274 = vcmp.eq.s32.totalorder %v1212, %v242
        %vm1275 = vcmp.eq.s32.totalorder %v1212, %v243
        %vm1276 = vcmp.eq.s32.totalorder %v1212, %v244
        %v1277 = vsel %vm1213, 1, 0
        %v1278 = vsel %vm1214, 1, 0
        %v1279 = vsel %vm1215, 1, 0
        %v1280 = vsel %vm1216, 1, 0
        %v1281 = vsel %vm1217, 1, 0
        %v1282 = vsel %vm1218, 1, 0
        %v1283 = vsel %vm1219, 1, 0
        %v1284 = vsel %vm1220, 1, 0
        %v1285 = vsel %vm1221, 1, 0
        %v1286 = vsel %vm1222, 1, 0
        %v1287 = vsel %vm1223, 1, 0
        %v1288 = vsel %vm1224, 1, 0
        %v1289 = vsel %vm1225, 1, 0
        %v1290 = vsel %vm1226, 1, 0
        %v1291 = vsel %vm1227, 1, 0
        %v1292 = vsel %vm1228, 1, 0
        %v1293 = vsel %vm1229, 1, 0
        %v1294 = vsel %vm1230, 1, 0
        %v1295 = vsel %vm1231, 1, 0
        %v1296 = vsel %vm1232, 1, 0
        %v1297 = vsel %vm1233, 1, 0
        %v1298 = vsel %vm1234, 1, 0
        %v1299 = vsel %vm1235, 1, 0
        %v1300 = vsel %vm1236, 1, 0
        %v1301 = vsel %vm1237, 1, 0
        %v1302 = vsel %vm1238, 1, 0
        %v1303 = vsel %vm1239, 1, 0
        %v1304 = vsel %vm1240, 1, 0
        %v1305 = vsel %vm1241, 1, 0
        %v1306 = vsel %vm1242, 1, 0
        %v1307 = vsel %vm1243, 1, 0
        %v1308 = vsel %vm1244, 1, 0
        %v1309 = vsel %vm1245, 1, 0
        %v1310 = vsel %vm1246, 1, 0
        %v1311 = vsel %vm1247, 1, 0
        %v1312 = vsel %vm1248, 1, 0
        %v1313 = vsel %vm1249, 1, 0
        %v1314 = vsel %vm1250, 1, 0
        %v1315 = vsel %vm1251, 1, 0
        %v1316 = vsel %vm1252, 1, 0
        %v1317 = vsel %vm1253, 1, 0
        %v1318 = vsel %vm1254, 1, 0
        %v1319 = vsel %vm1255, 1, 0
        %v1320 = vsel %vm1256, 1, 0
        %v1321 = vsel %vm1257, 1, 0
        %v1322 = vsel %vm1258, 1, 0
        %v1323 = vsel %vm1259, 1, 0
        %v1324 = vsel %vm1260, 1, 0
        %v1325 = vsel %vm1261, 1, 0
        %v1326 = vsel %vm1262, 1, 0
        %v1327 = vsel %vm1263, 1, 0
        %v1328 = vsel %vm1264, 1, 0
        %v1329 = vsel %vm1265, 1, 0
        %v1330 = vsel %vm1266, 1, 0
        %v1331 = vsel %vm1267, 1, 0
        %v1332 = vsel %vm1268, 1, 0
        %v1333 = vsel %vm1269, 1, 0
        %v1334 = vsel %vm1270, 1, 0
        %v1335 = vsel %vm1271, 1, 0
        %v1336 = vsel %vm1272, 1, 0
        %v1337 = vsel %vm1273, 1, 0
        %v1338 = vsel %vm1274, 1, 0
        %v1339 = vsel %vm1275, 1, 0
        %v1340 = vsel %vm1276, 1, 0
        %v1341 = vadd.s32 %v1137, %v1277
        %v1342 = vadd.s32 %v1138, %v1278
        %v1343 = vadd.s32 %v1139, %v1279
        %v1344 = vadd.s32 %v1140, %v1280
        %v1345 = vadd.s32 %v1141, %v1281
        %v1346 = vadd.s32 %v1142, %v1282
        %v1347 = vadd.s32 %v1143, %v1283
        %v1348 = vadd.s32 %v1144, %v1284
        %v1349 = vadd.s32 %v1145, %v1285
        %v1350 = vadd.s32 %v1146, %v1286
        %v1351 = vadd.s32 %v1147, %v1287
        %v1352 = vadd.s32 %v1148, %v1288
        %v1353 = vadd.s32 %v1149, %v1289
        %v1354 = vadd.s32 %v1150, %v1290
        %v1355 = vadd.s32 %v1151, %v1291
        %v1356 = vadd.s32 %v1152, %v1292
        %v1357 = vadd.s32 %v1153, %v1293
        %v1358 = vadd.s32 %v1154, %v1294
        %v1359 = vadd.s32 %v1155, %v1295
        %v1360 = vadd.s32 %v1156, %v1296
        %v1361 = vadd.s32 %v1157, %v1297
        %v1362 = vadd.s32 %v1158, %v1298
        %v1363 = vadd.s32 %v1159, %v1299
        %v1364 = vadd.s32 %v1160, %v1300
        %v1365 = vadd.s32 %v1161, %v1301
        %v1366 = vadd.s32 %v1162, %v1302
        %v1367 = vadd.s32 %v1163, %v1303
        %v1368 = vadd.s32 %v1164, %v1304
        %v1369 = vadd.s32 %v1165, %v1305
        %v1370 = vadd.s32 %v1166, %v1306
        %v1371 = vadd.s32 %v1167, %v1307
        %v1372 = vadd.s32 %v1168, %v1308
        %v1373 = vadd.s32 %v1169, %v1309
        %v1374 = vadd.s32 %v1170, %v1310
        %v1375 = vadd.s32 %v1171, %v1311
        %v1376 = vadd.s32 %v1172, %v1312
        %v1377 = vadd.s32 %v1173, %v1313
        %v1378 = vadd.s32 %v1174, %v1314
        %v1379 = vadd.s32 %v1175, %v1315
        %v1380 = vadd.s32 %v1176, %v1316
        %v1381 = vadd.s32 %v1177, %v1317
        %v1382 = vadd.s32 %v1178, %v1318
        %v1383 = vadd.s32 %v1179, %v1319
        %v1384 = vadd.s32 %v1180, %v1320
        %v1385 = vadd.s32 %v1181, %v1321
        %v1386 = vadd.s32 %v1182, %v1322
        %v1387 = vadd.s32 %v1183, %v1323
        %v1388 = vadd.s32 %v1184, %v1324
        %v1389 = vadd.s32 %v1185, %v1325
        %v1390 = vadd.s32 %v1186, %v1326
        %v1391 = vadd.s32 %v1187, %v1327
        %v1392 = vadd.s32 %v1188, %v1328
        %v1393 = vadd.s32 %v1189, %v1329
        %v1394 = vadd.s32 %v1190, %v1330
        %v1395 = vadd.s32 %v1191, %v1331
        %v1396 = vadd.s32 %v1192, %v1332
        %v1397 = vadd.s32 %v1193, %v1333
        %v1398 = vadd.s32 %v1194, %v1334
        %v1399 = vadd.s32 %v1195, %v1335
        %v1400 = vadd.s32 %v1196, %v1336
        %v1401 = vadd.s32 %v1197, %v1337
        %v1402 = vadd.s32 %v1198, %v1338
        %v1403 = vadd.s32 %v1199, %v1339
        %v1404 = vadd.s32 %v1200, %v1340
        %1405 = vset.pattern.permute.xlu0 6
        %1406 = vperm.xlu0 %1405, %v224
        %v1407 = vpop.permute.xlu0 %1406
        %1408 = vset.pattern.permute.xlu0 6
        %1409 = vperm.xlu0 %1408, %v225
        %v1410 = vpop.permute.xlu0 %1409
        %1411 = vset.pattern.permute.xlu0 6
        %1412 = vperm.xlu0 %1411, %v226
        %v1413 = vpop.permute.xlu0 %1412
        %1414 = vset.pattern.permute.xlu0 6
        %1415 = vperm.xlu0 %1414, %v227
        %v1416 = vpop.permute.xlu0 %1415
        %vm1417 = vcmp.eq.s32.totalorder %v1407, %v229
        %vm1418 = vcmp.eq.s32.totalorder %v1407, %v230
        %vm1419 = vcmp.eq.s32.totalorder %v1407, %v231
        %vm1420 = vcmp.eq.s32.totalorder %v1407, %v232
        %vm1421 = vcmp.eq.s32.totalorder %v1407, %v233
        %vm1422 = vcmp.eq.s32.totalorder %v1407, %v234
        %vm1423 = vcmp.eq.s32.totalorder %v1407, %v235
        %vm1424 = vcmp.eq.s32.totalorder %v1407, %v236
        %vm1425 = vcmp.eq.s32.totalorder %v1407, %v237
        %vm1426 = vcmp.eq.s32.totalorder %v1407, %v238
        %vm1427 = vcmp.eq.s32.totalorder %v1407, %v239
        %vm1428 = vcmp.eq.s32.totalorder %v1407, %v240
        %vm1429 = vcmp.eq.s32.totalorder %v1407, %v241
        %vm1430 = vcmp.eq.s32.totalorder %v1407, %v242
        %vm1431 = vcmp.eq.s32.totalorder %v1407, %v243
        %vm1432 = vcmp.eq.s32.totalorder %v1407, %v244
        %vm1433 = vcmp.eq.s32.totalorder %v1410, %v229
        %vm1434 = vcmp.eq.s32.totalorder %v1410, %v230
        %vm1435 = vcmp.eq.s32.totalorder %v1410, %v231
        %vm1436 = vcmp.eq.s32.totalorder %v1410, %v232
        %vm1437 = vcmp.eq.s32.totalorder %v1410, %v233
        %vm1438 = vcmp.eq.s32.totalorder %v1410, %v234
        %vm1439 = vcmp.eq.s32.totalorder %v1410, %v235
        %vm1440 = vcmp.eq.s32.totalorder %v1410, %v236
        %vm1441 = vcmp.eq.s32.totalorder %v1410, %v237
        %vm1442 = vcmp.eq.s32.totalorder %v1410, %v238
        %vm1443 = vcmp.eq.s32.totalorder %v1410, %v239
        %vm1444 = vcmp.eq.s32.totalorder %v1410, %v240
        %vm1445 = vcmp.eq.s32.totalorder %v1410, %v241
        %vm1446 = vcmp.eq.s32.totalorder %v1410, %v242
        %vm1447 = vcmp.eq.s32.totalorder %v1410, %v243
        %vm1448 = vcmp.eq.s32.totalorder %v1410, %v244
        %vm1449 = vcmp.eq.s32.totalorder %v1413, %v229
        %vm1450 = vcmp.eq.s32.totalorder %v1413, %v230
        %vm1451 = vcmp.eq.s32.totalorder %v1413, %v231
        %vm1452 = vcmp.eq.s32.totalorder %v1413, %v232
        %vm1453 = vcmp.eq.s32.totalorder %v1413, %v233
        %vm1454 = vcmp.eq.s32.totalorder %v1413, %v234
        %vm1455 = vcmp.eq.s32.totalorder %v1413, %v235
        %vm1456 = vcmp.eq.s32.totalorder %v1413, %v236
        %vm1457 = vcmp.eq.s32.totalorder %v1413, %v237
        %vm1458 = vcmp.eq.s32.totalorder %v1413, %v238
        %vm1459 = vcmp.eq.s32.totalorder %v1413, %v239
        %vm1460 = vcmp.eq.s32.totalorder %v1413, %v240
        %vm1461 = vcmp.eq.s32.totalorder %v1413, %v241
        %vm1462 = vcmp.eq.s32.totalorder %v1413, %v242
        %vm1463 = vcmp.eq.s32.totalorder %v1413, %v243
        %vm1464 = vcmp.eq.s32.totalorder %v1413, %v244
        %vm1465 = vcmp.eq.s32.totalorder %v1416, %v229
        %vm1466 = vcmp.eq.s32.totalorder %v1416, %v230
        %vm1467 = vcmp.eq.s32.totalorder %v1416, %v231
        %vm1468 = vcmp.eq.s32.totalorder %v1416, %v232
        %vm1469 = vcmp.eq.s32.totalorder %v1416, %v233
        %vm1470 = vcmp.eq.s32.totalorder %v1416, %v234
        %vm1471 = vcmp.eq.s32.totalorder %v1416, %v235
        %vm1472 = vcmp.eq.s32.totalorder %v1416, %v236
        %vm1473 = vcmp.eq.s32.totalorder %v1416, %v237
        %vm1474 = vcmp.eq.s32.totalorder %v1416, %v238
        %vm1475 = vcmp.eq.s32.totalorder %v1416, %v239
        %vm1476 = vcmp.eq.s32.totalorder %v1416, %v240
        %vm1477 = vcmp.eq.s32.totalorder %v1416, %v241
        %vm1478 = vcmp.eq.s32.totalorder %v1416, %v242
        %vm1479 = vcmp.eq.s32.totalorder %v1416, %v243
        %vm1480 = vcmp.eq.s32.totalorder %v1416, %v244
        %v1481 = vsel %vm1417, 1, 0
        %v1482 = vsel %vm1418, 1, 0
        %v1483 = vsel %vm1419, 1, 0
        %v1484 = vsel %vm1420, 1, 0
        %v1485 = vsel %vm1421, 1, 0
        %v1486 = vsel %vm1422, 1, 0
        %v1487 = vsel %vm1423, 1, 0
        %v1488 = vsel %vm1424, 1, 0
        %v1489 = vsel %vm1425, 1, 0
        %v1490 = vsel %vm1426, 1, 0
        %v1491 = vsel %vm1427, 1, 0
        %v1492 = vsel %vm1428, 1, 0
        %v1493 = vsel %vm1429, 1, 0
        %v1494 = vsel %vm1430, 1, 0
        %v1495 = vsel %vm1431, 1, 0
        %v1496 = vsel %vm1432, 1, 0
        %v1497 = vsel %vm1433, 1, 0
        %v1498 = vsel %vm1434, 1, 0
        %v1499 = vsel %vm1435, 1, 0
        %v1500 = vsel %vm1436, 1, 0
        %v1501 = vsel %vm1437, 1, 0
        %v1502 = vsel %vm1438, 1, 0
        %v1503 = vsel %vm1439, 1, 0
        %v1504 = vsel %vm1440, 1, 0
        %v1505 = vsel %vm1441, 1, 0
        %v1506 = vsel %vm1442, 1, 0
        %v1507 = vsel %vm1443, 1, 0
        %v1508 = vsel %vm1444, 1, 0
        %v1509 = vsel %vm1445, 1, 0
        %v1510 = vsel %vm1446, 1, 0
        %v1511 = vsel %vm1447, 1, 0
        %v1512 = vsel %vm1448, 1, 0
        %v1513 = vsel %vm1449, 1, 0
        %v1514 = vsel %vm1450, 1, 0
        %v1515 = vsel %vm1451, 1, 0
        %v1516 = vsel %vm1452, 1, 0
        %v1517 = vsel %vm1453, 1, 0
        %v1518 = vsel %vm1454, 1, 0
        %v1519 = vsel %vm1455, 1, 0
        %v1520 = vsel %vm1456, 1, 0
        %v1521 = vsel %vm1457, 1, 0
        %v1522 = vsel %vm1458, 1, 0
        %v1523 = vsel %vm1459, 1, 0
        %v1524 = vsel %vm1460, 1, 0
        %v1525 = vsel %vm1461, 1, 0
        %v1526 = vsel %vm1462, 1, 0
        %v1527 = vsel %vm1463, 1, 0
        %v1528 = vsel %vm1464, 1, 0
        %v1529 = vsel %vm1465, 1, 0
        %v1530 = vsel %vm1466, 1, 0
        %v1531 = vsel %vm1467, 1, 0
        %v1532 = vsel %vm1468, 1, 0
        %v1533 = vsel %vm1469, 1, 0
        %v1534 = vsel %vm1470, 1, 0
        %v1535 = vsel %vm1471, 1, 0
        %v1536 = vsel %vm1472, 1, 0
        %v1537 = vsel %vm1473, 1, 0
        %v1538 = vsel %vm1474, 1, 0
        %v1539 = vsel %vm1475, 1, 0
        %v1540 = vsel %vm1476, 1, 0
        %v1541 = vsel %vm1477, 1, 0
        %v1542 = vsel %vm1478, 1, 0
        %v1543 = vsel %vm1479, 1, 0
        %v1544 = vsel %vm1480, 1, 0
        %v1545 = vadd.s32 %v1341, %v1481
        %v1546 = vadd.s32 %v1342, %v1482
        %v1547 = vadd.s32 %v1343, %v1483
        %v1548 = vadd.s32 %v1344, %v1484
        %v1549 = vadd.s32 %v1345, %v1485
        %v1550 = vadd.s32 %v1346, %v1486
        %v1551 = vadd.s32 %v1347, %v1487
        %v1552 = vadd.s32 %v1348, %v1488
        %v1553 = vadd.s32 %v1349, %v1489
        %v1554 = vadd.s32 %v1350, %v1490
        %v1555 = vadd.s32 %v1351, %v1491
        %v1556 = vadd.s32 %v1352, %v1492
        %v1557 = vadd.s32 %v1353, %v1493
        %v1558 = vadd.s32 %v1354, %v1494
        %v1559 = vadd.s32 %v1355, %v1495
        %v1560 = vadd.s32 %v1356, %v1496
        %v1561 = vadd.s32 %v1357, %v1497
        %v1562 = vadd.s32 %v1358, %v1498
        %v1563 = vadd.s32 %v1359, %v1499
        %v1564 = vadd.s32 %v1360, %v1500
        %v1565 = vadd.s32 %v1361, %v1501
        %v1566 = vadd.s32 %v1362, %v1502
        %v1567 = vadd.s32 %v1363, %v1503
        %v1568 = vadd.s32 %v1364, %v1504
        %v1569 = vadd.s32 %v1365, %v1505
        %v1570 = vadd.s32 %v1366, %v1506
        %v1571 = vadd.s32 %v1367, %v1507
        %v1572 = vadd.s32 %v1368, %v1508
        %v1573 = vadd.s32 %v1369, %v1509
        %v1574 = vadd.s32 %v1370, %v1510
        %v1575 = vadd.s32 %v1371, %v1511
        %v1576 = vadd.s32 %v1372, %v1512
        %v1577 = vadd.s32 %v1373, %v1513
        %v1578 = vadd.s32 %v1374, %v1514
        %v1579 = vadd.s32 %v1375, %v1515
        %v1580 = vadd.s32 %v1376, %v1516
        %v1581 = vadd.s32 %v1377, %v1517
        %v1582 = vadd.s32 %v1378, %v1518
        %v1583 = vadd.s32 %v1379, %v1519
        %v1584 = vadd.s32 %v1380, %v1520
        %v1585 = vadd.s32 %v1381, %v1521
        %v1586 = vadd.s32 %v1382, %v1522
        %v1587 = vadd.s32 %v1383, %v1523
        %v1588 = vadd.s32 %v1384, %v1524
        %v1589 = vadd.s32 %v1385, %v1525
        %v1590 = vadd.s32 %v1386, %v1526
        %v1591 = vadd.s32 %v1387, %v1527
        %v1592 = vadd.s32 %v1388, %v1528
        %v1593 = vadd.s32 %v1389, %v1529
        %v1594 = vadd.s32 %v1390, %v1530
        %v1595 = vadd.s32 %v1391, %v1531
        %v1596 = vadd.s32 %v1392, %v1532
        %v1597 = vadd.s32 %v1393, %v1533
        %v1598 = vadd.s32 %v1394, %v1534
        %v1599 = vadd.s32 %v1395, %v1535
        %v1600 = vadd.s32 %v1396, %v1536
        %v1601 = vadd.s32 %v1397, %v1537
        %v1602 = vadd.s32 %v1398, %v1538
        %v1603 = vadd.s32 %v1399, %v1539
        %v1604 = vadd.s32 %v1400, %v1540
        %v1605 = vadd.s32 %v1401, %v1541
        %v1606 = vadd.s32 %v1402, %v1542
        %v1607 = vadd.s32 %v1403, %v1543
        %v1608 = vadd.s32 %v1404, %v1544
        %1609 = vset.pattern.permute.xlu0 7
        %1610 = vperm.xlu0 %1609, %v224
        %v1611 = vpop.permute.xlu0 %1610
        %1612 = vset.pattern.permute.xlu0 7
        %1613 = vperm.xlu0 %1612, %v225
        %v1614 = vpop.permute.xlu0 %1613
        %1615 = vset.pattern.permute.xlu0 7
        %1616 = vperm.xlu0 %1615, %v226
        %v1617 = vpop.permute.xlu0 %1616
        %1618 = vset.pattern.permute.xlu0 7
        %1619 = vperm.xlu0 %1618, %v227
        %v1620 = vpop.permute.xlu0 %1619
        %vm1621 = vcmp.eq.s32.totalorder %v1611, %v229
        %vm1622 = vcmp.eq.s32.totalorder %v1611, %v230
        %vm1623 = vcmp.eq.s32.totalorder %v1611, %v231
        %vm1624 = vcmp.eq.s32.totalorder %v1611, %v232
        %vm1625 = vcmp.eq.s32.totalorder %v1611, %v233
        %vm1626 = vcmp.eq.s32.totalorder %v1611, %v234
        %vm1627 = vcmp.eq.s32.totalorder %v1611, %v235
        %vm1628 = vcmp.eq.s32.totalorder %v1611, %v236
        %vm1629 = vcmp.eq.s32.totalorder %v1611, %v237
        %vm1630 = vcmp.eq.s32.totalorder %v1611, %v238
        %vm1631 = vcmp.eq.s32.totalorder %v1611, %v239
        %vm1632 = vcmp.eq.s32.totalorder %v1611, %v240
        %vm1633 = vcmp.eq.s32.totalorder %v1611, %v241
        %vm1634 = vcmp.eq.s32.totalorder %v1611, %v242
        %vm1635 = vcmp.eq.s32.totalorder %v1611, %v243
        %vm1636 = vcmp.eq.s32.totalorder %v1611, %v244
        %vm1637 = vcmp.eq.s32.totalorder %v1614, %v229
        %vm1638 = vcmp.eq.s32.totalorder %v1614, %v230
        %vm1639 = vcmp.eq.s32.totalorder %v1614, %v231
        %vm1640 = vcmp.eq.s32.totalorder %v1614, %v232
        %vm1641 = vcmp.eq.s32.totalorder %v1614, %v233
        %vm1642 = vcmp.eq.s32.totalorder %v1614, %v234
        %vm1643 = vcmp.eq.s32.totalorder %v1614, %v235
        %vm1644 = vcmp.eq.s32.totalorder %v1614, %v236
        %vm1645 = vcmp.eq.s32.totalorder %v1614, %v237
        %vm1646 = vcmp.eq.s32.totalorder %v1614, %v238
        %vm1647 = vcmp.eq.s32.totalorder %v1614, %v239
        %vm1648 = vcmp.eq.s32.totalorder %v1614, %v240
        %vm1649 = vcmp.eq.s32.totalorder %v1614, %v241
        %vm1650 = vcmp.eq.s32.totalorder %v1614, %v242
        %vm1651 = vcmp.eq.s32.totalorder %v1614, %v243
        %vm1652 = vcmp.eq.s32.totalorder %v1614, %v244
        %vm1653 = vcmp.eq.s32.totalorder %v1617, %v229
        %vm1654 = vcmp.eq.s32.totalorder %v1617, %v230
        %vm1655 = vcmp.eq.s32.totalorder %v1617, %v231
        %vm1656 = vcmp.eq.s32.totalorder %v1617, %v232
        %vm1657 = vcmp.eq.s32.totalorder %v1617, %v233
        %vm1658 = vcmp.eq.s32.totalorder %v1617, %v234
        %vm1659 = vcmp.eq.s32.totalorder %v1617, %v235
        %vm1660 = vcmp.eq.s32.totalorder %v1617, %v236
        %vm1661 = vcmp.eq.s32.totalorder %v1617, %v237
        %vm1662 = vcmp.eq.s32.totalorder %v1617, %v238
        %vm1663 = vcmp.eq.s32.totalorder %v1617, %v239
        %vm1664 = vcmp.eq.s32.totalorder %v1617, %v240
        %vm1665 = vcmp.eq.s32.totalorder %v1617, %v241
        %vm1666 = vcmp.eq.s32.totalorder %v1617, %v242
        %vm1667 = vcmp.eq.s32.totalorder %v1617, %v243
        %vm1668 = vcmp.eq.s32.totalorder %v1617, %v244
        %vm1669 = vcmp.eq.s32.totalorder %v1620, %v229
        %vm1670 = vcmp.eq.s32.totalorder %v1620, %v230
        %vm1671 = vcmp.eq.s32.totalorder %v1620, %v231
        %vm1672 = vcmp.eq.s32.totalorder %v1620, %v232
        %vm1673 = vcmp.eq.s32.totalorder %v1620, %v233
        %vm1674 = vcmp.eq.s32.totalorder %v1620, %v234
        %vm1675 = vcmp.eq.s32.totalorder %v1620, %v235
        %vm1676 = vcmp.eq.s32.totalorder %v1620, %v236
        %vm1677 = vcmp.eq.s32.totalorder %v1620, %v237
        %vm1678 = vcmp.eq.s32.totalorder %v1620, %v238
        %vm1679 = vcmp.eq.s32.totalorder %v1620, %v239
        %vm1680 = vcmp.eq.s32.totalorder %v1620, %v240
        %vm1681 = vcmp.eq.s32.totalorder %v1620, %v241
        %vm1682 = vcmp.eq.s32.totalorder %v1620, %v242
        %vm1683 = vcmp.eq.s32.totalorder %v1620, %v243
        %vm1684 = vcmp.eq.s32.totalorder %v1620, %v244
        %v1685 = vsel %vm1621, 1, 0
        %v1686 = vsel %vm1622, 1, 0
        %v1687 = vsel %vm1623, 1, 0
        %v1688 = vsel %vm1624, 1, 0
        %v1689 = vsel %vm1625, 1, 0
        %v1690 = vsel %vm1626, 1, 0
        %v1691 = vsel %vm1627, 1, 0
        %v1692 = vsel %vm1628, 1, 0
        %v1693 = vsel %vm1629, 1, 0
        %v1694 = vsel %vm1630, 1, 0
        %v1695 = vsel %vm1631, 1, 0
        %v1696 = vsel %vm1632, 1, 0
        %v1697 = vsel %vm1633, 1, 0
        %v1698 = vsel %vm1634, 1, 0
        %v1699 = vsel %vm1635, 1, 0
        %v1700 = vsel %vm1636, 1, 0
        %v1701 = vsel %vm1637, 1, 0
        %v1702 = vsel %vm1638, 1, 0
        %v1703 = vsel %vm1639, 1, 0
        %v1704 = vsel %vm1640, 1, 0
        %v1705 = vsel %vm1641, 1, 0
        %v1706 = vsel %vm1642, 1, 0
        %v1707 = vsel %vm1643, 1, 0
        %v1708 = vsel %vm1644, 1, 0
        %v1709 = vsel %vm1645, 1, 0
        %v1710 = vsel %vm1646, 1, 0
        %v1711 = vsel %vm1647, 1, 0
        %v1712 = vsel %vm1648, 1, 0
        %v1713 = vsel %vm1649, 1, 0
        %v1714 = vsel %vm1650, 1, 0
        %v1715 = vsel %vm1651, 1, 0
        %v1716 = vsel %vm1652, 1, 0
        %v1717 = vsel %vm1653, 1, 0
        %v1718 = vsel %vm1654, 1, 0
        %v1719 = vsel %vm1655, 1, 0
        %v1720 = vsel %vm1656, 1, 0
        %v1721 = vsel %vm1657, 1, 0
        %v1722 = vsel %vm1658, 1, 0
        %v1723 = vsel %vm1659, 1, 0
        %v1724 = vsel %vm1660, 1, 0
        %v1725 = vsel %vm1661, 1, 0
        %v1726 = vsel %vm1662, 1, 0
        %v1727 = vsel %vm1663, 1, 0
        %v1728 = vsel %vm1664, 1, 0
        %v1729 = vsel %vm1665, 1, 0
        %v1730 = vsel %vm1666, 1, 0
        %v1731 = vsel %vm1667, 1, 0
        %v1732 = vsel %vm1668, 1, 0
        %v1733 = vsel %vm1669, 1, 0
        %v1734 = vsel %vm1670, 1, 0
        %v1735 = vsel %vm1671, 1, 0
        %v1736 = vsel %vm1672, 1, 0
        %v1737 = vsel %vm1673, 1, 0
        %v1738 = vsel %vm1674, 1, 0
        %v1739 = vsel %vm1675, 1, 0
        %v1740 = vsel %vm1676, 1, 0
        %v1741 = vsel %vm1677, 1, 0
        %v1742 = vsel %vm1678, 1, 0
        %v1743 = vsel %vm1679, 1, 0
        %v1744 = vsel %vm1680, 1, 0
        %v1745 = vsel %vm1681, 1, 0
        %v1746 = vsel %vm1682, 1, 0
        %v1747 = vsel %vm1683, 1, 0
        %v1748 = vsel %vm1684, 1, 0
        %v1749 = vadd.s32 %v1545, %v1685
        %v1750 = vadd.s32 %v1546, %v1686
        %v1751 = vadd.s32 %v1547, %v1687
        %v1752 = vadd.s32 %v1548, %v1688
        %v1753 = vadd.s32 %v1549, %v1689
        %v1754 = vadd.s32 %v1550, %v1690
        %v1755 = vadd.s32 %v1551, %v1691
        %v1756 = vadd.s32 %v1552, %v1692
        %v1757 = vadd.s32 %v1553, %v1693
        %v1758 = vadd.s32 %v1554, %v1694
        %v1759 = vadd.s32 %v1555, %v1695
        %v1760 = vadd.s32 %v1556, %v1696
        %v1761 = vadd.s32 %v1557, %v1697
        %v1762 = vadd.s32 %v1558, %v1698
        %v1763 = vadd.s32 %v1559, %v1699
        %v1764 = vadd.s32 %v1560, %v1700
        %v1765 = vadd.s32 %v1561, %v1701
        %v1766 = vadd.s32 %v1562, %v1702
        %v1767 = vadd.s32 %v1563, %v1703
        %v1768 = vadd.s32 %v1564, %v1704
        %v1769 = vadd.s32 %v1565, %v1705
        %v1770 = vadd.s32 %v1566, %v1706
        %v1771 = vadd.s32 %v1567, %v1707
        %v1772 = vadd.s32 %v1568, %v1708
        %v1773 = vadd.s32 %v1569, %v1709
        %v1774 = vadd.s32 %v1570, %v1710
        %v1775 = vadd.s32 %v1571, %v1711
        %v1776 = vadd.s32 %v1572, %v1712
        %v1777 = vadd.s32 %v1573, %v1713
        %v1778 = vadd.s32 %v1574, %v1714
        %v1779 = vadd.s32 %v1575, %v1715
        %v1780 = vadd.s32 %v1576, %v1716
        %v1781 = vadd.s32 %v1577, %v1717
        %v1782 = vadd.s32 %v1578, %v1718
        %v1783 = vadd.s32 %v1579, %v1719
        %v1784 = vadd.s32 %v1580, %v1720
        %v1785 = vadd.s32 %v1581, %v1721
        %v1786 = vadd.s32 %v1582, %v1722
        %v1787 = vadd.s32 %v1583, %v1723
        %v1788 = vadd.s32 %v1584, %v1724
        %v1789 = vadd.s32 %v1585, %v1725
        %v1790 = vadd.s32 %v1586, %v1726
        %v1791 = vadd.s32 %v1587, %v1727
        %v1792 = vadd.s32 %v1588, %v1728
        %v1793 = vadd.s32 %v1589, %v1729
        %v1794 = vadd.s32 %v1590, %v1730
        %v1795 = vadd.s32 %v1591, %v1731
        %v1796 = vadd.s32 %v1592, %v1732
        %v1797 = vadd.s32 %v1593, %v1733
        %v1798 = vadd.s32 %v1594, %v1734
        %v1799 = vadd.s32 %v1595, %v1735
        %v1800 = vadd.s32 %v1596, %v1736
        %v1801 = vadd.s32 %v1597, %v1737
        %v1802 = vadd.s32 %v1598, %v1738
        %v1803 = vadd.s32 %v1599, %v1739
        %v1804 = vadd.s32 %v1600, %v1740
        %v1805 = vadd.s32 %v1601, %v1741
        %v1806 = vadd.s32 %v1602, %v1742
        %v1807 = vadd.s32 %v1603, %v1743
        %v1808 = vadd.s32 %v1604, %v1744
        %v1809 = vadd.s32 %v1605, %v1745
        %v1810 = vadd.s32 %v1606, %v1746
        %v1811 = vadd.s32 %v1607, %v1747
        %v1812 = vadd.s32 %v1608, %v1748
        %1813 = vset.pattern.permute.xlu0 8
        %1814 = vperm.xlu0 %1813, %v224
        %v1815 = vpop.permute.xlu0 %1814
        %1816 = vset.pattern.permute.xlu0 8
        %1817 = vperm.xlu0 %1816, %v225
        %v1818 = vpop.permute.xlu0 %1817
        %1819 = vset.pattern.permute.xlu0 8
        %1820 = vperm.xlu0 %1819, %v226
        %v1821 = vpop.permute.xlu0 %1820
        %1822 = vset.pattern.permute.xlu0 8
        %1823 = vperm.xlu0 %1822, %v227
        %v1824 = vpop.permute.xlu0 %1823
        %vm1825 = vcmp.eq.s32.totalorder %v1815, %v229
        %vm1826 = vcmp.eq.s32.totalorder %v1815, %v230
        %vm1827 = vcmp.eq.s32.totalorder %v1815, %v231
        %vm1828 = vcmp.eq.s32.totalorder %v1815, %v232
        %vm1829 = vcmp.eq.s32.totalorder %v1815, %v233
        %vm1830 = vcmp.eq.s32.totalorder %v1815, %v234
        %vm1831 = vcmp.eq.s32.totalorder %v1815, %v235
        %vm1832 = vcmp.eq.s32.totalorder %v1815, %v236
        %vm1833 = vcmp.eq.s32.totalorder %v1815, %v237
        %vm1834 = vcmp.eq.s32.totalorder %v1815, %v238
        %vm1835 = vcmp.eq.s32.totalorder %v1815, %v239
        %vm1836 = vcmp.eq.s32.totalorder %v1815, %v240
        %vm1837 = vcmp.eq.s32.totalorder %v1815, %v241
        %vm1838 = vcmp.eq.s32.totalorder %v1815, %v242
        %vm1839 = vcmp.eq.s32.totalorder %v1815, %v243
        %vm1840 = vcmp.eq.s32.totalorder %v1815, %v244
        %vm1841 = vcmp.eq.s32.totalorder %v1818, %v229
        %vm1842 = vcmp.eq.s32.totalorder %v1818, %v230
        %vm1843 = vcmp.eq.s32.totalorder %v1818, %v231
        %vm1844 = vcmp.eq.s32.totalorder %v1818, %v232
        %vm1845 = vcmp.eq.s32.totalorder %v1818, %v233
        %vm1846 = vcmp.eq.s32.totalorder %v1818, %v234
        %vm1847 = vcmp.eq.s32.totalorder %v1818, %v235
        %vm1848 = vcmp.eq.s32.totalorder %v1818, %v236
        %vm1849 = vcmp.eq.s32.totalorder %v1818, %v237
        %vm1850 = vcmp.eq.s32.totalorder %v1818, %v238
        %vm1851 = vcmp.eq.s32.totalorder %v1818, %v239
        %vm1852 = vcmp.eq.s32.totalorder %v1818, %v240
        %vm1853 = vcmp.eq.s32.totalorder %v1818, %v241
        %vm1854 = vcmp.eq.s32.totalorder %v1818, %v242
        %vm1855 = vcmp.eq.s32.totalorder %v1818, %v243
        %vm1856 = vcmp.eq.s32.totalorder %v1818, %v244
        %vm1857 = vcmp.eq.s32.totalorder %v1821, %v229
        %vm1858 = vcmp.eq.s32.totalorder %v1821, %v230
        %vm1859 = vcmp.eq.s32.totalorder %v1821, %v231
        %vm1860 = vcmp.eq.s32.totalorder %v1821, %v232
        %vm1861 = vcmp.eq.s32.totalorder %v1821, %v233
        %vm1862 = vcmp.eq.s32.totalorder %v1821, %v234
        %vm1863 = vcmp.eq.s32.totalorder %v1821, %v235
        %vm1864 = vcmp.eq.s32.totalorder %v1821, %v236
        %vm1865 = vcmp.eq.s32.totalorder %v1821, %v237
        %vm1866 = vcmp.eq.s32.totalorder %v1821, %v238
        %vm1867 = vcmp.eq.s32.totalorder %v1821, %v239
        %vm1868 = vcmp.eq.s32.totalorder %v1821, %v240
        %vm1869 = vcmp.eq.s32.totalorder %v1821, %v241
        %vm1870 = vcmp.eq.s32.totalorder %v1821, %v242
        %vm1871 = vcmp.eq.s32.totalorder %v1821, %v243
        %vm1872 = vcmp.eq.s32.totalorder %v1821, %v244
        %vm1873 = vcmp.eq.s32.totalorder %v1824, %v229
        %vm1874 = vcmp.eq.s32.totalorder %v1824, %v230
        %vm1875 = vcmp.eq.s32.totalorder %v1824, %v231
        %vm1876 = vcmp.eq.s32.totalorder %v1824, %v232
        %vm1877 = vcmp.eq.s32.totalorder %v1824, %v233
        %vm1878 = vcmp.eq.s32.totalorder %v1824, %v234
        %vm1879 = vcmp.eq.s32.totalorder %v1824, %v235
        %vm1880 = vcmp.eq.s32.totalorder %v1824, %v236
        %vm1881 = vcmp.eq.s32.totalorder %v1824, %v237
        %vm1882 = vcmp.eq.s32.totalorder %v1824, %v238
        %vm1883 = vcmp.eq.s32.totalorder %v1824, %v239
        %vm1884 = vcmp.eq.s32.totalorder %v1824, %v240
        %vm1885 = vcmp.eq.s32.totalorder %v1824, %v241
        %vm1886 = vcmp.eq.s32.totalorder %v1824, %v242
        %vm1887 = vcmp.eq.s32.totalorder %v1824, %v243
        %vm1888 = vcmp.eq.s32.totalorder %v1824, %v244
        %v1889 = vsel %vm1825, 1, 0
        %v1890 = vsel %vm1826, 1, 0
        %v1891 = vsel %vm1827, 1, 0
        %v1892 = vsel %vm1828, 1, 0
        %v1893 = vsel %vm1829, 1, 0
        %v1894 = vsel %vm1830, 1, 0
        %v1895 = vsel %vm1831, 1, 0
        %v1896 = vsel %vm1832, 1, 0
        %v1897 = vsel %vm1833, 1, 0
        %v1898 = vsel %vm1834, 1, 0
        %v1899 = vsel %vm1835, 1, 0
        %v1900 = vsel %vm1836, 1, 0
        %v1901 = vsel %vm1837, 1, 0
        %v1902 = vsel %vm1838, 1, 0
        %v1903 = vsel %vm1839, 1, 0
        %v1904 = vsel %vm1840, 1, 0
        %v1905 = vsel %vm1841, 1, 0
        %v1906 = vsel %vm1842, 1, 0
        %v1907 = vsel %vm1843, 1, 0
        %v1908 = vsel %vm1844, 1, 0
        %v1909 = vsel %vm1845, 1, 0
        %v1910 = vsel %vm1846, 1, 0
        %v1911 = vsel %vm1847, 1, 0
        %v1912 = vsel %vm1848, 1, 0
        %v1913 = vsel %vm1849, 1, 0
        %v1914 = vsel %vm1850, 1, 0
        %v1915 = vsel %vm1851, 1, 0
        %v1916 = vsel %vm1852, 1, 0
        %v1917 = vsel %vm1853, 1, 0
        %v1918 = vsel %vm1854, 1, 0
        %v1919 = vsel %vm1855, 1, 0
        %v1920 = vsel %vm1856, 1, 0
        %v1921 = vsel %vm1857, 1, 0
        %v1922 = vsel %vm1858, 1, 0
        %v1923 = vsel %vm1859, 1, 0
        %v1924 = vsel %vm1860, 1, 0
        %v1925 = vsel %vm1861, 1, 0
        %v1926 = vsel %vm1862, 1, 0
        %v1927 = vsel %vm1863, 1, 0
        %v1928 = vsel %vm1864, 1, 0
        %v1929 = vsel %vm1865, 1, 0
        %v1930 = vsel %vm1866, 1, 0
        %v1931 = vsel %vm1867, 1, 0
        %v1932 = vsel %vm1868, 1, 0
        %v1933 = vsel %vm1869, 1, 0
        %v1934 = vsel %vm1870, 1, 0
        %v1935 = vsel %vm1871, 1, 0
        %v1936 = vsel %vm1872, 1, 0
        %v1937 = vsel %vm1873, 1, 0
        %v1938 = vsel %vm1874, 1, 0
        %v1939 = vsel %vm1875, 1, 0
        %v1940 = vsel %vm1876, 1, 0
        %v1941 = vsel %vm1877, 1, 0
        %v1942 = vsel %vm1878, 1, 0
        %v1943 = vsel %vm1879, 1, 0
        %v1944 = vsel %vm1880, 1, 0
        %v1945 = vsel %vm1881, 1, 0
        %v1946 = vsel %vm1882, 1, 0
        %v1947 = vsel %vm1883, 1, 0
        %v1948 = vsel %vm1884, 1, 0
        %v1949 = vsel %vm1885, 1, 0
        %v1950 = vsel %vm1886, 1, 0
        %v1951 = vsel %vm1887, 1, 0
        %v1952 = vsel %vm1888, 1, 0
        %v1953 = vadd.s32 %v1749, %v1889
        %v1954 = vadd.s32 %v1750, %v1890
        %v1955 = vadd.s32 %v1751, %v1891
        %v1956 = vadd.s32 %v1752, %v1892
        %v1957 = vadd.s32 %v1753, %v1893
        %v1958 = vadd.s32 %v1754, %v1894
        %v1959 = vadd.s32 %v1755, %v1895
        %v1960 = vadd.s32 %v1756, %v1896
        %v1961 = vadd.s32 %v1757, %v1897
        %v1962 = vadd.s32 %v1758, %v1898
        %v1963 = vadd.s32 %v1759, %v1899
        %v1964 = vadd.s32 %v1760, %v1900
        %v1965 = vadd.s32 %v1761, %v1901
        %v1966 = vadd.s32 %v1762, %v1902
        %v1967 = vadd.s32 %v1763, %v1903
        %v1968 = vadd.s32 %v1764, %v1904
        %v1969 = vadd.s32 %v1765, %v1905
        %v1970 = vadd.s32 %v1766, %v1906
        %v1971 = vadd.s32 %v1767, %v1907
        %v1972 = vadd.s32 %v1768, %v1908
        %v1973 = vadd.s32 %v1769, %v1909
        %v1974 = vadd.s32 %v1770, %v1910
        %v1975 = vadd.s32 %v1771, %v1911
        %v1976 = vadd.s32 %v1772, %v1912
        %v1977 = vadd.s32 %v1773, %v1913
        %v1978 = vadd.s32 %v1774, %v1914
        %v1979 = vadd.s32 %v1775, %v1915
        %v1980 = vadd.s32 %v1776, %v1916
        %v1981 = vadd.s32 %v1777, %v1917
        %v1982 = vadd.s32 %v1778, %v1918
        %v1983 = vadd.s32 %v1779, %v1919
        %v1984 = vadd.s32 %v1780, %v1920
        %v1985 = vadd.s32 %v1781, %v1921
        %v1986 = vadd.s32 %v1782, %v1922
        %v1987 = vadd.s32 %v1783, %v1923
        %v1988 = vadd.s32 %v1784, %v1924
        %v1989 = vadd.s32 %v1785, %v1925
        %v1990 = vadd.s32 %v1786, %v1926
        %v1991 = vadd.s32 %v1787, %v1927
        %v1992 = vadd.s32 %v1788, %v1928
        %v1993 = vadd.s32 %v1789, %v1929
        %v1994 = vadd.s32 %v1790, %v1930
        %v1995 = vadd.s32 %v1791, %v1931
        %v1996 = vadd.s32 %v1792, %v1932
        %v1997 = vadd.s32 %v1793, %v1933
        %v1998 = vadd.s32 %v1794, %v1934
        %v1999 = vadd.s32 %v1795, %v1935
        %v2000 = vadd.s32 %v1796, %v1936
        %v2001 = vadd.s32 %v1797, %v1937
        %v2002 = vadd.s32 %v1798, %v1938
        %v2003 = vadd.s32 %v1799, %v1939
        %v2004 = vadd.s32 %v1800, %v1940
        %v2005 = vadd.s32 %v1801, %v1941
        %v2006 = vadd.s32 %v1802, %v1942
        %v2007 = vadd.s32 %v1803, %v1943
        %v2008 = vadd.s32 %v1804, %v1944
        %v2009 = vadd.s32 %v1805, %v1945
        %v2010 = vadd.s32 %v1806, %v1946
        %v2011 = vadd.s32 %v1807, %v1947
        %v2012 = vadd.s32 %v1808, %v1948
        %v2013 = vadd.s32 %v1809, %v1949
        %v2014 = vadd.s32 %v1810, %v1950
        %v2015 = vadd.s32 %v1811, %v1951
        %v2016 = vadd.s32 %v1812, %v1952
        %2017 = vset.pattern.permute.xlu0 9
        %2018 = vperm.xlu0 %2017, %v224
        %v2019 = vpop.permute.xlu0 %2018
        %2020 = vset.pattern.permute.xlu0 9
        %2021 = vperm.xlu0 %2020, %v225
        %v2022 = vpop.permute.xlu0 %2021
        %2023 = vset.pattern.permute.xlu0 9
        %2024 = vperm.xlu0 %2023, %v226
        %v2025 = vpop.permute.xlu0 %2024
        %2026 = vset.pattern.permute.xlu0 9
        %2027 = vperm.xlu0 %2026, %v227
        %v2028 = vpop.permute.xlu0 %2027
        %vm2029 = vcmp.eq.s32.totalorder %v2019, %v229
        %vm2030 = vcmp.eq.s32.totalorder %v2019, %v230
        %vm2031 = vcmp.eq.s32.totalorder %v2019, %v231
        %vm2032 = vcmp.eq.s32.totalorder %v2019, %v232
        %vm2033 = vcmp.eq.s32.totalorder %v2019, %v233
        %vm2034 = vcmp.eq.s32.totalorder %v2019, %v234
        %vm2035 = vcmp.eq.s32.totalorder %v2019, %v235
        %vm2036 = vcmp.eq.s32.totalorder %v2019, %v236
        %vm2037 = vcmp.eq.s32.totalorder %v2019, %v237
        %vm2038 = vcmp.eq.s32.totalorder %v2019, %v238
        %vm2039 = vcmp.eq.s32.totalorder %v2019, %v239
        %vm2040 = vcmp.eq.s32.totalorder %v2019, %v240
        %vm2041 = vcmp.eq.s32.totalorder %v2019, %v241
        %vm2042 = vcmp.eq.s32.totalorder %v2019, %v242
        %vm2043 = vcmp.eq.s32.totalorder %v2019, %v243
        %vm2044 = vcmp.eq.s32.totalorder %v2019, %v244
        %vm2045 = vcmp.eq.s32.totalorder %v2022, %v229
        %vm2046 = vcmp.eq.s32.totalorder %v2022, %v230
        %vm2047 = vcmp.eq.s32.totalorder %v2022, %v231
        %vm2048 = vcmp.eq.s32.totalorder %v2022, %v232
        %vm2049 = vcmp.eq.s32.totalorder %v2022, %v233
        %vm2050 = vcmp.eq.s32.totalorder %v2022, %v234
        %vm2051 = vcmp.eq.s32.totalorder %v2022, %v235
        %vm2052 = vcmp.eq.s32.totalorder %v2022, %v236
        %vm2053 = vcmp.eq.s32.totalorder %v2022, %v237
        %vm2054 = vcmp.eq.s32.totalorder %v2022, %v238
        %vm2055 = vcmp.eq.s32.totalorder %v2022, %v239
        %vm2056 = vcmp.eq.s32.totalorder %v2022, %v240
        %vm2057 = vcmp.eq.s32.totalorder %v2022, %v241
        %vm2058 = vcmp.eq.s32.totalorder %v2022, %v242
        %vm2059 = vcmp.eq.s32.totalorder %v2022, %v243
        %vm2060 = vcmp.eq.s32.totalorder %v2022, %v244
        %vm2061 = vcmp.eq.s32.totalorder %v2025, %v229
        %vm2062 = vcmp.eq.s32.totalorder %v2025, %v230
        %vm2063 = vcmp.eq.s32.totalorder %v2025, %v231
        %vm2064 = vcmp.eq.s32.totalorder %v2025, %v232
        %vm2065 = vcmp.eq.s32.totalorder %v2025, %v233
        %vm2066 = vcmp.eq.s32.totalorder %v2025, %v234
        %vm2067 = vcmp.eq.s32.totalorder %v2025, %v235
        %vm2068 = vcmp.eq.s32.totalorder %v2025, %v236
        %vm2069 = vcmp.eq.s32.totalorder %v2025, %v237
        %vm2070 = vcmp.eq.s32.totalorder %v2025, %v238
        %vm2071 = vcmp.eq.s32.totalorder %v2025, %v239
        %vm2072 = vcmp.eq.s32.totalorder %v2025, %v240
        %vm2073 = vcmp.eq.s32.totalorder %v2025, %v241
        %vm2074 = vcmp.eq.s32.totalorder %v2025, %v242
        %vm2075 = vcmp.eq.s32.totalorder %v2025, %v243
        %vm2076 = vcmp.eq.s32.totalorder %v2025, %v244
        %vm2077 = vcmp.eq.s32.totalorder %v2028, %v229
        %vm2078 = vcmp.eq.s32.totalorder %v2028, %v230
        %vm2079 = vcmp.eq.s32.totalorder %v2028, %v231
        %vm2080 = vcmp.eq.s32.totalorder %v2028, %v232
        %vm2081 = vcmp.eq.s32.totalorder %v2028, %v233
        %vm2082 = vcmp.eq.s32.totalorder %v2028, %v234
        %vm2083 = vcmp.eq.s32.totalorder %v2028, %v235
        %vm2084 = vcmp.eq.s32.totalorder %v2028, %v236
        %vm2085 = vcmp.eq.s32.totalorder %v2028, %v237
        %vm2086 = vcmp.eq.s32.totalorder %v2028, %v238
        %vm2087 = vcmp.eq.s32.totalorder %v2028, %v239
        %vm2088 = vcmp.eq.s32.totalorder %v2028, %v240
        %vm2089 = vcmp.eq.s32.totalorder %v2028, %v241
        %vm2090 = vcmp.eq.s32.totalorder %v2028, %v242
        %vm2091 = vcmp.eq.s32.totalorder %v2028, %v243
        %vm2092 = vcmp.eq.s32.totalorder %v2028, %v244
        %v2093 = vsel %vm2029, 1, 0
        %v2094 = vsel %vm2030, 1, 0
        %v2095 = vsel %vm2031, 1, 0
        %v2096 = vsel %vm2032, 1, 0
        %v2097 = vsel %vm2033, 1, 0
        %v2098 = vsel %vm2034, 1, 0
        %v2099 = vsel %vm2035, 1, 0
        %v2100 = vsel %vm2036, 1, 0
        %v2101 = vsel %vm2037, 1, 0
        %v2102 = vsel %vm2038, 1, 0
        %v2103 = vsel %vm2039, 1, 0
        %v2104 = vsel %vm2040, 1, 0
        %v2105 = vsel %vm2041, 1, 0
        %v2106 = vsel %vm2042, 1, 0
        %v2107 = vsel %vm2043, 1, 0
        %v2108 = vsel %vm2044, 1, 0
        %v2109 = vsel %vm2045, 1, 0
        %v2110 = vsel %vm2046, 1, 0
        %v2111 = vsel %vm2047, 1, 0
        %v2112 = vsel %vm2048, 1, 0
        %v2113 = vsel %vm2049, 1, 0
        %v2114 = vsel %vm2050, 1, 0
        %v2115 = vsel %vm2051, 1, 0
        %v2116 = vsel %vm2052, 1, 0
        %v2117 = vsel %vm2053, 1, 0
        %v2118 = vsel %vm2054, 1, 0
        %v2119 = vsel %vm2055, 1, 0
        %v2120 = vsel %vm2056, 1, 0
        %v2121 = vsel %vm2057, 1, 0
        %v2122 = vsel %vm2058, 1, 0
        %v2123 = vsel %vm2059, 1, 0
        %v2124 = vsel %vm2060, 1, 0
        %v2125 = vsel %vm2061, 1, 0
        %v2126 = vsel %vm2062, 1, 0
        %v2127 = vsel %vm2063, 1, 0
        %v2128 = vsel %vm2064, 1, 0
        %v2129 = vsel %vm2065, 1, 0
        %v2130 = vsel %vm2066, 1, 0
        %v2131 = vsel %vm2067, 1, 0
        %v2132 = vsel %vm2068, 1, 0
        %v2133 = vsel %vm2069, 1, 0
        %v2134 = vsel %vm2070, 1, 0
        %v2135 = vsel %vm2071, 1, 0
        %v2136 = vsel %vm2072, 1, 0
        %v2137 = vsel %vm2073, 1, 0
        %v2138 = vsel %vm2074, 1, 0
        %v2139 = vsel %vm2075, 1, 0
        %v2140 = vsel %vm2076, 1, 0
        %v2141 = vsel %vm2077, 1, 0
        %v2142 = vsel %vm2078, 1, 0
        %v2143 = vsel %vm2079, 1, 0
        %v2144 = vsel %vm2080, 1, 0
        %v2145 = vsel %vm2081, 1, 0
        %v2146 = vsel %vm2082, 1, 0
        %v2147 = vsel %vm2083, 1, 0
        %v2148 = vsel %vm2084, 1, 0
        %v2149 = vsel %vm2085, 1, 0
        %v2150 = vsel %vm2086, 1, 0
        %v2151 = vsel %vm2087, 1, 0
        %v2152 = vsel %vm2088, 1, 0
        %v2153 = vsel %vm2089, 1, 0
        %v2154 = vsel %vm2090, 1, 0
        %v2155 = vsel %vm2091, 1, 0
        %v2156 = vsel %vm2092, 1, 0
        %v2157 = vadd.s32 %v1953, %v2093
        %v2158 = vadd.s32 %v1954, %v2094
        %v2159 = vadd.s32 %v1955, %v2095
        %v2160 = vadd.s32 %v1956, %v2096
        %v2161 = vadd.s32 %v1957, %v2097
        %v2162 = vadd.s32 %v1958, %v2098
        %v2163 = vadd.s32 %v1959, %v2099
        %v2164 = vadd.s32 %v1960, %v2100
        %v2165 = vadd.s32 %v1961, %v2101
        %v2166 = vadd.s32 %v1962, %v2102
        %v2167 = vadd.s32 %v1963, %v2103
        %v2168 = vadd.s32 %v1964, %v2104
        %v2169 = vadd.s32 %v1965, %v2105
        %v2170 = vadd.s32 %v1966, %v2106
        %v2171 = vadd.s32 %v1967, %v2107
        %v2172 = vadd.s32 %v1968, %v2108
        %v2173 = vadd.s32 %v1969, %v2109
        %v2174 = vadd.s32 %v1970, %v2110
        %v2175 = vadd.s32 %v1971, %v2111
        %v2176 = vadd.s32 %v1972, %v2112
        %v2177 = vadd.s32 %v1973, %v2113
        %v2178 = vadd.s32 %v1974, %v2114
        %v2179 = vadd.s32 %v1975, %v2115
        %v2180 = vadd.s32 %v1976, %v2116
        %v2181 = vadd.s32 %v1977, %v2117
        %v2182 = vadd.s32 %v1978, %v2118
        %v2183 = vadd.s32 %v1979, %v2119
        %v2184 = vadd.s32 %v1980, %v2120
        %v2185 = vadd.s32 %v1981, %v2121
        %v2186 = vadd.s32 %v1982, %v2122
        %v2187 = vadd.s32 %v1983, %v2123
        %v2188 = vadd.s32 %v1984, %v2124
        %v2189 = vadd.s32 %v1985, %v2125
        %v2190 = vadd.s32 %v1986, %v2126
        %v2191 = vadd.s32 %v1987, %v2127
        %v2192 = vadd.s32 %v1988, %v2128
        %v2193 = vadd.s32 %v1989, %v2129
        %v2194 = vadd.s32 %v1990, %v2130
        %v2195 = vadd.s32 %v1991, %v2131
        %v2196 = vadd.s32 %v1992, %v2132
        %v2197 = vadd.s32 %v1993, %v2133
        %v2198 = vadd.s32 %v1994, %v2134
        %v2199 = vadd.s32 %v1995, %v2135
        %v2200 = vadd.s32 %v1996, %v2136
        %v2201 = vadd.s32 %v1997, %v2137
        %v2202 = vadd.s32 %v1998, %v2138
        %v2203 = vadd.s32 %v1999, %v2139
        %v2204 = vadd.s32 %v2000, %v2140
        %v2205 = vadd.s32 %v2001, %v2141
        %v2206 = vadd.s32 %v2002, %v2142
        %v2207 = vadd.s32 %v2003, %v2143
        %v2208 = vadd.s32 %v2004, %v2144
        %v2209 = vadd.s32 %v2005, %v2145
        %v2210 = vadd.s32 %v2006, %v2146
        %v2211 = vadd.s32 %v2007, %v2147
        %v2212 = vadd.s32 %v2008, %v2148
        %v2213 = vadd.s32 %v2009, %v2149
        %v2214 = vadd.s32 %v2010, %v2150
        %v2215 = vadd.s32 %v2011, %v2151
        %v2216 = vadd.s32 %v2012, %v2152
        %v2217 = vadd.s32 %v2013, %v2153
        %v2218 = vadd.s32 %v2014, %v2154
        %v2219 = vadd.s32 %v2015, %v2155
        %v2220 = vadd.s32 %v2016, %v2156
        %2221 = vset.pattern.permute.xlu0 10
        %2222 = vperm.xlu0 %2221, %v224
        %v2223 = vpop.permute.xlu0 %2222
        %2224 = vset.pattern.permute.xlu0 10
        %2225 = vperm.xlu0 %2224, %v225
        %v2226 = vpop.permute.xlu0 %2225
        %2227 = vset.pattern.permute.xlu0 10
        %2228 = vperm.xlu0 %2227, %v226
        %v2229 = vpop.permute.xlu0 %2228
        %2230 = vset.pattern.permute.xlu0 10
        %2231 = vperm.xlu0 %2230, %v227
        %v2232 = vpop.permute.xlu0 %2231
        %vm2233 = vcmp.eq.s32.totalorder %v2223, %v229
        %vm2234 = vcmp.eq.s32.totalorder %v2223, %v230
        %vm2235 = vcmp.eq.s32.totalorder %v2223, %v231
        %vm2236 = vcmp.eq.s32.totalorder %v2223, %v232
        %vm2237 = vcmp.eq.s32.totalorder %v2223, %v233
        %vm2238 = vcmp.eq.s32.totalorder %v2223, %v234
        %vm2239 = vcmp.eq.s32.totalorder %v2223, %v235
        %vm2240 = vcmp.eq.s32.totalorder %v2223, %v236
        %vm2241 = vcmp.eq.s32.totalorder %v2223, %v237
        %vm2242 = vcmp.eq.s32.totalorder %v2223, %v238
        %vm2243 = vcmp.eq.s32.totalorder %v2223, %v239
        %vm2244 = vcmp.eq.s32.totalorder %v2223, %v240
        %vm2245 = vcmp.eq.s32.totalorder %v2223, %v241
        %vm2246 = vcmp.eq.s32.totalorder %v2223, %v242
        %vm2247 = vcmp.eq.s32.totalorder %v2223, %v243
        %vm2248 = vcmp.eq.s32.totalorder %v2223, %v244
        %vm2249 = vcmp.eq.s32.totalorder %v2226, %v229
        %vm2250 = vcmp.eq.s32.totalorder %v2226, %v230
        %vm2251 = vcmp.eq.s32.totalorder %v2226, %v231
        %vm2252 = vcmp.eq.s32.totalorder %v2226, %v232
        %vm2253 = vcmp.eq.s32.totalorder %v2226, %v233
        %vm2254 = vcmp.eq.s32.totalorder %v2226, %v234
        %vm2255 = vcmp.eq.s32.totalorder %v2226, %v235
        %vm2256 = vcmp.eq.s32.totalorder %v2226, %v236
        %vm2257 = vcmp.eq.s32.totalorder %v2226, %v237
        %vm2258 = vcmp.eq.s32.totalorder %v2226, %v238
        %vm2259 = vcmp.eq.s32.totalorder %v2226, %v239
        %vm2260 = vcmp.eq.s32.totalorder %v2226, %v240
        %vm2261 = vcmp.eq.s32.totalorder %v2226, %v241
        %vm2262 = vcmp.eq.s32.totalorder %v2226, %v242
        %vm2263 = vcmp.eq.s32.totalorder %v2226, %v243
        %vm2264 = vcmp.eq.s32.totalorder %v2226, %v244
        %vm2265 = vcmp.eq.s32.totalorder %v2229, %v229
        %vm2266 = vcmp.eq.s32.totalorder %v2229, %v230
        %vm2267 = vcmp.eq.s32.totalorder %v2229, %v231
        %vm2268 = vcmp.eq.s32.totalorder %v2229, %v232
        %vm2269 = vcmp.eq.s32.totalorder %v2229, %v233
        %vm2270 = vcmp.eq.s32.totalorder %v2229, %v234
        %vm2271 = vcmp.eq.s32.totalorder %v2229, %v235
        %vm2272 = vcmp.eq.s32.totalorder %v2229, %v236
        %vm2273 = vcmp.eq.s32.totalorder %v2229, %v237
        %vm2274 = vcmp.eq.s32.totalorder %v2229, %v238
        %vm2275 = vcmp.eq.s32.totalorder %v2229, %v239
        %vm2276 = vcmp.eq.s32.totalorder %v2229, %v240
        %vm2277 = vcmp.eq.s32.totalorder %v2229, %v241
        %vm2278 = vcmp.eq.s32.totalorder %v2229, %v242
        %vm2279 = vcmp.eq.s32.totalorder %v2229, %v243
        %vm2280 = vcmp.eq.s32.totalorder %v2229, %v244
        %vm2281 = vcmp.eq.s32.totalorder %v2232, %v229
        %vm2282 = vcmp.eq.s32.totalorder %v2232, %v230
        %vm2283 = vcmp.eq.s32.totalorder %v2232, %v231
        %vm2284 = vcmp.eq.s32.totalorder %v2232, %v232
        %vm2285 = vcmp.eq.s32.totalorder %v2232, %v233
        %vm2286 = vcmp.eq.s32.totalorder %v2232, %v234
        %vm2287 = vcmp.eq.s32.totalorder %v2232, %v235
        %vm2288 = vcmp.eq.s32.totalorder %v2232, %v236
        %vm2289 = vcmp.eq.s32.totalorder %v2232, %v237
        %vm2290 = vcmp.eq.s32.totalorder %v2232, %v238
        %vm2291 = vcmp.eq.s32.totalorder %v2232, %v239
        %vm2292 = vcmp.eq.s32.totalorder %v2232, %v240
        %vm2293 = vcmp.eq.s32.totalorder %v2232, %v241
        %vm2294 = vcmp.eq.s32.totalorder %v2232, %v242
        %vm2295 = vcmp.eq.s32.totalorder %v2232, %v243
        %vm2296 = vcmp.eq.s32.totalorder %v2232, %v244
        %v2297 = vsel %vm2233, 1, 0
        %v2298 = vsel %vm2234, 1, 0
        %v2299 = vsel %vm2235, 1, 0
        %v2300 = vsel %vm2236, 1, 0
        %v2301 = vsel %vm2237, 1, 0
        %v2302 = vsel %vm2238, 1, 0
        %v2303 = vsel %vm2239, 1, 0
        %v2304 = vsel %vm2240, 1, 0
        %v2305 = vsel %vm2241, 1, 0
        %v2306 = vsel %vm2242, 1, 0
        %v2307 = vsel %vm2243, 1, 0
        %v2308 = vsel %vm2244, 1, 0
        %v2309 = vsel %vm2245, 1, 0
        %v2310 = vsel %vm2246, 1, 0
        %v2311 = vsel %vm2247, 1, 0
        %v2312 = vsel %vm2248, 1, 0
        %v2313 = vsel %vm2249, 1, 0
        %v2314 = vsel %vm2250, 1, 0
        %v2315 = vsel %vm2251, 1, 0
        %v2316 = vsel %vm2252, 1, 0
        %v2317 = vsel %vm2253, 1, 0
        %v2318 = vsel %vm2254, 1, 0
        %v2319 = vsel %vm2255, 1, 0
        %v2320 = vsel %vm2256, 1, 0
        %v2321 = vsel %vm2257, 1, 0
        %v2322 = vsel %vm2258, 1, 0
        %v2323 = vsel %vm2259, 1, 0
        %v2324 = vsel %vm2260, 1, 0
        %v2325 = vsel %vm2261, 1, 0
        %v2326 = vsel %vm2262, 1, 0
        %v2327 = vsel %vm2263, 1, 0
        %v2328 = vsel %vm2264, 1, 0
        %v2329 = vsel %vm2265, 1, 0
        %v2330 = vsel %vm2266, 1, 0
        %v2331 = vsel %vm2267, 1, 0
        %v2332 = vsel %vm2268, 1, 0
        %v2333 = vsel %vm2269, 1, 0
        %v2334 = vsel %vm2270, 1, 0
        %v2335 = vsel %vm2271, 1, 0
        %v2336 = vsel %vm2272, 1, 0
        %v2337 = vsel %vm2273, 1, 0
        %v2338 = vsel %vm2274, 1, 0
        %v2339 = vsel %vm2275, 1, 0
        %v2340 = vsel %vm2276, 1, 0
        %v2341 = vsel %vm2277, 1, 0
        %v2342 = vsel %vm2278, 1, 0
        %v2343 = vsel %vm2279, 1, 0
        %v2344 = vsel %vm2280, 1, 0
        %v2345 = vsel %vm2281, 1, 0
        %v2346 = vsel %vm2282, 1, 0
        %v2347 = vsel %vm2283, 1, 0
        %v2348 = vsel %vm2284, 1, 0
        %v2349 = vsel %vm2285, 1, 0
        %v2350 = vsel %vm2286, 1, 0
        %v2351 = vsel %vm2287, 1, 0
        %v2352 = vsel %vm2288, 1, 0
        %v2353 = vsel %vm2289, 1, 0
        %v2354 = vsel %vm2290, 1, 0
        %v2355 = vsel %vm2291, 1, 0
        %v2356 = vsel %vm2292, 1, 0
        %v2357 = vsel %vm2293, 1, 0
        %v2358 = vsel %vm2294, 1, 0
        %v2359 = vsel %vm2295, 1, 0
        %v2360 = vsel %vm2296, 1, 0
        %v2361 = vadd.s32 %v2157, %v2297
        %v2362 = vadd.s32 %v2158, %v2298
        %v2363 = vadd.s32 %v2159, %v2299
        %v2364 = vadd.s32 %v2160, %v2300
        %v2365 = vadd.s32 %v2161, %v2301
        %v2366 = vadd.s32 %v2162, %v2302
        %v2367 = vadd.s32 %v2163, %v2303
        %v2368 = vadd.s32 %v2164, %v2304
        %v2369 = vadd.s32 %v2165, %v2305
        %v2370 = vadd.s32 %v2166, %v2306
        %v2371 = vadd.s32 %v2167, %v2307
        %v2372 = vadd.s32 %v2168, %v2308
        %v2373 = vadd.s32 %v2169, %v2309
        %v2374 = vadd.s32 %v2170, %v2310
        %v2375 = vadd.s32 %v2171, %v2311
        %v2376 = vadd.s32 %v2172, %v2312
        %v2377 = vadd.s32 %v2173, %v2313
        %v2378 = vadd.s32 %v2174, %v2314
        %v2379 = vadd.s32 %v2175, %v2315
        %v2380 = vadd.s32 %v2176, %v2316
        %v2381 = vadd.s32 %v2177, %v2317
        %v2382 = vadd.s32 %v2178, %v2318
        %v2383 = vadd.s32 %v2179, %v2319
        %v2384 = vadd.s32 %v2180, %v2320
        %v2385 = vadd.s32 %v2181, %v2321
        %v2386 = vadd.s32 %v2182, %v2322
        %v2387 = vadd.s32 %v2183, %v2323
        %v2388 = vadd.s32 %v2184, %v2324
        %v2389 = vadd.s32 %v2185, %v2325
        %v2390 = vadd.s32 %v2186, %v2326
        %v2391 = vadd.s32 %v2187, %v2327
        %v2392 = vadd.s32 %v2188, %v2328
        %v2393 = vadd.s32 %v2189, %v2329
        %v2394 = vadd.s32 %v2190, %v2330
        %v2395 = vadd.s32 %v2191, %v2331
        %v2396 = vadd.s32 %v2192, %v2332
        %v2397 = vadd.s32 %v2193, %v2333
        %v2398 = vadd.s32 %v2194, %v2334
        %v2399 = vadd.s32 %v2195, %v2335
        %v2400 = vadd.s32 %v2196, %v2336
        %v2401 = vadd.s32 %v2197, %v2337
        %v2402 = vadd.s32 %v2198, %v2338
        %v2403 = vadd.s32 %v2199, %v2339
        %v2404 = vadd.s32 %v2200, %v2340
        %v2405 = vadd.s32 %v2201, %v2341
        %v2406 = vadd.s32 %v2202, %v2342
        %v2407 = vadd.s32 %v2203, %v2343
        %v2408 = vadd.s32 %v2204, %v2344
        %v2409 = vadd.s32 %v2205, %v2345
        %v2410 = vadd.s32 %v2206, %v2346
        %v2411 = vadd.s32 %v2207, %v2347
        %v2412 = vadd.s32 %v2208, %v2348
        %v2413 = vadd.s32 %v2209, %v2349
        %v2414 = vadd.s32 %v2210, %v2350
        %v2415 = vadd.s32 %v2211, %v2351
        %v2416 = vadd.s32 %v2212, %v2352
        %v2417 = vadd.s32 %v2213, %v2353
        %v2418 = vadd.s32 %v2214, %v2354
        %v2419 = vadd.s32 %v2215, %v2355
        %v2420 = vadd.s32 %v2216, %v2356
        %v2421 = vadd.s32 %v2217, %v2357
        %v2422 = vadd.s32 %v2218, %v2358
        %v2423 = vadd.s32 %v2219, %v2359
        %v2424 = vadd.s32 %v2220, %v2360
        %2425 = vset.pattern.permute.xlu0 11
        %2426 = vperm.xlu0 %2425, %v224
        %v2427 = vpop.permute.xlu0 %2426
        %2428 = vset.pattern.permute.xlu0 11
        %2429 = vperm.xlu0 %2428, %v225
        %v2430 = vpop.permute.xlu0 %2429
        %2431 = vset.pattern.permute.xlu0 11
        %2432 = vperm.xlu0 %2431, %v226
        %v2433 = vpop.permute.xlu0 %2432
        %2434 = vset.pattern.permute.xlu0 11
        %2435 = vperm.xlu0 %2434, %v227
        %v2436 = vpop.permute.xlu0 %2435
        %vm2437 = vcmp.eq.s32.totalorder %v2427, %v229
        %vm2438 = vcmp.eq.s32.totalorder %v2427, %v230
        %vm2439 = vcmp.eq.s32.totalorder %v2427, %v231
        %vm2440 = vcmp.eq.s32.totalorder %v2427, %v232
        %vm2441 = vcmp.eq.s32.totalorder %v2427, %v233
        %vm2442 = vcmp.eq.s32.totalorder %v2427, %v234
        %vm2443 = vcmp.eq.s32.totalorder %v2427, %v235
        %vm2444 = vcmp.eq.s32.totalorder %v2427, %v236
        %vm2445 = vcmp.eq.s32.totalorder %v2427, %v237
        %vm2446 = vcmp.eq.s32.totalorder %v2427, %v238
        %vm2447 = vcmp.eq.s32.totalorder %v2427, %v239
        %vm2448 = vcmp.eq.s32.totalorder %v2427, %v240
        %vm2449 = vcmp.eq.s32.totalorder %v2427, %v241
        %vm2450 = vcmp.eq.s32.totalorder %v2427, %v242
        %vm2451 = vcmp.eq.s32.totalorder %v2427, %v243
        %vm2452 = vcmp.eq.s32.totalorder %v2427, %v244
        %vm2453 = vcmp.eq.s32.totalorder %v2430, %v229
        %vm2454 = vcmp.eq.s32.totalorder %v2430, %v230
        %vm2455 = vcmp.eq.s32.totalorder %v2430, %v231
        %vm2456 = vcmp.eq.s32.totalorder %v2430, %v232
        %vm2457 = vcmp.eq.s32.totalorder %v2430, %v233
        %vm2458 = vcmp.eq.s32.totalorder %v2430, %v234
        %vm2459 = vcmp.eq.s32.totalorder %v2430, %v235
        %vm2460 = vcmp.eq.s32.totalorder %v2430, %v236
        %vm2461 = vcmp.eq.s32.totalorder %v2430, %v237
        %vm2462 = vcmp.eq.s32.totalorder %v2430, %v238
        %vm2463 = vcmp.eq.s32.totalorder %v2430, %v239
        %vm2464 = vcmp.eq.s32.totalorder %v2430, %v240
        %vm2465 = vcmp.eq.s32.totalorder %v2430, %v241
        %vm2466 = vcmp.eq.s32.totalorder %v2430, %v242
        %vm2467 = vcmp.eq.s32.totalorder %v2430, %v243
        %vm2468 = vcmp.eq.s32.totalorder %v2430, %v244
        %vm2469 = vcmp.eq.s32.totalorder %v2433, %v229
        %vm2470 = vcmp.eq.s32.totalorder %v2433, %v230
        %vm2471 = vcmp.eq.s32.totalorder %v2433, %v231
        %vm2472 = vcmp.eq.s32.totalorder %v2433, %v232
        %vm2473 = vcmp.eq.s32.totalorder %v2433, %v233
        %vm2474 = vcmp.eq.s32.totalorder %v2433, %v234
        %vm2475 = vcmp.eq.s32.totalorder %v2433, %v235
        %vm2476 = vcmp.eq.s32.totalorder %v2433, %v236
        %vm2477 = vcmp.eq.s32.totalorder %v2433, %v237
        %vm2478 = vcmp.eq.s32.totalorder %v2433, %v238
        %vm2479 = vcmp.eq.s32.totalorder %v2433, %v239
        %vm2480 = vcmp.eq.s32.totalorder %v2433, %v240
        %vm2481 = vcmp.eq.s32.totalorder %v2433, %v241
        %vm2482 = vcmp.eq.s32.totalorder %v2433, %v242
        %vm2483 = vcmp.eq.s32.totalorder %v2433, %v243
        %vm2484 = vcmp.eq.s32.totalorder %v2433, %v244
        %vm2485 = vcmp.eq.s32.totalorder %v2436, %v229
        %vm2486 = vcmp.eq.s32.totalorder %v2436, %v230
        %vm2487 = vcmp.eq.s32.totalorder %v2436, %v231
        %vm2488 = vcmp.eq.s32.totalorder %v2436, %v232
        %vm2489 = vcmp.eq.s32.totalorder %v2436, %v233
        %vm2490 = vcmp.eq.s32.totalorder %v2436, %v234
        %vm2491 = vcmp.eq.s32.totalorder %v2436, %v235
        %vm2492 = vcmp.eq.s32.totalorder %v2436, %v236
        %vm2493 = vcmp.eq.s32.totalorder %v2436, %v237
        %vm2494 = vcmp.eq.s32.totalorder %v2436, %v238
        %vm2495 = vcmp.eq.s32.totalorder %v2436, %v239
        %vm2496 = vcmp.eq.s32.totalorder %v2436, %v240
        %vm2497 = vcmp.eq.s32.totalorder %v2436, %v241
        %vm2498 = vcmp.eq.s32.totalorder %v2436, %v242
        %vm2499 = vcmp.eq.s32.totalorder %v2436, %v243
        %vm2500 = vcmp.eq.s32.totalorder %v2436, %v244
        %v2501 = vsel %vm2437, 1, 0
        %v2502 = vsel %vm2438, 1, 0
        %v2503 = vsel %vm2439, 1, 0
        %v2504 = vsel %vm2440, 1, 0
        %v2505 = vsel %vm2441, 1, 0
        %v2506 = vsel %vm2442, 1, 0
        %v2507 = vsel %vm2443, 1, 0
        %v2508 = vsel %vm2444, 1, 0
        %v2509 = vsel %vm2445, 1, 0
        %v2510 = vsel %vm2446, 1, 0
        %v2511 = vsel %vm2447, 1, 0
        %v2512 = vsel %vm2448, 1, 0
        %v2513 = vsel %vm2449, 1, 0
        %v2514 = vsel %vm2450, 1, 0
        %v2515 = vsel %vm2451, 1, 0
        %v2516 = vsel %vm2452, 1, 0
        %v2517 = vsel %vm2453, 1, 0
        %v2518 = vsel %vm2454, 1, 0
        %v2519 = vsel %vm2455, 1, 0
        %v2520 = vsel %vm2456, 1, 0
        %v2521 = vsel %vm2457, 1, 0
        %v2522 = vsel %vm2458, 1, 0
        %v2523 = vsel %vm2459, 1, 0
        %v2524 = vsel %vm2460, 1, 0
        %v2525 = vsel %vm2461, 1, 0
        %v2526 = vsel %vm2462, 1, 0
        %v2527 = vsel %vm2463, 1, 0
        %v2528 = vsel %vm2464, 1, 0
        %v2529 = vsel %vm2465, 1, 0
        %v2530 = vsel %vm2466, 1, 0
        %v2531 = vsel %vm2467, 1, 0
        %v2532 = vsel %vm2468, 1, 0
        %v2533 = vsel %vm2469, 1, 0
        %v2534 = vsel %vm2470, 1, 0
        %v2535 = vsel %vm2471, 1, 0
        %v2536 = vsel %vm2472, 1, 0
        %v2537 = vsel %vm2473, 1, 0
        %v2538 = vsel %vm2474, 1, 0
        %v2539 = vsel %vm2475, 1, 0
        %v2540 = vsel %vm2476, 1, 0
        %v2541 = vsel %vm2477, 1, 0
        %v2542 = vsel %vm2478, 1, 0
        %v2543 = vsel %vm2479, 1, 0
        %v2544 = vsel %vm2480, 1, 0
        %v2545 = vsel %vm2481, 1, 0
        %v2546 = vsel %vm2482, 1, 0
        %v2547 = vsel %vm2483, 1, 0
        %v2548 = vsel %vm2484, 1, 0
        %v2549 = vsel %vm2485, 1, 0
        %v2550 = vsel %vm2486, 1, 0
        %v2551 = vsel %vm2487, 1, 0
        %v2552 = vsel %vm2488, 1, 0
        %v2553 = vsel %vm2489, 1, 0
        %v2554 = vsel %vm2490, 1, 0
        %v2555 = vsel %vm2491, 1, 0
        %v2556 = vsel %vm2492, 1, 0
        %v2557 = vsel %vm2493, 1, 0
        %v2558 = vsel %vm2494, 1, 0
        %v2559 = vsel %vm2495, 1, 0
        %v2560 = vsel %vm2496, 1, 0
        %v2561 = vsel %vm2497, 1, 0
        %v2562 = vsel %vm2498, 1, 0
        %v2563 = vsel %vm2499, 1, 0
        %v2564 = vsel %vm2500, 1, 0
        %v2565 = vadd.s32 %v2361, %v2501
        %v2566 = vadd.s32 %v2362, %v2502
        %v2567 = vadd.s32 %v2363, %v2503
        %v2568 = vadd.s32 %v2364, %v2504
        %v2569 = vadd.s32 %v2365, %v2505
        %v2570 = vadd.s32 %v2366, %v2506
        %v2571 = vadd.s32 %v2367, %v2507
        %v2572 = vadd.s32 %v2368, %v2508
        %v2573 = vadd.s32 %v2369, %v2509
        %v2574 = vadd.s32 %v2370, %v2510
        %v2575 = vadd.s32 %v2371, %v2511
        %v2576 = vadd.s32 %v2372, %v2512
        %v2577 = vadd.s32 %v2373, %v2513
        %v2578 = vadd.s32 %v2374, %v2514
        %v2579 = vadd.s32 %v2375, %v2515
        %v2580 = vadd.s32 %v2376, %v2516
        %v2581 = vadd.s32 %v2377, %v2517
        %v2582 = vadd.s32 %v2378, %v2518
        %v2583 = vadd.s32 %v2379, %v2519
        %v2584 = vadd.s32 %v2380, %v2520
        %v2585 = vadd.s32 %v2381, %v2521
        %v2586 = vadd.s32 %v2382, %v2522
        %v2587 = vadd.s32 %v2383, %v2523
        %v2588 = vadd.s32 %v2384, %v2524
        %v2589 = vadd.s32 %v2385, %v2525
        %v2590 = vadd.s32 %v2386, %v2526
        %v2591 = vadd.s32 %v2387, %v2527
        %v2592 = vadd.s32 %v2388, %v2528
        %v2593 = vadd.s32 %v2389, %v2529
        %v2594 = vadd.s32 %v2390, %v2530
        %v2595 = vadd.s32 %v2391, %v2531
        %v2596 = vadd.s32 %v2392, %v2532
        %v2597 = vadd.s32 %v2393, %v2533
        %v2598 = vadd.s32 %v2394, %v2534
        %v2599 = vadd.s32 %v2395, %v2535
        %v2600 = vadd.s32 %v2396, %v2536
        %v2601 = vadd.s32 %v2397, %v2537
        %v2602 = vadd.s32 %v2398, %v2538
        %v2603 = vadd.s32 %v2399, %v2539
        %v2604 = vadd.s32 %v2400, %v2540
        %v2605 = vadd.s32 %v2401, %v2541
        %v2606 = vadd.s32 %v2402, %v2542
        %v2607 = vadd.s32 %v2403, %v2543
        %v2608 = vadd.s32 %v2404, %v2544
        %v2609 = vadd.s32 %v2405, %v2545
        %v2610 = vadd.s32 %v2406, %v2546
        %v2611 = vadd.s32 %v2407, %v2547
        %v2612 = vadd.s32 %v2408, %v2548
        %v2613 = vadd.s32 %v2409, %v2549
        %v2614 = vadd.s32 %v2410, %v2550
        %v2615 = vadd.s32 %v2411, %v2551
        %v2616 = vadd.s32 %v2412, %v2552
        %v2617 = vadd.s32 %v2413, %v2553
        %v2618 = vadd.s32 %v2414, %v2554
        %v2619 = vadd.s32 %v2415, %v2555
        %v2620 = vadd.s32 %v2416, %v2556
        %v2621 = vadd.s32 %v2417, %v2557
        %v2622 = vadd.s32 %v2418, %v2558
        %v2623 = vadd.s32 %v2419, %v2559
        %v2624 = vadd.s32 %v2420, %v2560
        %v2625 = vadd.s32 %v2421, %v2561
        %v2626 = vadd.s32 %v2422, %v2562
        %v2627 = vadd.s32 %v2423, %v2563
        %v2628 = vadd.s32 %v2424, %v2564
        %2629 = vset.pattern.permute.xlu0 12
        %2630 = vperm.xlu0 %2629, %v224
        %v2631 = vpop.permute.xlu0 %2630
        %2632 = vset.pattern.permute.xlu0 12
        %2633 = vperm.xlu0 %2632, %v225
        %v2634 = vpop.permute.xlu0 %2633
        %2635 = vset.pattern.permute.xlu0 12
        %2636 = vperm.xlu0 %2635, %v226
        %v2637 = vpop.permute.xlu0 %2636
        %2638 = vset.pattern.permute.xlu0 12
        %2639 = vperm.xlu0 %2638, %v227
        %v2640 = vpop.permute.xlu0 %2639
        %vm2641 = vcmp.eq.s32.totalorder %v2631, %v229
        %vm2642 = vcmp.eq.s32.totalorder %v2631, %v230
        %vm2643 = vcmp.eq.s32.totalorder %v2631, %v231
        %vm2644 = vcmp.eq.s32.totalorder %v2631, %v232
        %vm2645 = vcmp.eq.s32.totalorder %v2631, %v233
        %vm2646 = vcmp.eq.s32.totalorder %v2631, %v234
        %vm2647 = vcmp.eq.s32.totalorder %v2631, %v235
        %vm2648 = vcmp.eq.s32.totalorder %v2631, %v236
        %vm2649 = vcmp.eq.s32.totalorder %v2631, %v237
        %vm2650 = vcmp.eq.s32.totalorder %v2631, %v238
        %vm2651 = vcmp.eq.s32.totalorder %v2631, %v239
        %vm2652 = vcmp.eq.s32.totalorder %v2631, %v240
        %vm2653 = vcmp.eq.s32.totalorder %v2631, %v241
        %vm2654 = vcmp.eq.s32.totalorder %v2631, %v242
        %vm2655 = vcmp.eq.s32.totalorder %v2631, %v243
        %vm2656 = vcmp.eq.s32.totalorder %v2631, %v244
        %vm2657 = vcmp.eq.s32.totalorder %v2634, %v229
        %vm2658 = vcmp.eq.s32.totalorder %v2634, %v230
        %vm2659 = vcmp.eq.s32.totalorder %v2634, %v231
        %vm2660 = vcmp.eq.s32.totalorder %v2634, %v232
        %vm2661 = vcmp.eq.s32.totalorder %v2634, %v233
        %vm2662 = vcmp.eq.s32.totalorder %v2634, %v234
        %vm2663 = vcmp.eq.s32.totalorder %v2634, %v235
        %vm2664 = vcmp.eq.s32.totalorder %v2634, %v236
        %vm2665 = vcmp.eq.s32.totalorder %v2634, %v237
        %vm2666 = vcmp.eq.s32.totalorder %v2634, %v238
        %vm2667 = vcmp.eq.s32.totalorder %v2634, %v239
        %vm2668 = vcmp.eq.s32.totalorder %v2634, %v240
        %vm2669 = vcmp.eq.s32.totalorder %v2634, %v241
        %vm2670 = vcmp.eq.s32.totalorder %v2634, %v242
        %vm2671 = vcmp.eq.s32.totalorder %v2634, %v243
        %vm2672 = vcmp.eq.s32.totalorder %v2634, %v244
        %vm2673 = vcmp.eq.s32.totalorder %v2637, %v229
        %vm2674 = vcmp.eq.s32.totalorder %v2637, %v230
        %vm2675 = vcmp.eq.s32.totalorder %v2637, %v231
        %vm2676 = vcmp.eq.s32.totalorder %v2637, %v232
        %vm2677 = vcmp.eq.s32.totalorder %v2637, %v233
        %vm2678 = vcmp.eq.s32.totalorder %v2637, %v234
        %vm2679 = vcmp.eq.s32.totalorder %v2637, %v235
        %vm2680 = vcmp.eq.s32.totalorder %v2637, %v236
        %vm2681 = vcmp.eq.s32.totalorder %v2637, %v237
        %vm2682 = vcmp.eq.s32.totalorder %v2637, %v238
        %vm2683 = vcmp.eq.s32.totalorder %v2637, %v239
        %vm2684 = vcmp.eq.s32.totalorder %v2637, %v240
        %vm2685 = vcmp.eq.s32.totalorder %v2637, %v241
        %vm2686 = vcmp.eq.s32.totalorder %v2637, %v242
        %vm2687 = vcmp.eq.s32.totalorder %v2637, %v243
        %vm2688 = vcmp.eq.s32.totalorder %v2637, %v244
        %vm2689 = vcmp.eq.s32.totalorder %v2640, %v229
        %vm2690 = vcmp.eq.s32.totalorder %v2640, %v230
        %vm2691 = vcmp.eq.s32.totalorder %v2640, %v231
        %vm2692 = vcmp.eq.s32.totalorder %v2640, %v232
        %vm2693 = vcmp.eq.s32.totalorder %v2640, %v233
        %vm2694 = vcmp.eq.s32.totalorder %v2640, %v234
        %vm2695 = vcmp.eq.s32.totalorder %v2640, %v235
        %vm2696 = vcmp.eq.s32.totalorder %v2640, %v236
        %vm2697 = vcmp.eq.s32.totalorder %v2640, %v237
        %vm2698 = vcmp.eq.s32.totalorder %v2640, %v238
        %vm2699 = vcmp.eq.s32.totalorder %v2640, %v239
        %vm2700 = vcmp.eq.s32.totalorder %v2640, %v240
        %vm2701 = vcmp.eq.s32.totalorder %v2640, %v241
        %vm2702 = vcmp.eq.s32.totalorder %v2640, %v242
        %vm2703 = vcmp.eq.s32.totalorder %v2640, %v243
        %vm2704 = vcmp.eq.s32.totalorder %v2640, %v244
        %v2705 = vsel %vm2641, 1, 0
        %v2706 = vsel %vm2642, 1, 0
        %v2707 = vsel %vm2643, 1, 0
        %v2708 = vsel %vm2644, 1, 0
        %v2709 = vsel %vm2645, 1, 0
        %v2710 = vsel %vm2646, 1, 0
        %v2711 = vsel %vm2647, 1, 0
        %v2712 = vsel %vm2648, 1, 0
        %v2713 = vsel %vm2649, 1, 0
        %v2714 = vsel %vm2650, 1, 0
        %v2715 = vsel %vm2651, 1, 0
        %v2716 = vsel %vm2652, 1, 0
        %v2717 = vsel %vm2653, 1, 0
        %v2718 = vsel %vm2654, 1, 0
        %v2719 = vsel %vm2655, 1, 0
        %v2720 = vsel %vm2656, 1, 0
        %v2721 = vsel %vm2657, 1, 0
        %v2722 = vsel %vm2658, 1, 0
        %v2723 = vsel %vm2659, 1, 0
        %v2724 = vsel %vm2660, 1, 0
        %v2725 = vsel %vm2661, 1, 0
        %v2726 = vsel %vm2662, 1, 0
        %v2727 = vsel %vm2663, 1, 0
        %v2728 = vsel %vm2664, 1, 0
        %v2729 = vsel %vm2665, 1, 0
        %v2730 = vsel %vm2666, 1, 0
        %v2731 = vsel %vm2667, 1, 0
        %v2732 = vsel %vm2668, 1, 0
        %v2733 = vsel %vm2669, 1, 0
        %v2734 = vsel %vm2670, 1, 0
        %v2735 = vsel %vm2671, 1, 0
        %v2736 = vsel %vm2672, 1, 0
        %v2737 = vsel %vm2673, 1, 0
        %v2738 = vsel %vm2674, 1, 0
        %v2739 = vsel %vm2675, 1, 0
        %v2740 = vsel %vm2676, 1, 0
        %v2741 = vsel %vm2677, 1, 0
        %v2742 = vsel %vm2678, 1, 0
        %v2743 = vsel %vm2679, 1, 0
        %v2744 = vsel %vm2680, 1, 0
        %v2745 = vsel %vm2681, 1, 0
        %v2746 = vsel %vm2682, 1, 0
        %v2747 = vsel %vm2683, 1, 0
        %v2748 = vsel %vm2684, 1, 0
        %v2749 = vsel %vm2685, 1, 0
        %v2750 = vsel %vm2686, 1, 0
        %v2751 = vsel %vm2687, 1, 0
        %v2752 = vsel %vm2688, 1, 0
        %v2753 = vsel %vm2689, 1, 0
        %v2754 = vsel %vm2690, 1, 0
        %v2755 = vsel %vm2691, 1, 0
        %v2756 = vsel %vm2692, 1, 0
        %v2757 = vsel %vm2693, 1, 0
        %v2758 = vsel %vm2694, 1, 0
        %v2759 = vsel %vm2695, 1, 0
        %v2760 = vsel %vm2696, 1, 0
        %v2761 = vsel %vm2697, 1, 0
        %v2762 = vsel %vm2698, 1, 0
        %v2763 = vsel %vm2699, 1, 0
        %v2764 = vsel %vm2700, 1, 0
        %v2765 = vsel %vm2701, 1, 0
        %v2766 = vsel %vm2702, 1, 0
        %v2767 = vsel %vm2703, 1, 0
        %v2768 = vsel %vm2704, 1, 0
        %v2769 = vadd.s32 %v2565, %v2705
        %v2770 = vadd.s32 %v2566, %v2706
        %v2771 = vadd.s32 %v2567, %v2707
        %v2772 = vadd.s32 %v2568, %v2708
        %v2773 = vadd.s32 %v2569, %v2709
        %v2774 = vadd.s32 %v2570, %v2710
        %v2775 = vadd.s32 %v2571, %v2711
        %v2776 = vadd.s32 %v2572, %v2712
        %v2777 = vadd.s32 %v2573, %v2713
        %v2778 = vadd.s32 %v2574, %v2714
        %v2779 = vadd.s32 %v2575, %v2715
        %v2780 = vadd.s32 %v2576, %v2716
        %v2781 = vadd.s32 %v2577, %v2717
        %v2782 = vadd.s32 %v2578, %v2718
        %v2783 = vadd.s32 %v2579, %v2719
        %v2784 = vadd.s32 %v2580, %v2720
        %v2785 = vadd.s32 %v2581, %v2721
        %v2786 = vadd.s32 %v2582, %v2722
        %v2787 = vadd.s32 %v2583, %v2723
        %v2788 = vadd.s32 %v2584, %v2724
        %v2789 = vadd.s32 %v2585, %v2725
        %v2790 = vadd.s32 %v2586, %v2726
        %v2791 = vadd.s32 %v2587, %v2727
        %v2792 = vadd.s32 %v2588, %v2728
        %v2793 = vadd.s32 %v2589, %v2729
        %v2794 = vadd.s32 %v2590, %v2730
        %v2795 = vadd.s32 %v2591, %v2731
        %v2796 = vadd.s32 %v2592, %v2732
        %v2797 = vadd.s32 %v2593, %v2733
        %v2798 = vadd.s32 %v2594, %v2734
        %v2799 = vadd.s32 %v2595, %v2735
        %v2800 = vadd.s32 %v2596, %v2736
        %v2801 = vadd.s32 %v2597, %v2737
        %v2802 = vadd.s32 %v2598, %v2738
        %v2803 = vadd.s32 %v2599, %v2739
        %v2804 = vadd.s32 %v2600, %v2740
        %v2805 = vadd.s32 %v2601, %v2741
        %v2806 = vadd.s32 %v2602, %v2742
        %v2807 = vadd.s32 %v2603, %v2743
        %v2808 = vadd.s32 %v2604, %v2744
        %v2809 = vadd.s32 %v2605, %v2745
        %v2810 = vadd.s32 %v2606, %v2746
        %v2811 = vadd.s32 %v2607, %v2747
        %v2812 = vadd.s32 %v2608, %v2748
        %v2813 = vadd.s32 %v2609, %v2749
        %v2814 = vadd.s32 %v2610, %v2750
        %v2815 = vadd.s32 %v2611, %v2751
        %v2816 = vadd.s32 %v2612, %v2752
        %v2817 = vadd.s32 %v2613, %v2753
        %v2818 = vadd.s32 %v2614, %v2754
        %v2819 = vadd.s32 %v2615, %v2755
        %v2820 = vadd.s32 %v2616, %v2756
        %v2821 = vadd.s32 %v2617, %v2757
        %v2822 = vadd.s32 %v2618, %v2758
        %v2823 = vadd.s32 %v2619, %v2759
        %v2824 = vadd.s32 %v2620, %v2760
        %v2825 = vadd.s32 %v2621, %v2761
        %v2826 = vadd.s32 %v2622, %v2762
        %v2827 = vadd.s32 %v2623, %v2763
        %v2828 = vadd.s32 %v2624, %v2764
        %v2829 = vadd.s32 %v2625, %v2765
        %v2830 = vadd.s32 %v2626, %v2766
        %v2831 = vadd.s32 %v2627, %v2767
        %v2832 = vadd.s32 %v2628, %v2768
        %2833 = vset.pattern.permute.xlu0 13
        %2834 = vperm.xlu0 %2833, %v224
        %v2835 = vpop.permute.xlu0 %2834
        %2836 = vset.pattern.permute.xlu0 13
        %2837 = vperm.xlu0 %2836, %v225
        %v2838 = vpop.permute.xlu0 %2837
        %2839 = vset.pattern.permute.xlu0 13
        %2840 = vperm.xlu0 %2839, %v226
        %v2841 = vpop.permute.xlu0 %2840
        %2842 = vset.pattern.permute.xlu0 13
        %2843 = vperm.xlu0 %2842, %v227
        %v2844 = vpop.permute.xlu0 %2843
        %vm2845 = vcmp.eq.s32.totalorder %v2835, %v229
        %vm2846 = vcmp.eq.s32.totalorder %v2835, %v230
        %vm2847 = vcmp.eq.s32.totalorder %v2835, %v231
        %vm2848 = vcmp.eq.s32.totalorder %v2835, %v232
        %vm2849 = vcmp.eq.s32.totalorder %v2835, %v233
        %vm2850 = vcmp.eq.s32.totalorder %v2835, %v234
        %vm2851 = vcmp.eq.s32.totalorder %v2835, %v235
        %vm2852 = vcmp.eq.s32.totalorder %v2835, %v236
        %vm2853 = vcmp.eq.s32.totalorder %v2835, %v237
        %vm2854 = vcmp.eq.s32.totalorder %v2835, %v238
        %vm2855 = vcmp.eq.s32.totalorder %v2835, %v239
        %vm2856 = vcmp.eq.s32.totalorder %v2835, %v240
        %vm2857 = vcmp.eq.s32.totalorder %v2835, %v241
        %vm2858 = vcmp.eq.s32.totalorder %v2835, %v242
        %vm2859 = vcmp.eq.s32.totalorder %v2835, %v243
        %vm2860 = vcmp.eq.s32.totalorder %v2835, %v244
        %vm2861 = vcmp.eq.s32.totalorder %v2838, %v229
        %vm2862 = vcmp.eq.s32.totalorder %v2838, %v230
        %vm2863 = vcmp.eq.s32.totalorder %v2838, %v231
        %vm2864 = vcmp.eq.s32.totalorder %v2838, %v232
        %vm2865 = vcmp.eq.s32.totalorder %v2838, %v233
        %vm2866 = vcmp.eq.s32.totalorder %v2838, %v234
        %vm2867 = vcmp.eq.s32.totalorder %v2838, %v235
        %vm2868 = vcmp.eq.s32.totalorder %v2838, %v236
        %vm2869 = vcmp.eq.s32.totalorder %v2838, %v237
        %vm2870 = vcmp.eq.s32.totalorder %v2838, %v238
        %vm2871 = vcmp.eq.s32.totalorder %v2838, %v239
        %vm2872 = vcmp.eq.s32.totalorder %v2838, %v240
        %vm2873 = vcmp.eq.s32.totalorder %v2838, %v241
        %vm2874 = vcmp.eq.s32.totalorder %v2838, %v242
        %vm2875 = vcmp.eq.s32.totalorder %v2838, %v243
        %vm2876 = vcmp.eq.s32.totalorder %v2838, %v244
        %vm2877 = vcmp.eq.s32.totalorder %v2841, %v229
        %vm2878 = vcmp.eq.s32.totalorder %v2841, %v230
        %vm2879 = vcmp.eq.s32.totalorder %v2841, %v231
        %vm2880 = vcmp.eq.s32.totalorder %v2841, %v232
        %vm2881 = vcmp.eq.s32.totalorder %v2841, %v233
        %vm2882 = vcmp.eq.s32.totalorder %v2841, %v234
        %vm2883 = vcmp.eq.s32.totalorder %v2841, %v235
        %vm2884 = vcmp.eq.s32.totalorder %v2841, %v236
        %vm2885 = vcmp.eq.s32.totalorder %v2841, %v237
        %vm2886 = vcmp.eq.s32.totalorder %v2841, %v238
        %vm2887 = vcmp.eq.s32.totalorder %v2841, %v239
        %vm2888 = vcmp.eq.s32.totalorder %v2841, %v240
        %vm2889 = vcmp.eq.s32.totalorder %v2841, %v241
        %vm2890 = vcmp.eq.s32.totalorder %v2841, %v242
        %vm2891 = vcmp.eq.s32.totalorder %v2841, %v243
        %vm2892 = vcmp.eq.s32.totalorder %v2841, %v244
        %vm2893 = vcmp.eq.s32.totalorder %v2844, %v229
        %vm2894 = vcmp.eq.s32.totalorder %v2844, %v230
        %vm2895 = vcmp.eq.s32.totalorder %v2844, %v231
        %vm2896 = vcmp.eq.s32.totalorder %v2844, %v232
        %vm2897 = vcmp.eq.s32.totalorder %v2844, %v233
        %vm2898 = vcmp.eq.s32.totalorder %v2844, %v234
        %vm2899 = vcmp.eq.s32.totalorder %v2844, %v235
        %vm2900 = vcmp.eq.s32.totalorder %v2844, %v236
        %vm2901 = vcmp.eq.s32.totalorder %v2844, %v237
        %vm2902 = vcmp.eq.s32.totalorder %v2844, %v238
        %vm2903 = vcmp.eq.s32.totalorder %v2844, %v239
        %vm2904 = vcmp.eq.s32.totalorder %v2844, %v240
        %vm2905 = vcmp.eq.s32.totalorder %v2844, %v241
        %vm2906 = vcmp.eq.s32.totalorder %v2844, %v242
        %vm2907 = vcmp.eq.s32.totalorder %v2844, %v243
        %vm2908 = vcmp.eq.s32.totalorder %v2844, %v244
        %v2909 = vsel %vm2845, 1, 0
        %v2910 = vsel %vm2846, 1, 0
        %v2911 = vsel %vm2847, 1, 0
        %v2912 = vsel %vm2848, 1, 0
        %v2913 = vsel %vm2849, 1, 0
        %v2914 = vsel %vm2850, 1, 0
        %v2915 = vsel %vm2851, 1, 0
        %v2916 = vsel %vm2852, 1, 0
        %v2917 = vsel %vm2853, 1, 0
        %v2918 = vsel %vm2854, 1, 0
        %v2919 = vsel %vm2855, 1, 0
        %v2920 = vsel %vm2856, 1, 0
        %v2921 = vsel %vm2857, 1, 0
        %v2922 = vsel %vm2858, 1, 0
        %v2923 = vsel %vm2859, 1, 0
        %v2924 = vsel %vm2860, 1, 0
        %v2925 = vsel %vm2861, 1, 0
        %v2926 = vsel %vm2862, 1, 0
        %v2927 = vsel %vm2863, 1, 0
        %v2928 = vsel %vm2864, 1, 0
        %v2929 = vsel %vm2865, 1, 0
        %v2930 = vsel %vm2866, 1, 0
        %v2931 = vsel %vm2867, 1, 0
        %v2932 = vsel %vm2868, 1, 0
        %v2933 = vsel %vm2869, 1, 0
        %v2934 = vsel %vm2870, 1, 0
        %v2935 = vsel %vm2871, 1, 0
        %v2936 = vsel %vm2872, 1, 0
        %v2937 = vsel %vm2873, 1, 0
        %v2938 = vsel %vm2874, 1, 0
        %v2939 = vsel %vm2875, 1, 0
        %v2940 = vsel %vm2876, 1, 0
        %v2941 = vsel %vm2877, 1, 0
        %v2942 = vsel %vm2878, 1, 0
        %v2943 = vsel %vm2879, 1, 0
        %v2944 = vsel %vm2880, 1, 0
        %v2945 = vsel %vm2881, 1, 0
        %v2946 = vsel %vm2882, 1, 0
        %v2947 = vsel %vm2883, 1, 0
        %v2948 = vsel %vm2884, 1, 0
        %v2949 = vsel %vm2885, 1, 0
        %v2950 = vsel %vm2886, 1, 0
        %v2951 = vsel %vm2887, 1, 0
        %v2952 = vsel %vm2888, 1, 0
        %v2953 = vsel %vm2889, 1, 0
        %v2954 = vsel %vm2890, 1, 0
        %v2955 = vsel %vm2891, 1, 0
        %v2956 = vsel %vm2892, 1, 0
        %v2957 = vsel %vm2893, 1, 0
        %v2958 = vsel %vm2894, 1, 0
        %v2959 = vsel %vm2895, 1, 0
        %v2960 = vsel %vm2896, 1, 0
        %v2961 = vsel %vm2897, 1, 0
        %v2962 = vsel %vm2898, 1, 0
        %v2963 = vsel %vm2899, 1, 0
        %v2964 = vsel %vm2900, 1, 0
        %v2965 = vsel %vm2901, 1, 0
        %v2966 = vsel %vm2902, 1, 0
        %v2967 = vsel %vm2903, 1, 0
        %v2968 = vsel %vm2904, 1, 0
        %v2969 = vsel %vm2905, 1, 0
        %v2970 = vsel %vm2906, 1, 0
        %v2971 = vsel %vm2907, 1, 0
        %v2972 = vsel %vm2908, 1, 0
        %v2973 = vadd.s32 %v2769, %v2909
        %v2974 = vadd.s32 %v2770, %v2910
        %v2975 = vadd.s32 %v2771, %v2911
        %v2976 = vadd.s32 %v2772, %v2912
        %v2977 = vadd.s32 %v2773, %v2913
        %v2978 = vadd.s32 %v2774, %v2914
        %v2979 = vadd.s32 %v2775, %v2915
        %v2980 = vadd.s32 %v2776, %v2916
        %v2981 = vadd.s32 %v2777, %v2917
        %v2982 = vadd.s32 %v2778, %v2918
        %v2983 = vadd.s32 %v2779, %v2919
        %v2984 = vadd.s32 %v2780, %v2920
        %v2985 = vadd.s32 %v2781, %v2921
        %v2986 = vadd.s32 %v2782, %v2922
        %v2987 = vadd.s32 %v2783, %v2923
        %v2988 = vadd.s32 %v2784, %v2924
        %v2989 = vadd.s32 %v2785, %v2925
        %v2990 = vadd.s32 %v2786, %v2926
        %v2991 = vadd.s32 %v2787, %v2927
        %v2992 = vadd.s32 %v2788, %v2928
        %v2993 = vadd.s32 %v2789, %v2929
        %v2994 = vadd.s32 %v2790, %v2930
        %v2995 = vadd.s32 %v2791, %v2931
        %v2996 = vadd.s32 %v2792, %v2932
        %v2997 = vadd.s32 %v2793, %v2933
        %v2998 = vadd.s32 %v2794, %v2934
        %v2999 = vadd.s32 %v2795, %v2935
        %v3000 = vadd.s32 %v2796, %v2936
        %v3001 = vadd.s32 %v2797, %v2937
        %v3002 = vadd.s32 %v2798, %v2938
        %v3003 = vadd.s32 %v2799, %v2939
        %v3004 = vadd.s32 %v2800, %v2940
        %v3005 = vadd.s32 %v2801, %v2941
        %v3006 = vadd.s32 %v2802, %v2942
        %v3007 = vadd.s32 %v2803, %v2943
        %v3008 = vadd.s32 %v2804, %v2944
        %v3009 = vadd.s32 %v2805, %v2945
        %v3010 = vadd.s32 %v2806, %v2946
        %v3011 = vadd.s32 %v2807, %v2947
        %v3012 = vadd.s32 %v2808, %v2948
        %v3013 = vadd.s32 %v2809, %v2949
        %v3014 = vadd.s32 %v2810, %v2950
        %v3015 = vadd.s32 %v2811, %v2951
        %v3016 = vadd.s32 %v2812, %v2952
        %v3017 = vadd.s32 %v2813, %v2953
        %v3018 = vadd.s32 %v2814, %v2954
        %v3019 = vadd.s32 %v2815, %v2955
        %v3020 = vadd.s32 %v2816, %v2956
        %v3021 = vadd.s32 %v2817, %v2957
        %v3022 = vadd.s32 %v2818, %v2958
        %v3023 = vadd.s32 %v2819, %v2959
        %v3024 = vadd.s32 %v2820, %v2960
        %v3025 = vadd.s32 %v2821, %v2961
        %v3026 = vadd.s32 %v2822, %v2962
        %v3027 = vadd.s32 %v2823, %v2963
        %v3028 = vadd.s32 %v2824, %v2964
        %v3029 = vadd.s32 %v2825, %v2965
        %v3030 = vadd.s32 %v2826, %v2966
        %v3031 = vadd.s32 %v2827, %v2967
        %v3032 = vadd.s32 %v2828, %v2968
        %v3033 = vadd.s32 %v2829, %v2969
        %v3034 = vadd.s32 %v2830, %v2970
        %v3035 = vadd.s32 %v2831, %v2971
        %v3036 = vadd.s32 %v2832, %v2972
        %3037 = vset.pattern.permute.xlu0 14
        %3038 = vperm.xlu0 %3037, %v224
        %v3039 = vpop.permute.xlu0 %3038
        %3040 = vset.pattern.permute.xlu0 14
        %3041 = vperm.xlu0 %3040, %v225
        %v3042 = vpop.permute.xlu0 %3041
        %3043 = vset.pattern.permute.xlu0 14
        %3044 = vperm.xlu0 %3043, %v226
        %v3045 = vpop.permute.xlu0 %3044
        %3046 = vset.pattern.permute.xlu0 14
        %3047 = vperm.xlu0 %3046, %v227
        %v3048 = vpop.permute.xlu0 %3047
        %vm3049 = vcmp.eq.s32.totalorder %v3039, %v229
        %vm3050 = vcmp.eq.s32.totalorder %v3039, %v230
        %vm3051 = vcmp.eq.s32.totalorder %v3039, %v231
        %vm3052 = vcmp.eq.s32.totalorder %v3039, %v232
        %vm3053 = vcmp.eq.s32.totalorder %v3039, %v233
        %vm3054 = vcmp.eq.s32.totalorder %v3039, %v234
        %vm3055 = vcmp.eq.s32.totalorder %v3039, %v235
        %vm3056 = vcmp.eq.s32.totalorder %v3039, %v236
        %vm3057 = vcmp.eq.s32.totalorder %v3039, %v237
        %vm3058 = vcmp.eq.s32.totalorder %v3039, %v238
        %vm3059 = vcmp.eq.s32.totalorder %v3039, %v239
        %vm3060 = vcmp.eq.s32.totalorder %v3039, %v240
        %vm3061 = vcmp.eq.s32.totalorder %v3039, %v241
        %vm3062 = vcmp.eq.s32.totalorder %v3039, %v242
        %vm3063 = vcmp.eq.s32.totalorder %v3039, %v243
        %vm3064 = vcmp.eq.s32.totalorder %v3039, %v244
        %vm3065 = vcmp.eq.s32.totalorder %v3042, %v229
        %vm3066 = vcmp.eq.s32.totalorder %v3042, %v230
        %vm3067 = vcmp.eq.s32.totalorder %v3042, %v231
        %vm3068 = vcmp.eq.s32.totalorder %v3042, %v232
        %vm3069 = vcmp.eq.s32.totalorder %v3042, %v233
        %vm3070 = vcmp.eq.s32.totalorder %v3042, %v234
        %vm3071 = vcmp.eq.s32.totalorder %v3042, %v235
        %vm3072 = vcmp.eq.s32.totalorder %v3042, %v236
        %vm3073 = vcmp.eq.s32.totalorder %v3042, %v237
        %vm3074 = vcmp.eq.s32.totalorder %v3042, %v238
        %vm3075 = vcmp.eq.s32.totalorder %v3042, %v239
        %vm3076 = vcmp.eq.s32.totalorder %v3042, %v240
        %vm3077 = vcmp.eq.s32.totalorder %v3042, %v241
        %vm3078 = vcmp.eq.s32.totalorder %v3042, %v242
        %vm3079 = vcmp.eq.s32.totalorder %v3042, %v243
        %vm3080 = vcmp.eq.s32.totalorder %v3042, %v244
        %vm3081 = vcmp.eq.s32.totalorder %v3045, %v229
        %vm3082 = vcmp.eq.s32.totalorder %v3045, %v230
        %vm3083 = vcmp.eq.s32.totalorder %v3045, %v231
        %vm3084 = vcmp.eq.s32.totalorder %v3045, %v232
        %vm3085 = vcmp.eq.s32.totalorder %v3045, %v233
        %vm3086 = vcmp.eq.s32.totalorder %v3045, %v234
        %vm3087 = vcmp.eq.s32.totalorder %v3045, %v235
        %vm3088 = vcmp.eq.s32.totalorder %v3045, %v236
        %vm3089 = vcmp.eq.s32.totalorder %v3045, %v237
        %vm3090 = vcmp.eq.s32.totalorder %v3045, %v238
        %vm3091 = vcmp.eq.s32.totalorder %v3045, %v239
        %vm3092 = vcmp.eq.s32.totalorder %v3045, %v240
        %vm3093 = vcmp.eq.s32.totalorder %v3045, %v241
        %vm3094 = vcmp.eq.s32.totalorder %v3045, %v242
        %vm3095 = vcmp.eq.s32.totalorder %v3045, %v243
        %vm3096 = vcmp.eq.s32.totalorder %v3045, %v244
        %vm3097 = vcmp.eq.s32.totalorder %v3048, %v229
        %vm3098 = vcmp.eq.s32.totalorder %v3048, %v230
        %vm3099 = vcmp.eq.s32.totalorder %v3048, %v231
        %vm3100 = vcmp.eq.s32.totalorder %v3048, %v232
        %vm3101 = vcmp.eq.s32.totalorder %v3048, %v233
        %vm3102 = vcmp.eq.s32.totalorder %v3048, %v234
        %vm3103 = vcmp.eq.s32.totalorder %v3048, %v235
        %vm3104 = vcmp.eq.s32.totalorder %v3048, %v236
        %vm3105 = vcmp.eq.s32.totalorder %v3048, %v237
        %vm3106 = vcmp.eq.s32.totalorder %v3048, %v238
        %vm3107 = vcmp.eq.s32.totalorder %v3048, %v239
        %vm3108 = vcmp.eq.s32.totalorder %v3048, %v240
        %vm3109 = vcmp.eq.s32.totalorder %v3048, %v241
        %vm3110 = vcmp.eq.s32.totalorder %v3048, %v242
        %vm3111 = vcmp.eq.s32.totalorder %v3048, %v243
        %vm3112 = vcmp.eq.s32.totalorder %v3048, %v244
        %v3113 = vsel %vm3049, 1, 0
        %v3114 = vsel %vm3050, 1, 0
        %v3115 = vsel %vm3051, 1, 0
        %v3116 = vsel %vm3052, 1, 0
        %v3117 = vsel %vm3053, 1, 0
        %v3118 = vsel %vm3054, 1, 0
        %v3119 = vsel %vm3055, 1, 0
        %v3120 = vsel %vm3056, 1, 0
        %v3121 = vsel %vm3057, 1, 0
        %v3122 = vsel %vm3058, 1, 0
        %v3123 = vsel %vm3059, 1, 0
        %v3124 = vsel %vm3060, 1, 0
        %v3125 = vsel %vm3061, 1, 0
        %v3126 = vsel %vm3062, 1, 0
        %v3127 = vsel %vm3063, 1, 0
        %v3128 = vsel %vm3064, 1, 0
        %v3129 = vsel %vm3065, 1, 0
        %v3130 = vsel %vm3066, 1, 0
        %v3131 = vsel %vm3067, 1, 0
        %v3132 = vsel %vm3068, 1, 0
        %v3133 = vsel %vm3069, 1, 0
        %v3134 = vsel %vm3070, 1, 0
        %v3135 = vsel %vm3071, 1, 0
        %v3136 = vsel %vm3072, 1, 0
        %v3137 = vsel %vm3073, 1, 0
        %v3138 = vsel %vm3074, 1, 0
        %v3139 = vsel %vm3075, 1, 0
        %v3140 = vsel %vm3076, 1, 0
        %v3141 = vsel %vm3077, 1, 0
        %v3142 = vsel %vm3078, 1, 0
        %v3143 = vsel %vm3079, 1, 0
        %v3144 = vsel %vm3080, 1, 0
        %v3145 = vsel %vm3081, 1, 0
        %v3146 = vsel %vm3082, 1, 0
        %v3147 = vsel %vm3083, 1, 0
        %v3148 = vsel %vm3084, 1, 0
        %v3149 = vsel %vm3085, 1, 0
        %v3150 = vsel %vm3086, 1, 0
        %v3151 = vsel %vm3087, 1, 0
        %v3152 = vsel %vm3088, 1, 0
        %v3153 = vsel %vm3089, 1, 0
        %v3154 = vsel %vm3090, 1, 0
        %v3155 = vsel %vm3091, 1, 0
        %v3156 = vsel %vm3092, 1, 0
        %v3157 = vsel %vm3093, 1, 0
        %v3158 = vsel %vm3094, 1, 0
        %v3159 = vsel %vm3095, 1, 0
        %v3160 = vsel %vm3096, 1, 0
        %v3161 = vsel %vm3097, 1, 0
        %v3162 = vsel %vm3098, 1, 0
        %v3163 = vsel %vm3099, 1, 0
        %v3164 = vsel %vm3100, 1, 0
        %v3165 = vsel %vm3101, 1, 0
        %v3166 = vsel %vm3102, 1, 0
        %v3167 = vsel %vm3103, 1, 0
        %v3168 = vsel %vm3104, 1, 0
        %v3169 = vsel %vm3105, 1, 0
        %v3170 = vsel %vm3106, 1, 0
        %v3171 = vsel %vm3107, 1, 0
        %v3172 = vsel %vm3108, 1, 0
        %v3173 = vsel %vm3109, 1, 0
        %v3174 = vsel %vm3110, 1, 0
        %v3175 = vsel %vm3111, 1, 0
        %v3176 = vsel %vm3112, 1, 0
        %v3177 = vadd.s32 %v2973, %v3113
        %v3178 = vadd.s32 %v2974, %v3114
        %v3179 = vadd.s32 %v2975, %v3115
        %v3180 = vadd.s32 %v2976, %v3116
        %v3181 = vadd.s32 %v2977, %v3117
        %v3182 = vadd.s32 %v2978, %v3118
        %v3183 = vadd.s32 %v2979, %v3119
        %v3184 = vadd.s32 %v2980, %v3120
        %v3185 = vadd.s32 %v2981, %v3121
        %v3186 = vadd.s32 %v2982, %v3122
        %v3187 = vadd.s32 %v2983, %v3123
        %v3188 = vadd.s32 %v2984, %v3124
        %v3189 = vadd.s32 %v2985, %v3125
        %v3190 = vadd.s32 %v2986, %v3126
        %v3191 = vadd.s32 %v2987, %v3127
        %v3192 = vadd.s32 %v2988, %v3128
        %v3193 = vadd.s32 %v2989, %v3129
        %v3194 = vadd.s32 %v2990, %v3130
        %v3195 = vadd.s32 %v2991, %v3131
        %v3196 = vadd.s32 %v2992, %v3132
        %v3197 = vadd.s32 %v2993, %v3133
        %v3198 = vadd.s32 %v2994, %v3134
        %v3199 = vadd.s32 %v2995, %v3135
        %v3200 = vadd.s32 %v2996, %v3136
        %v3201 = vadd.s32 %v2997, %v3137
        %v3202 = vadd.s32 %v2998, %v3138
        %v3203 = vadd.s32 %v2999, %v3139
        %v3204 = vadd.s32 %v3000, %v3140
        %v3205 = vadd.s32 %v3001, %v3141
        %v3206 = vadd.s32 %v3002, %v3142
        %v3207 = vadd.s32 %v3003, %v3143
        %v3208 = vadd.s32 %v3004, %v3144
        %v3209 = vadd.s32 %v3005, %v3145
        %v3210 = vadd.s32 %v3006, %v3146
        %v3211 = vadd.s32 %v3007, %v3147
        %v3212 = vadd.s32 %v3008, %v3148
        %v3213 = vadd.s32 %v3009, %v3149
        %v3214 = vadd.s32 %v3010, %v3150
        %v3215 = vadd.s32 %v3011, %v3151
        %v3216 = vadd.s32 %v3012, %v3152
        %v3217 = vadd.s32 %v3013, %v3153
        %v3218 = vadd.s32 %v3014, %v3154
        %v3219 = vadd.s32 %v3015, %v3155
        %v3220 = vadd.s32 %v3016, %v3156
        %v3221 = vadd.s32 %v3017, %v3157
        %v3222 = vadd.s32 %v3018, %v3158
        %v3223 = vadd.s32 %v3019, %v3159
        %v3224 = vadd.s32 %v3020, %v3160
        %v3225 = vadd.s32 %v3021, %v3161
        %v3226 = vadd.s32 %v3022, %v3162
        %v3227 = vadd.s32 %v3023, %v3163
        %v3228 = vadd.s32 %v3024, %v3164
        %v3229 = vadd.s32 %v3025, %v3165
        %v3230 = vadd.s32 %v3026, %v3166
        %v3231 = vadd.s32 %v3027, %v3167
        %v3232 = vadd.s32 %v3028, %v3168
        %v3233 = vadd.s32 %v3029, %v3169
        %v3234 = vadd.s32 %v3030, %v3170
        %v3235 = vadd.s32 %v3031, %v3171
        %v3236 = vadd.s32 %v3032, %v3172
        %v3237 = vadd.s32 %v3033, %v3173
        %v3238 = vadd.s32 %v3034, %v3174
        %v3239 = vadd.s32 %v3035, %v3175
        %v3240 = vadd.s32 %v3036, %v3176
        %3241 = vset.pattern.permute.xlu0 15
        %3242 = vperm.xlu0 %3241, %v224
        %v3243 = vpop.permute.xlu0 %3242
        %3244 = vset.pattern.permute.xlu0 15
        %3245 = vperm.xlu0 %3244, %v225
        %v3246 = vpop.permute.xlu0 %3245
        %3247 = vset.pattern.permute.xlu0 15
        %3248 = vperm.xlu0 %3247, %v226
        %v3249 = vpop.permute.xlu0 %3248
        %3250 = vset.pattern.permute.xlu0 15
        %3251 = vperm.xlu0 %3250, %v227
        %v3252 = vpop.permute.xlu0 %3251
        %vm3253 = vcmp.eq.s32.totalorder %v3243, %v229
        %vm3254 = vcmp.eq.s32.totalorder %v3243, %v230
        %vm3255 = vcmp.eq.s32.totalorder %v3243, %v231
        %vm3256 = vcmp.eq.s32.totalorder %v3243, %v232
        %vm3257 = vcmp.eq.s32.totalorder %v3243, %v233
        %vm3258 = vcmp.eq.s32.totalorder %v3243, %v234
        %vm3259 = vcmp.eq.s32.totalorder %v3243, %v235
        %vm3260 = vcmp.eq.s32.totalorder %v3243, %v236
        %vm3261 = vcmp.eq.s32.totalorder %v3243, %v237
        %vm3262 = vcmp.eq.s32.totalorder %v3243, %v238
        %vm3263 = vcmp.eq.s32.totalorder %v3243, %v239
        %vm3264 = vcmp.eq.s32.totalorder %v3243, %v240
        %vm3265 = vcmp.eq.s32.totalorder %v3243, %v241
        %vm3266 = vcmp.eq.s32.totalorder %v3243, %v242
        %vm3267 = vcmp.eq.s32.totalorder %v3243, %v243
        %vm3268 = vcmp.eq.s32.totalorder %v3243, %v244
        %vm3269 = vcmp.eq.s32.totalorder %v3246, %v229
        %vm3270 = vcmp.eq.s32.totalorder %v3246, %v230
        %vm3271 = vcmp.eq.s32.totalorder %v3246, %v231
        %vm3272 = vcmp.eq.s32.totalorder %v3246, %v232
        %vm3273 = vcmp.eq.s32.totalorder %v3246, %v233
        %vm3274 = vcmp.eq.s32.totalorder %v3246, %v234
        %vm3275 = vcmp.eq.s32.totalorder %v3246, %v235
        %vm3276 = vcmp.eq.s32.totalorder %v3246, %v236
        %vm3277 = vcmp.eq.s32.totalorder %v3246, %v237
        %vm3278 = vcmp.eq.s32.totalorder %v3246, %v238
        %vm3279 = vcmp.eq.s32.totalorder %v3246, %v239
        %vm3280 = vcmp.eq.s32.totalorder %v3246, %v240
        %vm3281 = vcmp.eq.s32.totalorder %v3246, %v241
        %vm3282 = vcmp.eq.s32.totalorder %v3246, %v242
        %vm3283 = vcmp.eq.s32.totalorder %v3246, %v243
        %vm3284 = vcmp.eq.s32.totalorder %v3246, %v244
        %vm3285 = vcmp.eq.s32.totalorder %v3249, %v229
        %vm3286 = vcmp.eq.s32.totalorder %v3249, %v230
        %vm3287 = vcmp.eq.s32.totalorder %v3249, %v231
        %vm3288 = vcmp.eq.s32.totalorder %v3249, %v232
        %vm3289 = vcmp.eq.s32.totalorder %v3249, %v233
        %vm3290 = vcmp.eq.s32.totalorder %v3249, %v234
        %vm3291 = vcmp.eq.s32.totalorder %v3249, %v235
        %vm3292 = vcmp.eq.s32.totalorder %v3249, %v236
        %vm3293 = vcmp.eq.s32.totalorder %v3249, %v237
        %vm3294 = vcmp.eq.s32.totalorder %v3249, %v238
        %vm3295 = vcmp.eq.s32.totalorder %v3249, %v239
        %vm3296 = vcmp.eq.s32.totalorder %v3249, %v240
        %vm3297 = vcmp.eq.s32.totalorder %v3249, %v241
        %vm3298 = vcmp.eq.s32.totalorder %v3249, %v242
        %vm3299 = vcmp.eq.s32.totalorder %v3249, %v243
        %vm3300 = vcmp.eq.s32.totalorder %v3249, %v244
        %vm3301 = vcmp.eq.s32.totalorder %v3252, %v229
        %vm3302 = vcmp.eq.s32.totalorder %v3252, %v230
        %vm3303 = vcmp.eq.s32.totalorder %v3252, %v231
        %vm3304 = vcmp.eq.s32.totalorder %v3252, %v232
        %vm3305 = vcmp.eq.s32.totalorder %v3252, %v233
        %vm3306 = vcmp.eq.s32.totalorder %v3252, %v234
        %vm3307 = vcmp.eq.s32.totalorder %v3252, %v235
        %vm3308 = vcmp.eq.s32.totalorder %v3252, %v236
        %vm3309 = vcmp.eq.s32.totalorder %v3252, %v237
        %vm3310 = vcmp.eq.s32.totalorder %v3252, %v238
        %vm3311 = vcmp.eq.s32.totalorder %v3252, %v239
        %vm3312 = vcmp.eq.s32.totalorder %v3252, %v240
        %vm3313 = vcmp.eq.s32.totalorder %v3252, %v241
        %vm3314 = vcmp.eq.s32.totalorder %v3252, %v242
        %vm3315 = vcmp.eq.s32.totalorder %v3252, %v243
        %vm3316 = vcmp.eq.s32.totalorder %v3252, %v244
        %v3317 = vsel %vm3253, 1, 0
        %v3318 = vsel %vm3254, 1, 0
        %v3319 = vsel %vm3255, 1, 0
        %v3320 = vsel %vm3256, 1, 0
        %v3321 = vsel %vm3257, 1, 0
        %v3322 = vsel %vm3258, 1, 0
        %v3323 = vsel %vm3259, 1, 0
        %v3324 = vsel %vm3260, 1, 0
        %v3325 = vsel %vm3261, 1, 0
        %v3326 = vsel %vm3262, 1, 0
        %v3327 = vsel %vm3263, 1, 0
        %v3328 = vsel %vm3264, 1, 0
        %v3329 = vsel %vm3265, 1, 0
        %v3330 = vsel %vm3266, 1, 0
        %v3331 = vsel %vm3267, 1, 0
        %v3332 = vsel %vm3268, 1, 0
        %v3333 = vsel %vm3269, 1, 0
        %v3334 = vsel %vm3270, 1, 0
        %v3335 = vsel %vm3271, 1, 0
        %v3336 = vsel %vm3272, 1, 0
        %v3337 = vsel %vm3273, 1, 0
        %v3338 = vsel %vm3274, 1, 0
        %v3339 = vsel %vm3275, 1, 0
        %v3340 = vsel %vm3276, 1, 0
        %v3341 = vsel %vm3277, 1, 0
        %v3342 = vsel %vm3278, 1, 0
        %v3343 = vsel %vm3279, 1, 0
        %v3344 = vsel %vm3280, 1, 0
        %v3345 = vsel %vm3281, 1, 0
        %v3346 = vsel %vm3282, 1, 0
        %v3347 = vsel %vm3283, 1, 0
        %v3348 = vsel %vm3284, 1, 0
        %v3349 = vsel %vm3285, 1, 0
        %v3350 = vsel %vm3286, 1, 0
        %v3351 = vsel %vm3287, 1, 0
        %v3352 = vsel %vm3288, 1, 0
        %v3353 = vsel %vm3289, 1, 0
        %v3354 = vsel %vm3290, 1, 0
        %v3355 = vsel %vm3291, 1, 0
        %v3356 = vsel %vm3292, 1, 0
        %v3357 = vsel %vm3293, 1, 0
        %v3358 = vsel %vm3294, 1, 0
        %v3359 = vsel %vm3295, 1, 0
        %v3360 = vsel %vm3296, 1, 0
        %v3361 = vsel %vm3297, 1, 0
        %v3362 = vsel %vm3298, 1, 0
        %v3363 = vsel %vm3299, 1, 0
        %v3364 = vsel %vm3300, 1, 0
        %v3365 = vsel %vm3301, 1, 0
        %v3366 = vsel %vm3302, 1, 0
        %v3367 = vsel %vm3303, 1, 0
        %v3368 = vsel %vm3304, 1, 0
        %v3369 = vsel %vm3305, 1, 0
        %v3370 = vsel %vm3306, 1, 0
        %v3371 = vsel %vm3307, 1, 0
        %v3372 = vsel %vm3308, 1, 0
        %v3373 = vsel %vm3309, 1, 0
        %v3374 = vsel %vm3310, 1, 0
        %v3375 = vsel %vm3311, 1, 0
        %v3376 = vsel %vm3312, 1, 0
        %v3377 = vsel %vm3313, 1, 0
        %v3378 = vsel %vm3314, 1, 0
        %v3379 = vsel %vm3315, 1, 0
        %v3380 = vsel %vm3316, 1, 0
        %v3381 = vadd.s32 %v3177, %v3317
        %v3382 = vadd.s32 %v3178, %v3318
        %v3383 = vadd.s32 %v3179, %v3319
        %v3384 = vadd.s32 %v3180, %v3320
        %v3385 = vadd.s32 %v3181, %v3321
        %v3386 = vadd.s32 %v3182, %v3322
        %v3387 = vadd.s32 %v3183, %v3323
        %v3388 = vadd.s32 %v3184, %v3324
        %v3389 = vadd.s32 %v3185, %v3325
        %v3390 = vadd.s32 %v3186, %v3326
        %v3391 = vadd.s32 %v3187, %v3327
        %v3392 = vadd.s32 %v3188, %v3328
        %v3393 = vadd.s32 %v3189, %v3329
        %v3394 = vadd.s32 %v3190, %v3330
        %v3395 = vadd.s32 %v3191, %v3331
        %v3396 = vadd.s32 %v3192, %v3332
        %v3397 = vadd.s32 %v3193, %v3333
        %v3398 = vadd.s32 %v3194, %v3334
        %v3399 = vadd.s32 %v3195, %v3335
        %v3400 = vadd.s32 %v3196, %v3336
        %v3401 = vadd.s32 %v3197, %v3337
        %v3402 = vadd.s32 %v3198, %v3338
        %v3403 = vadd.s32 %v3199, %v3339
        %v3404 = vadd.s32 %v3200, %v3340
        %v3405 = vadd.s32 %v3201, %v3341
        %v3406 = vadd.s32 %v3202, %v3342
        %v3407 = vadd.s32 %v3203, %v3343
        %v3408 = vadd.s32 %v3204, %v3344
        %v3409 = vadd.s32 %v3205, %v3345
        %v3410 = vadd.s32 %v3206, %v3346
        %v3411 = vadd.s32 %v3207, %v3347
        %v3412 = vadd.s32 %v3208, %v3348
        %v3413 = vadd.s32 %v3209, %v3349
        %v3414 = vadd.s32 %v3210, %v3350
        %v3415 = vadd.s32 %v3211, %v3351
        %v3416 = vadd.s32 %v3212, %v3352
        %v3417 = vadd.s32 %v3213, %v3353
        %v3418 = vadd.s32 %v3214, %v3354
        %v3419 = vadd.s32 %v3215, %v3355
        %v3420 = vadd.s32 %v3216, %v3356
        %v3421 = vadd.s32 %v3217, %v3357
        %v3422 = vadd.s32 %v3218, %v3358
        %v3423 = vadd.s32 %v3219, %v3359
        %v3424 = vadd.s32 %v3220, %v3360
        %v3425 = vadd.s32 %v3221, %v3361
        %v3426 = vadd.s32 %v3222, %v3362
        %v3427 = vadd.s32 %v3223, %v3363
        %v3428 = vadd.s32 %v3224, %v3364
        %v3429 = vadd.s32 %v3225, %v3365
        %v3430 = vadd.s32 %v3226, %v3366
        %v3431 = vadd.s32 %v3227, %v3367
        %v3432 = vadd.s32 %v3228, %v3368
        %v3433 = vadd.s32 %v3229, %v3369
        %v3434 = vadd.s32 %v3230, %v3370
        %v3435 = vadd.s32 %v3231, %v3371
        %v3436 = vadd.s32 %v3232, %v3372
        %v3437 = vadd.s32 %v3233, %v3373
        %v3438 = vadd.s32 %v3234, %v3374
        %v3439 = vadd.s32 %v3235, %v3375
        %v3440 = vadd.s32 %v3236, %v3376
        %v3441 = vadd.s32 %v3237, %v3377
        %v3442 = vadd.s32 %v3238, %v3378
        %v3443 = vadd.s32 %v3239, %v3379
        %v3444 = vadd.s32 %v3240, %v3380
        %v3445 = vld [vmem:[%s201] sm:$0xff]
        %v3446 = vld [vmem:[%s201 + $0x8] sm:$0xff]
        %v3447 = vld [vmem:[%s201 + $0x10] sm:$0xff]
        %v3448 = vld [vmem:[%s201 + $0x18] sm:$0xff]
        %v3449 = vcvt.s32.f32 %v3381
        %v3450 = vcvt.s32.f32 %v3382
        %v3451 = vcvt.s32.f32 %v3383
        %v3452 = vcvt.s32.f32 %v3384
        %v3453 = vcvt.s32.f32 %v3385
        %v3454 = vcvt.s32.f32 %v3386
        %v3455 = vcvt.s32.f32 %v3387
        %v3456 = vcvt.s32.f32 %v3388
        %v3457 = vcvt.s32.f32 %v3389
        %v3458 = vcvt.s32.f32 %v3390
        %v3459 = vcvt.s32.f32 %v3391
        %v3460 = vcvt.s32.f32 %v3392
        %v3461 = vcvt.s32.f32 %v3393
        %v3462 = vcvt.s32.f32 %v3394
        %v3463 = vcvt.s32.f32 %v3395
        %v3464 = vcvt.s32.f32 %v3396
        %v3465 = vcvt.s32.f32 %v3397
        %v3466 = vcvt.s32.f32 %v3398
        %v3467 = vcvt.s32.f32 %v3399
        %v3468 = vcvt.s32.f32 %v3400
        %v3469 = vcvt.s32.f32 %v3401
        %v3470 = vcvt.s32.f32 %v3402
        %v3471 = vcvt.s32.f32 %v3403
        %v3472 = vcvt.s32.f32 %v3404
        %v3473 = vcvt.s32.f32 %v3405
        %v3474 = vcvt.s32.f32 %v3406
        %v3475 = vcvt.s32.f32 %v3407
        %v3476 = vcvt.s32.f32 %v3408
        %v3477 = vcvt.s32.f32 %v3409
        %v3478 = vcvt.s32.f32 %v3410
        %v3479 = vcvt.s32.f32 %v3411
        %v3480 = vcvt.s32.f32 %v3412
        %v3481 = vcvt.s32.f32 %v3413
        %v3482 = vcvt.s32.f32 %v3414
        %v3483 = vcvt.s32.f32 %v3415
        %v3484 = vcvt.s32.f32 %v3416
        %v3485 = vcvt.s32.f32 %v3417
        %v3486 = vcvt.s32.f32 %v3418
        %v3487 = vcvt.s32.f32 %v3419
        %v3488 = vcvt.s32.f32 %v3420
        %v3489 = vcvt.s32.f32 %v3421
        %v3490 = vcvt.s32.f32 %v3422
        %v3491 = vcvt.s32.f32 %v3423
        %v3492 = vcvt.s32.f32 %v3424
        %v3493 = vcvt.s32.f32 %v3425
        %v3494 = vcvt.s32.f32 %v3426
        %v3495 = vcvt.s32.f32 %v3427
        %v3496 = vcvt.s32.f32 %v3428
        %v3497 = vcvt.s32.f32 %v3429
        %v3498 = vcvt.s32.f32 %v3430
        %v3499 = vcvt.s32.f32 %v3431
        %v3500 = vcvt.s32.f32 %v3432
        %v3501 = vcvt.s32.f32 %v3433
        %v3502 = vcvt.s32.f32 %v3434
        %v3503 = vcvt.s32.f32 %v3435
        %v3504 = vcvt.s32.f32 %v3436
        %v3505 = vcvt.s32.f32 %v3437
        %v3506 = vcvt.s32.f32 %v3438
        %v3507 = vcvt.s32.f32 %v3439
        %v3508 = vcvt.s32.f32 %v3440
        %v3509 = vcvt.s32.f32 %v3441
        %v3510 = vcvt.s32.f32 %v3442
        %v3511 = vcvt.s32.f32 %v3443
        %v3512 = vcvt.s32.f32 %v3444
        %v3513 = vld [vmem:[#allocation2] sm:$0xff]
        %v3514 = vld [vmem:[#allocation2 + $0x8] sm:$0xff]
        %v3515 = vld [vmem:[#allocation2 + $0x10] sm:$0xff]
        %v3516 = vld [vmem:[#allocation2 + $0x18] sm:$0xff]
        %v3517 = vld [vmem:[#allocation2 + $0x20] sm:$0xff]
        %v3518 = vld [vmem:[#allocation2 + $0x28] sm:$0xff]
        %v3519 = vld [vmem:[#allocation2 + $0x30] sm:$0xff]
        %v3520 = vld [vmem:[#allocation2 + $0x38] sm:$0xff]
        %v3521 = vld [vmem:[#allocation2 + $0x40] sm:$0xff]
        %v3522 = vld [vmem:[#allocation2 + $0x48] sm:$0xff]
        %v3523 = vld [vmem:[#allocation2 + $0x50] sm:$0xff]
        %v3524 = vld [vmem:[#allocation2 + $0x58] sm:$0xff]
        %v3525 = vld [vmem:[#allocation2 + $0x60] sm:$0xff]
        %v3526 = vld [vmem:[#allocation2 + $0x68] sm:$0xff]
        %v3527 = vld [vmem:[#allocation2 + $0x70] sm:$0xff]
        %v3528 = vld [vmem:[#allocation2 + $0x78] sm:$0xff]
        %v3529 = vld [vmem:[#allocation2 + $0x80] sm:$0xff]
        %v3530 = vld [vmem:[#allocation2 + $0x88] sm:$0xff]
        %v3531 = vld [vmem:[#allocation2 + $0x90] sm:$0xff]
        %v3532 = vld [vmem:[#allocation2 + $0x98] sm:$0xff]
        %v3533 = vld [vmem:[#allocation2 + $0xa0] sm:$0xff]
        %v3534 = vld [vmem:[#allocation2 + $0xa8] sm:$0xff]
        %v3535 = vld [vmem:[#allocation2 + $0xb0] sm:$0xff]
        %v3536 = vld [vmem:[#allocation2 + $0xb8] sm:$0xff]
        %v3537 = vld [vmem:[#allocation2 + $0xc0] sm:$0xff]
        %v3538 = vld [vmem:[#allocation2 + $0xc8] sm:$0xff]
        %v3539 = vld [vmem:[#allocation2 + $0xd0] sm:$0xff]
        %v3540 = vld [vmem:[#allocation2 + $0xd8] sm:$0xff]
        %v3541 = vld [vmem:[#allocation2 + $0xe0] sm:$0xff]
        %v3542 = vld [vmem:[#allocation2 + $0xe8] sm:$0xff]
        %v3543 = vld [vmem:[#allocation2 + $0xf0] sm:$0xff]
        %v3544 = vld [vmem:[#allocation2 + $0xf8] sm:$0xff]
        %v3545 = vld [vmem:[#allocation2 + $0x100] sm:$0xff]
        %v3546 = vld [vmem:[#allocation2 + $0x108] sm:$0xff]
        %v3547 = vld [vmem:[#allocation2 + $0x110] sm:$0xff]
        %v3548 = vld [vmem:[#allocation2 + $0x118] sm:$0xff]
        %v3549 = vld [vmem:[#allocation2 + $0x120] sm:$0xff]
        %v3550 = vld [vmem:[#allocation2 + $0x128] sm:$0xff]
        %v3551 = vld [vmem:[#allocation2 + $0x130] sm:$0xff]
        %v3552 = vld [vmem:[#allocation2 + $0x138] sm:$0xff]
        %v3553 = vld [vmem:[#allocation2 + $0x140] sm:$0xff]
        %v3554 = vld [vmem:[#allocation2 + $0x148] sm:$0xff]
        %v3555 = vld [vmem:[#allocation2 + $0x150] sm:$0xff]
        %v3556 = vld [vmem:[#allocation2 + $0x158] sm:$0xff]
        %v3557 = vld [vmem:[#allocation2 + $0x160] sm:$0xff]
        %v3558 = vld [vmem:[#allocation2 + $0x168] sm:$0xff]
        %v3559 = vld [vmem:[#allocation2 + $0x170] sm:$0xff]
        %v3560 = vld [vmem:[#allocation2 + $0x178] sm:$0xff]
        %v3561 = vld [vmem:[#allocation2 + $0x180] sm:$0xff]
        %v3562 = vld [vmem:[#allocation2 + $0x188] sm:$0xff]
        %v3563 = vld [vmem:[#allocation2 + $0x190] sm:$0xff]
        %v3564 = vld [vmem:[#allocation2 + $0x198] sm:$0xff]
        %v3565 = vld [vmem:[#allocation2 + $0x1a0] sm:$0xff]
        %v3566 = vld [vmem:[#allocation2 + $0x1a8] sm:$0xff]
        %v3567 = vld [vmem:[#allocation2 + $0x1b0] sm:$0xff]
        %v3568 = vld [vmem:[#allocation2 + $0x1b8] sm:$0xff]
        %v3569 = vld [vmem:[#allocation2 + $0x1c0] sm:$0xff]
        %v3570 = vld [vmem:[#allocation2 + $0x1c8] sm:$0xff]
        %v3571 = vld [vmem:[#allocation2 + $0x1d0] sm:$0xff]
        %v3572 = vld [vmem:[#allocation2 + $0x1d8] sm:$0xff]
        %v3573 = vld [vmem:[#allocation2 + $0x1e0] sm:$0xff]
        %v3574 = vld [vmem:[#allocation2 + $0x1e8] sm:$0xff]
        %v3575 = vld [vmem:[#allocation2 + $0x1f0] sm:$0xff]
        %v3576 = vld [vmem:[#allocation2 + $0x1f8] sm:$0xff]
        %v3577 = vld [vmem:[#allocation2 + $0x200] sm:$0xff]
        %v3578 = vld [vmem:[#allocation2 + $0x208] sm:$0xff]
        %v3579 = vld [vmem:[#allocation2 + $0x210] sm:$0xff]
        %v3580 = vld [vmem:[#allocation2 + $0x218] sm:$0xff]
        %v3581 = vld [vmem:[#allocation2 + $0x220] sm:$0xff]
        %v3582 = vld [vmem:[#allocation2 + $0x228] sm:$0xff]
        %v3583 = vld [vmem:[#allocation2 + $0x230] sm:$0xff]
        %v3584 = vld [vmem:[#allocation2 + $0x238] sm:$0xff]
        %v3585 = vld [vmem:[#allocation2 + $0x240] sm:$0xff]
        %v3586 = vld [vmem:[#allocation2 + $0x248] sm:$0xff]
        %v3587 = vld [vmem:[#allocation2 + $0x250] sm:$0xff]
        %v3588 = vld [vmem:[#allocation2 + $0x258] sm:$0xff]
        %v3589 = vld [vmem:[#allocation2 + $0x260] sm:$0xff]
        %v3590 = vld [vmem:[#allocation2 + $0x268] sm:$0xff]
        %v3591 = vld [vmem:[#allocation2 + $0x270] sm:$0xff]
        %v3592 = vld [vmem:[#allocation2 + $0x278] sm:$0xff]
        %v3593 = vld [vmem:[#allocation2 + $0x280] sm:$0xff]
        %v3594 = vld [vmem:[#allocation2 + $0x288] sm:$0xff]
        %v3595 = vld [vmem:[#allocation2 + $0x290] sm:$0xff]
        %v3596 = vld [vmem:[#allocation2 + $0x298] sm:$0xff]
        %v3597 = vld [vmem:[#allocation2 + $0x2a0] sm:$0xff]
        %v3598 = vld [vmem:[#allocation2 + $0x2a8] sm:$0xff]
        %v3599 = vld [vmem:[#allocation2 + $0x2b0] sm:$0xff]
        %v3600 = vld [vmem:[#allocation2 + $0x2b8] sm:$0xff]
        %v3601 = vld [vmem:[#allocation2 + $0x2c0] sm:$0xff]
        %v3602 = vld [vmem:[#allocation2 + $0x2c8] sm:$0xff]
        %v3603 = vld [vmem:[#allocation2 + $0x2d0] sm:$0xff]
        %v3604 = vld [vmem:[#allocation2 + $0x2d8] sm:$0xff]
        %v3605 = vld [vmem:[#allocation2 + $0x2e0] sm:$0xff]
        %v3606 = vld [vmem:[#allocation2 + $0x2e8] sm:$0xff]
        %v3607 = vld [vmem:[#allocation2 + $0x2f0] sm:$0xff]
        %v3608 = vld [vmem:[#allocation2 + $0x2f8] sm:$0xff]
        %v3609 = vld [vmem:[#allocation2 + $0x300] sm:$0xff]
        %v3610 = vld [vmem:[#allocation2 + $0x308] sm:$0xff]
        %v3611 = vld [vmem:[#allocation2 + $0x310] sm:$0xff]
        %v3612 = vld [vmem:[#allocation2 + $0x318] sm:$0xff]
        %v3613 = vld [vmem:[#allocation2 + $0x320] sm:$0xff]
        %v3614 = vld [vmem:[#allocation2 + $0x328] sm:$0xff]
        %v3615 = vld [vmem:[#allocation2 + $0x330] sm:$0xff]
        %v3616 = vld [vmem:[#allocation2 + $0x338] sm:$0xff]
        %v3617 = vld [vmem:[#allocation2 + $0x340] sm:$0xff]
        %v3618 = vld [vmem:[#allocation2 + $0x348] sm:$0xff]
        %v3619 = vld [vmem:[#allocation2 + $0x350] sm:$0xff]
        %v3620 = vld [vmem:[#allocation2 + $0x358] sm:$0xff]
        %v3621 = vld [vmem:[#allocation2 + $0x360] sm:$0xff]
        %v3622 = vld [vmem:[#allocation2 + $0x368] sm:$0xff]
        %v3623 = vld [vmem:[#allocation2 + $0x370] sm:$0xff]
        %v3624 = vld [vmem:[#allocation2 + $0x378] sm:$0xff]
        %v3625 = vld [vmem:[#allocation2 + $0x380] sm:$0xff]
        %v3626 = vld [vmem:[#allocation2 + $0x388] sm:$0xff]
        %v3627 = vld [vmem:[#allocation2 + $0x390] sm:$0xff]
        %v3628 = vld [vmem:[#allocation2 + $0x398] sm:$0xff]
        %v3629 = vld [vmem:[#allocation2 + $0x3a0] sm:$0xff]
        %v3630 = vld [vmem:[#allocation2 + $0x3a8] sm:$0xff]
        %v3631 = vld [vmem:[#allocation2 + $0x3b0] sm:$0xff]
        %v3632 = vld [vmem:[#allocation2 + $0x3b8] sm:$0xff]
        %v3633 = vld [vmem:[#allocation2 + $0x3c0] sm:$0xff]
        %v3634 = vld [vmem:[#allocation2 + $0x3c8] sm:$0xff]
        %v3635 = vld [vmem:[#allocation2 + $0x3d0] sm:$0xff]
        %v3636 = vld [vmem:[#allocation2 + $0x3d8] sm:$0xff]
        %v3637 = vld [vmem:[#allocation2 + $0x3e0] sm:$0xff]
        %v3638 = vld [vmem:[#allocation2 + $0x3e8] sm:$0xff]
        %v3639 = vld [vmem:[#allocation2 + $0x3f0] sm:$0xff]
        %v3640 = vld [vmem:[#allocation2 + $0x3f8] sm:$0xff]
        %v3641 = vld [vmem:[#allocation2 + $0x400] sm:$0xff]
        %v3642 = vld [vmem:[#allocation2 + $0x408] sm:$0xff]
        %v3643 = vld [vmem:[#allocation2 + $0x410] sm:$0xff]
        %v3644 = vld [vmem:[#allocation2 + $0x418] sm:$0xff]
        %v3645 = vld [vmem:[#allocation2 + $0x420] sm:$0xff]
        %v3646 = vld [vmem:[#allocation2 + $0x428] sm:$0xff]
        %v3647 = vld [vmem:[#allocation2 + $0x430] sm:$0xff]
        %v3648 = vld [vmem:[#allocation2 + $0x438] sm:$0xff]
        %v3649 = vld [vmem:[#allocation2 + $0x440] sm:$0xff]
        %v3650 = vld [vmem:[#allocation2 + $0x448] sm:$0xff]
        %v3651 = vld [vmem:[#allocation2 + $0x450] sm:$0xff]
        %v3652 = vld [vmem:[#allocation2 + $0x458] sm:$0xff]
        %v3653 = vld [vmem:[#allocation2 + $0x460] sm:$0xff]
        %v3654 = vld [vmem:[#allocation2 + $0x468] sm:$0xff]
        %v3655 = vld [vmem:[#allocation2 + $0x470] sm:$0xff]
        %v3656 = vld [vmem:[#allocation2 + $0x478] sm:$0xff]
        %v3657 = vld [vmem:[#allocation2 + $0x480] sm:$0xff]
        %v3658 = vld [vmem:[#allocation2 + $0x488] sm:$0xff]
        %v3659 = vld [vmem:[#allocation2 + $0x490] sm:$0xff]
        %v3660 = vld [vmem:[#allocation2 + $0x498] sm:$0xff]
        %v3661 = vld [vmem:[#allocation2 + $0x4a0] sm:$0xff]
        %v3662 = vld [vmem:[#allocation2 + $0x4a8] sm:$0xff]
        %v3663 = vld [vmem:[#allocation2 + $0x4b0] sm:$0xff]
        %v3664 = vld [vmem:[#allocation2 + $0x4b8] sm:$0xff]
        %v3665 = vld [vmem:[#allocation2 + $0x4c0] sm:$0xff]
        %v3666 = vld [vmem:[#allocation2 + $0x4c8] sm:$0xff]
        %v3667 = vld [vmem:[#allocation2 + $0x4d0] sm:$0xff]
        %v3668 = vld [vmem:[#allocation2 + $0x4d8] sm:$0xff]
        %v3669 = vld [vmem:[#allocation2 + $0x4e0] sm:$0xff]
        %v3670 = vld [vmem:[#allocation2 + $0x4e8] sm:$0xff]
        %v3671 = vld [vmem:[#allocation2 + $0x4f0] sm:$0xff]
        %v3672 = vld [vmem:[#allocation2 + $0x4f8] sm:$0xff]
        %v3673 = vld [vmem:[#allocation2 + $0x500] sm:$0xff]
        %v3674 = vld [vmem:[#allocation2 + $0x508] sm:$0xff]
        %v3675 = vld [vmem:[#allocation2 + $0x510] sm:$0xff]
        %v3676 = vld [vmem:[#allocation2 + $0x518] sm:$0xff]
        %v3677 = vld [vmem:[#allocation2 + $0x520] sm:$0xff]
        %v3678 = vld [vmem:[#allocation2 + $0x528] sm:$0xff]
        %v3679 = vld [vmem:[#allocation2 + $0x530] sm:$0xff]
        %v3680 = vld [vmem:[#allocation2 + $0x538] sm:$0xff]
        %v3681 = vld [vmem:[#allocation2 + $0x540] sm:$0xff]
        %v3682 = vld [vmem:[#allocation2 + $0x548] sm:$0xff]
        %v3683 = vld [vmem:[#allocation2 + $0x550] sm:$0xff]
        %v3684 = vld [vmem:[#allocation2 + $0x558] sm:$0xff]
        %v3685 = vld [vmem:[#allocation2 + $0x560] sm:$0xff]
        %v3686 = vld [vmem:[#allocation2 + $0x568] sm:$0xff]
        %v3687 = vld [vmem:[#allocation2 + $0x570] sm:$0xff]
        %v3688 = vld [vmem:[#allocation2 + $0x578] sm:$0xff]
        %v3689 = vld [vmem:[#allocation2 + $0x580] sm:$0xff]
        %v3690 = vld [vmem:[#allocation2 + $0x588] sm:$0xff]
        %v3691 = vld [vmem:[#allocation2 + $0x590] sm:$0xff]
        %v3692 = vld [vmem:[#allocation2 + $0x598] sm:$0xff]
        %v3693 = vld [vmem:[#allocation2 + $0x5a0] sm:$0xff]
        %v3694 = vld [vmem:[#allocation2 + $0x5a8] sm:$0xff]
        %v3695 = vld [vmem:[#allocation2 + $0x5b0] sm:$0xff]
        %v3696 = vld [vmem:[#allocation2 + $0x5b8] sm:$0xff]
        %v3697 = vld [vmem:[#allocation2 + $0x5c0] sm:$0xff]
        %v3698 = vld [vmem:[#allocation2 + $0x5c8] sm:$0xff]
        %v3699 = vld [vmem:[#allocation2 + $0x5d0] sm:$0xff]
        %v3700 = vld [vmem:[#allocation2 + $0x5d8] sm:$0xff]
        %v3701 = vld [vmem:[#allocation2 + $0x5e0] sm:$0xff]
        %v3702 = vld [vmem:[#allocation2 + $0x5e8] sm:$0xff]
        %v3703 = vld [vmem:[#allocation2 + $0x5f0] sm:$0xff]
        %v3704 = vld [vmem:[#allocation2 + $0x5f8] sm:$0xff]
        %v3705 = vld [vmem:[#allocation2 + $0x600] sm:$0xff]
        %v3706 = vld [vmem:[#allocation2 + $0x608] sm:$0xff]
        %v3707 = vld [vmem:[#allocation2 + $0x610] sm:$0xff]
        %v3708 = vld [vmem:[#allocation2 + $0x618] sm:$0xff]
        %v3709 = vld [vmem:[#allocation2 + $0x620] sm:$0xff]
        %v3710 = vld [vmem:[#allocation2 + $0x628] sm:$0xff]
        %v3711 = vld [vmem:[#allocation2 + $0x630] sm:$0xff]
        %v3712 = vld [vmem:[#allocation2 + $0x638] sm:$0xff]
        %v3713 = vld [vmem:[#allocation2 + $0x640] sm:$0xff]
        %v3714 = vld [vmem:[#allocation2 + $0x648] sm:$0xff]
        %v3715 = vld [vmem:[#allocation2 + $0x650] sm:$0xff]
        %v3716 = vld [vmem:[#allocation2 + $0x658] sm:$0xff]
        %v3717 = vld [vmem:[#allocation2 + $0x660] sm:$0xff]
        %v3718 = vld [vmem:[#allocation2 + $0x668] sm:$0xff]
        %v3719 = vld [vmem:[#allocation2 + $0x670] sm:$0xff]
        %v3720 = vld [vmem:[#allocation2 + $0x678] sm:$0xff]
        %v3721 = vld [vmem:[#allocation2 + $0x680] sm:$0xff]
        %v3722 = vld [vmem:[#allocation2 + $0x688] sm:$0xff]
        %v3723 = vld [vmem:[#allocation2 + $0x690] sm:$0xff]
        %v3724 = vld [vmem:[#allocation2 + $0x698] sm:$0xff]
        %v3725 = vld [vmem:[#allocation2 + $0x6a0] sm:$0xff]
        %v3726 = vld [vmem:[#allocation2 + $0x6a8] sm:$0xff]
        %v3727 = vld [vmem:[#allocation2 + $0x6b0] sm:$0xff]
        %v3728 = vld [vmem:[#allocation2 + $0x6b8] sm:$0xff]
        %v3729 = vld [vmem:[#allocation2 + $0x6c0] sm:$0xff]
        %v3730 = vld [vmem:[#allocation2 + $0x6c8] sm:$0xff]
        %v3731 = vld [vmem:[#allocation2 + $0x6d0] sm:$0xff]
        %v3732 = vld [vmem:[#allocation2 + $0x6d8] sm:$0xff]
        %v3733 = vld [vmem:[#allocation2 + $0x6e0] sm:$0xff]
        %v3734 = vld [vmem:[#allocation2 + $0x6e8] sm:$0xff]
        %v3735 = vld [vmem:[#allocation2 + $0x6f0] sm:$0xff]
        %v3736 = vld [vmem:[#allocation2 + $0x6f8] sm:$0xff]
        %v3737 = vld [vmem:[#allocation2 + $0x700] sm:$0xff]
        %v3738 = vld [vmem:[#allocation2 + $0x708] sm:$0xff]
        %v3739 = vld [vmem:[#allocation2 + $0x710] sm:$0xff]
        %v3740 = vld [vmem:[#allocation2 + $0x718] sm:$0xff]
        %v3741 = vld [vmem:[#allocation2 + $0x720] sm:$0xff]
        %v3742 = vld [vmem:[#allocation2 + $0x728] sm:$0xff]
        %v3743 = vld [vmem:[#allocation2 + $0x730] sm:$0xff]
        %v3744 = vld [vmem:[#allocation2 + $0x738] sm:$0xff]
        %v3745 = vld [vmem:[#allocation2 + $0x740] sm:$0xff]
        %v3746 = vld [vmem:[#allocation2 + $0x748] sm:$0xff]
        %v3747 = vld [vmem:[#allocation2 + $0x750] sm:$0xff]
        %v3748 = vld [vmem:[#allocation2 + $0x758] sm:$0xff]
        %v3749 = vld [vmem:[#allocation2 + $0x760] sm:$0xff]
        %v3750 = vld [vmem:[#allocation2 + $0x768] sm:$0xff]
        %v3751 = vld [vmem:[#allocation2 + $0x770] sm:$0xff]
        %v3752 = vld [vmem:[#allocation2 + $0x778] sm:$0xff]
        %v3753 = vld [vmem:[#allocation2 + $0x780] sm:$0xff]
        %v3754 = vld [vmem:[#allocation2 + $0x788] sm:$0xff]
        %v3755 = vld [vmem:[#allocation2 + $0x790] sm:$0xff]
        %v3756 = vld [vmem:[#allocation2 + $0x798] sm:$0xff]
        %v3757 = vld [vmem:[#allocation2 + $0x7a0] sm:$0xff]
        %v3758 = vld [vmem:[#allocation2 + $0x7a8] sm:$0xff]
        %v3759 = vld [vmem:[#allocation2 + $0x7b0] sm:$0xff]
        %v3760 = vld [vmem:[#allocation2 + $0x7b8] sm:$0xff]
        %v3761 = vld [vmem:[#allocation2 + $0x7c0] sm:$0xff]
        %v3762 = vld [vmem:[#allocation2 + $0x7c8] sm:$0xff]
        %v3763 = vld [vmem:[#allocation2 + $0x7d0] sm:$0xff]
        %v3764 = vld [vmem:[#allocation2 + $0x7d8] sm:$0xff]
        %v3765 = vld [vmem:[#allocation2 + $0x7e0] sm:$0xff]
        %v3766 = vld [vmem:[#allocation2 + $0x7e8] sm:$0xff]
        %v3767 = vld [vmem:[#allocation2 + $0x7f0] sm:$0xff]
        %v3768 = vld [vmem:[#allocation2 + $0x7f8] sm:$0xff]
        %3769 = vmatpush.msra.mxu0 %v3528
        %3770 = vmatpush.msra.mxu0 %v3527
        %3771 = vmatpush.msra.mxu0 %v3526
        %3772 = vmatpush.msra.mxu0 %v3525
        %3773 = vmatpush.msra.mxu0 %v3524
        %3774 = vmatpush.msra.mxu0 %v3523
        %3775 = vmatpush.msra.mxu0 %v3522
        %3776 = vmatpush.msra.mxu0 %v3521
        %3777 = vmatpush.msra.mxu0 %v3520
        %3778 = vmatpush.msra.mxu0 %v3519
        %3779 = vmatpush.msra.mxu0 %v3518
        %3780 = vmatpush.msra.mxu0 %v3517
        %3781 = vmatpush.msra.mxu0 %v3516
        %3782 = vmatpush.msra.mxu0 %v3515
        %3783 = vmatpush.msra.mxu0 %v3514
        %3784 = vmatpush.msra.mxu0 %v3513
        %3785 = vmatmul.f32.gmra.mxu0 %v3449
        %v3786 = vpop.f32.mrf.mxu0
        %v3787 = vadd.f32 0.0, %v3786
        %3788 = vmatmul.f32.gmra.mxu0 %v3465
        %v3789 = vpop.f32.mrf.mxu0
        %v3790 = vadd.f32 0.0, %v3789
        %3791 = vmatmul.f32.gmra.mxu0 %v3481
        %v3792 = vpop.f32.mrf.mxu0
        %v3793 = vadd.f32 0.0, %v3792
        %3794 = vmatmul.f32.gmra.mxu0 %v3497
        %v3795 = vpop.f32.mrf.mxu0
        %v3796 = vadd.f32 0.0, %v3795
        %3797 = vdwg.mxu0
        %3798 = vmatpush.msra.mxu0 %v3544
        %3799 = vmatpush.msra.mxu0 %v3543
        %3800 = vmatpush.msra.mxu0 %v3542
        %3801 = vmatpush.msra.mxu0 %v3541
        %3802 = vmatpush.msra.mxu0 %v3540
        %3803 = vmatpush.msra.mxu0 %v3539
        %3804 = vmatpush.msra.mxu0 %v3538
        %3805 = vmatpush.msra.mxu0 %v3537
        %3806 = vmatpush.msra.mxu0 %v3536
        %3807 = vmatpush.msra.mxu0 %v3535
        %3808 = vmatpush.msra.mxu0 %v3534
        %3809 = vmatpush.msra.mxu0 %v3533
        %3810 = vmatpush.msra.mxu0 %v3532
        %3811 = vmatpush.msra.mxu0 %v3531
        %3812 = vmatpush.msra.mxu0 %v3530
        %3813 = vmatpush.msra.mxu0 %v3529
        %3814 = vmatmul.f32.gmra.mxu0 %v3450
        %v3815 = vpop.f32.mrf.mxu0
        %v3816 = vadd.f32 %v3787, %v3815
        %3817 = vmatmul.f32.gmra.mxu0 %v3466
        %v3818 = vpop.f32.mrf.mxu0
        %v3819 = vadd.f32 %v3790, %v3818
        %3820 = vmatmul.f32.gmra.mxu0 %v3482
        %v3821 = vpop.f32.mrf.mxu0
        %v3822 = vadd.f32 %v3793, %v3821
        %3823 = vmatmul.f32.gmra.mxu0 %v3498
        %v3824 = vpop.f32.mrf.mxu0
        %v3825 = vadd.f32 %v3796, %v3824
        %3826 = vdwg.mxu0
        %3827 = vmatpush.msra.mxu0 %v3560
        %3828 = vmatpush.msra.mxu0 %v3559
        %3829 = vmatpush.msra.mxu0 %v3558
        %3830 = vmatpush.msra.mxu0 %v3557
        %3831 = vmatpush.msra.mxu0 %v3556
        %3832 = vmatpush.msra.mxu0 %v3555
        %3833 = vmatpush.msra.mxu0 %v3554
        %3834 = vmatpush.msra.mxu0 %v3553
        %3835 = vmatpush.msra.mxu0 %v3552
        %3836 = vmatpush.msra.mxu0 %v3551
        %3837 = vmatpush.msra.mxu0 %v3550
        %3838 = vmatpush.msra.mxu0 %v3549
        %3839 = vmatpush.msra.mxu0 %v3548
        %3840 = vmatpush.msra.mxu0 %v3547
        %3841 = vmatpush.msra.mxu0 %v3546
        %3842 = vmatpush.msra.mxu0 %v3545
        %3843 = vmatmul.f32.gmra.mxu0 %v3451
        %v3844 = vpop.f32.mrf.mxu0
        %v3845 = vadd.f32 %v3816, %v3844
        %3846 = vmatmul.f32.gmra.mxu0 %v3467
        %v3847 = vpop.f32.mrf.mxu0
        %v3848 = vadd.f32 %v3819, %v3847
        %3849 = vmatmul.f32.gmra.mxu0 %v3483
        %v3850 = vpop.f32.mrf.mxu0
        %v3851 = vadd.f32 %v3822, %v3850
        %3852 = vmatmul.f32.gmra.mxu0 %v3499
        %v3853 = vpop.f32.mrf.mxu0
        %v3854 = vadd.f32 %v3825, %v3853
        %3855 = vdwg.mxu0
        %3856 = vmatpush.msra.mxu0 %v3576
        %3857 = vmatpush.msra.mxu0 %v3575
        %3858 = vmatpush.msra.mxu0 %v3574
        %3859 = vmatpush.msra.mxu0 %v3573
        %3860 = vmatpush.msra.mxu0 %v3572
        %3861 = vmatpush.msra.mxu0 %v3571
        %3862 = vmatpush.msra.mxu0 %v3570
        %3863 = vmatpush.msra.mxu0 %v3569
        %3864 = vmatpush.msra.mxu0 %v3568
        %3865 = vmatpush.msra.mxu0 %v3567
        %3866 = vmatpush.msra.mxu0 %v3566
        %3867 = vmatpush.msra.mxu0 %v3565
        %3868 = vmatpush.msra.mxu0 %v3564
        %3869 = vmatpush.msra.mxu0 %v3563
        %3870 = vmatpush.msra.mxu0 %v3562
        %3871 = vmatpush.msra.mxu0 %v3561
        %3872 = vmatmul.f32.gmra.mxu0 %v3452
        %v3873 = vpop.f32.mrf.mxu0
        %v3874 = vadd.f32 %v3845, %v3873
        %3875 = vmatmul.f32.gmra.mxu0 %v3468
        %v3876 = vpop.f32.mrf.mxu0
        %v3877 = vadd.f32 %v3848, %v3876
        %3878 = vmatmul.f32.gmra.mxu0 %v3484
        %v3879 = vpop.f32.mrf.mxu0
        %v3880 = vadd.f32 %v3851, %v3879
        %3881 = vmatmul.f32.gmra.mxu0 %v3500
        %v3882 = vpop.f32.mrf.mxu0
        %v3883 = vadd.f32 %v3854, %v3882
        %3884 = vdwg.mxu0
        %3885 = vmatpush.msra.mxu0 %v3592
        %3886 = vmatpush.msra.mxu0 %v3591
        %3887 = vmatpush.msra.mxu0 %v3590
        %3888 = vmatpush.msra.mxu0 %v3589
        %3889 = vmatpush.msra.mxu0 %v3588
        %3890 = vmatpush.msra.mxu0 %v3587
        %3891 = vmatpush.msra.mxu0 %v3586
        %3892 = vmatpush.msra.mxu0 %v3585
        %3893 = vmatpush.msra.mxu0 %v3584
        %3894 = vmatpush.msra.mxu0 %v3583
        %3895 = vmatpush.msra.mxu0 %v3582
        %3896 = vmatpush.msra.mxu0 %v3581
        %3897 = vmatpush.msra.mxu0 %v3580
        %3898 = vmatpush.msra.mxu0 %v3579
        %3899 = vmatpush.msra.mxu0 %v3578
        %3900 = vmatpush.msra.mxu0 %v3577
        %3901 = vmatmul.f32.gmra.mxu0 %v3453
        %v3902 = vpop.f32.mrf.mxu0
        %v3903 = vadd.f32 %v3874, %v3902
        %3904 = vmatmul.f32.gmra.mxu0 %v3469
        %v3905 = vpop.f32.mrf.mxu0
        %v3906 = vadd.f32 %v3877, %v3905
        %3907 = vmatmul.f32.gmra.mxu0 %v3485
        %v3908 = vpop.f32.mrf.mxu0
        %v3909 = vadd.f32 %v3880, %v3908
        %3910 = vmatmul.f32.gmra.mxu0 %v3501
        %v3911 = vpop.f32.mrf.mxu0
        %v3912 = vadd.f32 %v3883, %v3911
        %3913 = vdwg.mxu0
        %3914 = vmatpush.msra.mxu0 %v3608
        %3915 = vmatpush.msra.mxu0 %v3607
        %3916 = vmatpush.msra.mxu0 %v3606
        %3917 = vmatpush.msra.mxu0 %v3605
        %3918 = vmatpush.msra.mxu0 %v3604
        %3919 = vmatpush.msra.mxu0 %v3603
        %3920 = vmatpush.msra.mxu0 %v3602
        %3921 = vmatpush.msra.mxu0 %v3601
        %3922 = vmatpush.msra.mxu0 %v3600
        %3923 = vmatpush.msra.mxu0 %v3599
        %3924 = vmatpush.msra.mxu0 %v3598
        %3925 = vmatpush.msra.mxu0 %v3597
        %3926 = vmatpush.msra.mxu0 %v3596
        %3927 = vmatpush.msra.mxu0 %v3595
        %3928 = vmatpush.msra.mxu0 %v3594
        %3929 = vmatpush.msra.mxu0 %v3593
        %3930 = vmatmul.f32.gmra.mxu0 %v3454
        %v3931 = vpop.f32.mrf.mxu0
        %v3932 = vadd.f32 %v3903, %v3931
        %3933 = vmatmul.f32.gmra.mxu0 %v3470
        %v3934 = vpop.f32.mrf.mxu0
        %v3935 = vadd.f32 %v3906, %v3934
        %3936 = vmatmul.f32.gmra.mxu0 %v3486
        %v3937 = vpop.f32.mrf.mxu0
        %v3938 = vadd.f32 %v3909, %v3937
        %3939 = vmatmul.f32.gmra.mxu0 %v3502
        %v3940 = vpop.f32.mrf.mxu0
        %v3941 = vadd.f32 %v3912, %v3940
        %3942 = vdwg.mxu0
        %3943 = vmatpush.msra.mxu0 %v3624
        %3944 = vmatpush.msra.mxu0 %v3623
        %3945 = vmatpush.msra.mxu0 %v3622
        %3946 = vmatpush.msra.mxu0 %v3621
        %3947 = vmatpush.msra.mxu0 %v3620
        %3948 = vmatpush.msra.mxu0 %v3619
        %3949 = vmatpush.msra.mxu0 %v3618
        %3950 = vmatpush.msra.mxu0 %v3617
        %3951 = vmatpush.msra.mxu0 %v3616
        %3952 = vmatpush.msra.mxu0 %v3615
        %3953 = vmatpush.msra.mxu0 %v3614
        %3954 = vmatpush.msra.mxu0 %v3613
        %3955 = vmatpush.msra.mxu0 %v3612
        %3956 = vmatpush.msra.mxu0 %v3611
        %3957 = vmatpush.msra.mxu0 %v3610
        %3958 = vmatpush.msra.mxu0 %v3609
        %3959 = vmatmul.f32.gmra.mxu0 %v3455
        %v3960 = vpop.f32.mrf.mxu0
        %v3961 = vadd.f32 %v3932, %v3960
        %3962 = vmatmul.f32.gmra.mxu0 %v3471
        %v3963 = vpop.f32.mrf.mxu0
        %v3964 = vadd.f32 %v3935, %v3963
        %3965 = vmatmul.f32.gmra.mxu0 %v3487
        %v3966 = vpop.f32.mrf.mxu0
        %v3967 = vadd.f32 %v3938, %v3966
        %3968 = vmatmul.f32.gmra.mxu0 %v3503
        %v3969 = vpop.f32.mrf.mxu0
        %v3970 = vadd.f32 %v3941, %v3969
        %3971 = vdwg.mxu0
        %3972 = vmatpush.msra.mxu0 %v3640
        %3973 = vmatpush.msra.mxu0 %v3639
        %3974 = vmatpush.msra.mxu0 %v3638
        %3975 = vmatpush.msra.mxu0 %v3637
        %3976 = vmatpush.msra.mxu0 %v3636
        %3977 = vmatpush.msra.mxu0 %v3635
        %3978 = vmatpush.msra.mxu0 %v3634
        %3979 = vmatpush.msra.mxu0 %v3633
        %3980 = vmatpush.msra.mxu0 %v3632
        %3981 = vmatpush.msra.mxu0 %v3631
        %3982 = vmatpush.msra.mxu0 %v3630
        %3983 = vmatpush.msra.mxu0 %v3629
        %3984 = vmatpush.msra.mxu0 %v3628
        %3985 = vmatpush.msra.mxu0 %v3627
        %3986 = vmatpush.msra.mxu0 %v3626
        %3987 = vmatpush.msra.mxu0 %v3625
        %3988 = vmatmul.f32.gmra.mxu0 %v3456
        %v3989 = vpop.f32.mrf.mxu0
        %v3990 = vadd.f32 %v3961, %v3989
        %3991 = vmatmul.f32.gmra.mxu0 %v3472
        %v3992 = vpop.f32.mrf.mxu0
        %v3993 = vadd.f32 %v3964, %v3992
        %3994 = vmatmul.f32.gmra.mxu0 %v3488
        %v3995 = vpop.f32.mrf.mxu0
        %v3996 = vadd.f32 %v3967, %v3995
        %3997 = vmatmul.f32.gmra.mxu0 %v3504
        %v3998 = vpop.f32.mrf.mxu0
        %v3999 = vadd.f32 %v3970, %v3998
        %4000 = vdwg.mxu0
        %4001 = vmatpush.msra.mxu0 %v3656
        %4002 = vmatpush.msra.mxu0 %v3655
        %4003 = vmatpush.msra.mxu0 %v3654
        %4004 = vmatpush.msra.mxu0 %v3653
        %4005 = vmatpush.msra.mxu0 %v3652
        %4006 = vmatpush.msra.mxu0 %v3651
        %4007 = vmatpush.msra.mxu0 %v3650
        %4008 = vmatpush.msra.mxu0 %v3649
        %4009 = vmatpush.msra.mxu0 %v3648
        %4010 = vmatpush.msra.mxu0 %v3647
        %4011 = vmatpush.msra.mxu0 %v3646
        %4012 = vmatpush.msra.mxu0 %v3645
        %4013 = vmatpush.msra.mxu0 %v3644
        %4014 = vmatpush.msra.mxu0 %v3643
        %4015 = vmatpush.msra.mxu0 %v3642
        %4016 = vmatpush.msra.mxu0 %v3641
        %4017 = vmatmul.f32.gmra.mxu0 %v3457
        %v4018 = vpop.f32.mrf.mxu0
        %v4019 = vadd.f32 %v3990, %v4018
        %4020 = vmatmul.f32.gmra.mxu0 %v3473
        %v4021 = vpop.f32.mrf.mxu0
        %v4022 = vadd.f32 %v3993, %v4021
        %4023 = vmatmul.f32.gmra.mxu0 %v3489
        %v4024 = vpop.f32.mrf.mxu0
        %v4025 = vadd.f32 %v3996, %v4024
        %4026 = vmatmul.f32.gmra.mxu0 %v3505
        %v4027 = vpop.f32.mrf.mxu0
        %v4028 = vadd.f32 %v3999, %v4027
        %4029 = vdwg.mxu0
        %4030 = vmatpush.msra.mxu0 %v3672
        %4031 = vmatpush.msra.mxu0 %v3671
        %4032 = vmatpush.msra.mxu0 %v3670
        %4033 = vmatpush.msra.mxu0 %v3669
        %4034 = vmatpush.msra.mxu0 %v3668
        %4035 = vmatpush.msra.mxu0 %v3667
        %4036 = vmatpush.msra.mxu0 %v3666
        %4037 = vmatpush.msra.mxu0 %v3665
        %4038 = vmatpush.msra.mxu0 %v3664
        %4039 = vmatpush.msra.mxu0 %v3663
        %4040 = vmatpush.msra.mxu0 %v3662
        %4041 = vmatpush.msra.mxu0 %v3661
        %4042 = vmatpush.msra.mxu0 %v3660
        %4043 = vmatpush.msra.mxu0 %v3659
        %4044 = vmatpush.msra.mxu0 %v3658
        %4045 = vmatpush.msra.mxu0 %v3657
        %4046 = vmatmul.f32.gmra.mxu0 %v3458
        %v4047 = vpop.f32.mrf.mxu0
        %v4048 = vadd.f32 %v4019, %v4047
        %4049 = vmatmul.f32.gmra.mxu0 %v3474
        %v4050 = vpop.f32.mrf.mxu0
        %v4051 = vadd.f32 %v4022, %v4050
        %4052 = vmatmul.f32.gmra.mxu0 %v3490
        %v4053 = vpop.f32.mrf.mxu0
        %v4054 = vadd.f32 %v4025, %v4053
        %4055 = vmatmul.f32.gmra.mxu0 %v3506
        %v4056 = vpop.f32.mrf.mxu0
        %v4057 = vadd.f32 %v4028, %v4056
        %4058 = vdwg.mxu0
        %4059 = vmatpush.msra.mxu0 %v3688
        %4060 = vmatpush.msra.mxu0 %v3687
        %4061 = vmatpush.msra.mxu0 %v3686
        %4062 = vmatpush.msra.mxu0 %v3685
        %4063 = vmatpush.msra.mxu0 %v3684
        %4064 = vmatpush.msra.mxu0 %v3683
        %4065 = vmatpush.msra.mxu0 %v3682
        %4066 = vmatpush.msra.mxu0 %v3681
        %4067 = vmatpush.msra.mxu0 %v3680
        %4068 = vmatpush.msra.mxu0 %v3679
        %4069 = vmatpush.msra.mxu0 %v3678
        %4070 = vmatpush.msra.mxu0 %v3677
        %4071 = vmatpush.msra.mxu0 %v3676
        %4072 = vmatpush.msra.mxu0 %v3675
        %4073 = vmatpush.msra.mxu0 %v3674
        %4074 = vmatpush.msra.mxu0 %v3673
        %4075 = vmatmul.f32.gmra.mxu0 %v3459
        %v4076 = vpop.f32.mrf.mxu0
        %v4077 = vadd.f32 %v4048, %v4076
        %4078 = vmatmul.f32.gmra.mxu0 %v3475
        %v4079 = vpop.f32.mrf.mxu0
        %v4080 = vadd.f32 %v4051, %v4079
        %4081 = vmatmul.f32.gmra.mxu0 %v3491
        %v4082 = vpop.f32.mrf.mxu0
        %v4083 = vadd.f32 %v4054, %v4082
        %4084 = vmatmul.f32.gmra.mxu0 %v3507
        %v4085 = vpop.f32.mrf.mxu0
        %v4086 = vadd.f32 %v4057, %v4085
        %4087 = vdwg.mxu0
        %4088 = vmatpush.msra.mxu0 %v3704
        %4089 = vmatpush.msra.mxu0 %v3703
        %4090 = vmatpush.msra.mxu0 %v3702
        %4091 = vmatpush.msra.mxu0 %v3701
        %4092 = vmatpush.msra.mxu0 %v3700
        %4093 = vmatpush.msra.mxu0 %v3699
        %4094 = vmatpush.msra.mxu0 %v3698
        %4095 = vmatpush.msra.mxu0 %v3697
        %4096 = vmatpush.msra.mxu0 %v3696
        %4097 = vmatpush.msra.mxu0 %v3695
        %4098 = vmatpush.msra.mxu0 %v3694
        %4099 = vmatpush.msra.mxu0 %v3693
        %4100 = vmatpush.msra.mxu0 %v3692
        %4101 = vmatpush.msra.mxu0 %v3691
        %4102 = vmatpush.msra.mxu0 %v3690
        %4103 = vmatpush.msra.mxu0 %v3689
        %4104 = vmatmul.f32.gmra.mxu0 %v3460
        %v4105 = vpop.f32.mrf.mxu0
        %v4106 = vadd.f32 %v4077, %v4105
        %4107 = vmatmul.f32.gmra.mxu0 %v3476
        %v4108 = vpop.f32.mrf.mxu0
        %v4109 = vadd.f32 %v4080, %v4108
        %4110 = vmatmul.f32.gmra.mxu0 %v3492
        %v4111 = vpop.f32.mrf.mxu0
        %v4112 = vadd.f32 %v4083, %v4111
        %4113 = vmatmul.f32.gmra.mxu0 %v3508
        %v4114 = vpop.f32.mrf.mxu0
        %v4115 = vadd.f32 %v4086, %v4114
        %4116 = vdwg.mxu0
        %4117 = vmatpush.msra.mxu0 %v3720
        %4118 = vmatpush.msra.mxu0 %v3719
        %4119 = vmatpush.msra.mxu0 %v3718
        %4120 = vmatpush.msra.mxu0 %v3717
        %4121 = vmatpush.msra.mxu0 %v3716
        %4122 = vmatpush.msra.mxu0 %v3715
        %4123 = vmatpush.msra.mxu0 %v3714
        %4124 = vmatpush.msra.mxu0 %v3713
        %4125 = vmatpush.msra.mxu0 %v3712
        %4126 = vmatpush.msra.mxu0 %v3711
        %4127 = vmatpush.msra.mxu0 %v3710
        %4128 = vmatpush.msra.mxu0 %v3709
        %4129 = vmatpush.msra.mxu0 %v3708
        %4130 = vmatpush.msra.mxu0 %v3707
        %4131 = vmatpush.msra.mxu0 %v3706
        %4132 = vmatpush.msra.mxu0 %v3705
        %4133 = vmatmul.f32.gmra.mxu0 %v3461
        %v4134 = vpop.f32.mrf.mxu0
        %v4135 = vadd.f32 %v4106, %v4134
        %4136 = vmatmul.f32.gmra.mxu0 %v3477
        %v4137 = vpop.f32.mrf.mxu0
        %v4138 = vadd.f32 %v4109, %v4137
        %4139 = vmatmul.f32.gmra.mxu0 %v3493
        %v4140 = vpop.f32.mrf.mxu0
        %v4141 = vadd.f32 %v4112, %v4140
        %4142 = vmatmul.f32.gmra.mxu0 %v3509
        %v4143 = vpop.f32.mrf.mxu0
        %v4144 = vadd.f32 %v4115, %v4143
        %4145 = vdwg.mxu0
        %4146 = vmatpush.msra.mxu0 %v3736
        %4147 = vmatpush.msra.mxu0 %v3735
        %4148 = vmatpush.msra.mxu0 %v3734
        %4149 = vmatpush.msra.mxu0 %v3733
        %4150 = vmatpush.msra.mxu0 %v3732
        %4151 = vmatpush.msra.mxu0 %v3731
        %4152 = vmatpush.msra.mxu0 %v3730
        %4153 = vmatpush.msra.mxu0 %v3729
        %4154 = vmatpush.msra.mxu0 %v3728
        %4155 = vmatpush.msra.mxu0 %v3727
        %4156 = vmatpush.msra.mxu0 %v3726
        %4157 = vmatpush.msra.mxu0 %v3725
        %4158 = vmatpush.msra.mxu0 %v3724
        %4159 = vmatpush.msra.mxu0 %v3723
        %4160 = vmatpush.msra.mxu0 %v3722
        %4161 = vmatpush.msra.mxu0 %v3721
        %4162 = vmatmul.f32.gmra.mxu0 %v3462
        %v4163 = vpop.f32.mrf.mxu0
        %v4164 = vadd.f32 %v4135, %v4163
        %4165 = vmatmul.f32.gmra.mxu0 %v3478
        %v4166 = vpop.f32.mrf.mxu0
        %v4167 = vadd.f32 %v4138, %v4166
        %4168 = vmatmul.f32.gmra.mxu0 %v3494
        %v4169 = vpop.f32.mrf.mxu0
        %v4170 = vadd.f32 %v4141, %v4169
        %4171 = vmatmul.f32.gmra.mxu0 %v3510
        %v4172 = vpop.f32.mrf.mxu0
        %v4173 = vadd.f32 %v4144, %v4172
        %4174 = vdwg.mxu0
        %4175 = vmatpush.msra.mxu0 %v3752
        %4176 = vmatpush.msra.mxu0 %v3751
        %4177 = vmatpush.msra.mxu0 %v3750
        %4178 = vmatpush.msra.mxu0 %v3749
        %4179 = vmatpush.msra.mxu0 %v3748
        %4180 = vmatpush.msra.mxu0 %v3747
        %4181 = vmatpush.msra.mxu0 %v3746
        %4182 = vmatpush.msra.mxu0 %v3745
        %4183 = vmatpush.msra.mxu0 %v3744
        %4184 = vmatpush.msra.mxu0 %v3743
        %4185 = vmatpush.msra.mxu0 %v3742
        %4186 = vmatpush.msra.mxu0 %v3741
        %4187 = vmatpush.msra.mxu0 %v3740
        %4188 = vmatpush.msra.mxu0 %v3739
        %4189 = vmatpush.msra.mxu0 %v3738
        %4190 = vmatpush.msra.mxu0 %v3737
        %4191 = vmatmul.f32.gmra.mxu0 %v3463
        %v4192 = vpop.f32.mrf.mxu0
        %v4193 = vadd.f32 %v4164, %v4192
        %4194 = vmatmul.f32.gmra.mxu0 %v3479
        %v4195 = vpop.f32.mrf.mxu0
        %v4196 = vadd.f32 %v4167, %v4195
        %4197 = vmatmul.f32.gmra.mxu0 %v3495
        %v4198 = vpop.f32.mrf.mxu0
        %v4199 = vadd.f32 %v4170, %v4198
        %4200 = vmatmul.f32.gmra.mxu0 %v3511
        %v4201 = vpop.f32.mrf.mxu0
        %v4202 = vadd.f32 %v4173, %v4201
        %4203 = vdwg.mxu0
        %4204 = vmatpush.msra.mxu0 %v3768
        %4205 = vmatpush.msra.mxu0 %v3767
        %4206 = vmatpush.msra.mxu0 %v3766
        %4207 = vmatpush.msra.mxu0 %v3765
        %4208 = vmatpush.msra.mxu0 %v3764
        %4209 = vmatpush.msra.mxu0 %v3763
        %4210 = vmatpush.msra.mxu0 %v3762
        %4211 = vmatpush.msra.mxu0 %v3761
        %4212 = vmatpush.msra.mxu0 %v3760
        %4213 = vmatpush.msra.mxu0 %v3759
        %4214 = vmatpush.msra.mxu0 %v3758
        %4215 = vmatpush.msra.mxu0 %v3757
        %4216 = vmatpush.msra.mxu0 %v3756
        %4217 = vmatpush.msra.mxu0 %v3755
        %4218 = vmatpush.msra.mxu0 %v3754
        %4219 = vmatpush.msra.mxu0 %v3753
        %4220 = vmatmul.f32.gmra.mxu0 %v3464
        %v4221 = vpop.f32.mrf.mxu0
        %v4222 = vadd.f32 %v4193, %v4221
        %4223 = vmatmul.f32.gmra.mxu0 %v3480
        %v4224 = vpop.f32.mrf.mxu0
        %v4225 = vadd.f32 %v4196, %v4224
        %4226 = vmatmul.f32.gmra.mxu0 %v3496
        %v4227 = vpop.f32.mrf.mxu0
        %v4228 = vadd.f32 %v4199, %v4227
        %4229 = vmatmul.f32.gmra.mxu0 %v3512
        %v4230 = vpop.f32.mrf.mxu0
        %v4231 = vadd.f32 %v4202, %v4230
        %4232 = vdwg.mxu0
        %v4233 = vadd.f32 %v3445, %v4222
        %v4234 = vadd.f32 %v3446, %v4225
        %v4235 = vadd.f32 %v3447, %v4228
        %v4236 = vadd.f32 %v3448, %v4231
        %4237 = vst [vmem:[%s201] sm:$0xff] %v4233
        %4238 = vst [vmem:[%s201 + $0x8] sm:$0xff] %v4234
        %4239 = vst [vmem:[%s201 + $0x10] sm:$0xff] %v4235
        %4240 = vst [vmem:[%s201 + $0x18] sm:$0xff] %v4236
        // Predicated region
        $region41: #{tpu_custom_call.1} parent=31 // pred_check
          %p4241 = pneg %p210
        $region42: #{tpu_custom_call.1} parent=31 // pred_check_branch
          %4243 = sbr.rel (%p4241) target = $region44
        $region43: #{tpu_custom_call.1} parent=31 // pred_region
          %v4244 = vld [vmem:[%s201] sm:$0xff]
          %v4245 = vld [vmem:[%s201 + $0x8] sm:$0xff]
          %v4246 = vld [vmem:[%s201 + $0x10] sm:$0xff]
          %v4247 = vld [vmem:[%s201 + $0x18] sm:$0xff]
          %v4248 = vmul.f32 %v4244, 0.0625
          %v4249 = vmul.f32 %v4245, 0.0625
          %v4250 = vmul.f32 %v4246, 0.0625
          %v4251 = vmul.f32 %v4247, 0.0625
          %v4252 = vld [vmem:[%s2] sm:$0x1]
          %v4254 = vperm.slane %v4252, 0
          %v4256 = vadd.f32 %v4248, %v4254
          %v4257 = vadd.f32 %v4249, %v4254
          %v4258 = vadd.f32 %v4250, %v4254
          %v4259 = vadd.f32 %v4251, %v4254
          %4260 = vmax.xlane.f32.xlu0 %v4256
          %v4261 = vpop.xlane.xlu0 %4260
          %4262 = vmax.xlane.f32.xlu0 %v4257
          %v4263 = vpop.xlane.xlu0 %4262
          %4264 = vmax.xlane.f32.xlu0 %v4258
          %v4265 = vpop.xlane.xlu0 %4264
          %4266 = vmax.xlane.f32.xlu0 %v4259
          %v4267 = vpop.xlane.xlu0 %4266
          %v4268 = vsub.f32 %v4256, %v4261
          %v4269 = vsub.f32 %v4257, %v4263
          %v4270 = vsub.f32 %v4258, %v4265
          %v4271 = vsub.f32 %v4259, %v4267
          %v4272 = vmul.f32 %v4268, 1.442695
          %v4273 = vpow.pop %v4272
          %v4274 = vmul.f32 %v4269, 1.442695
          %v4275 = vpow.pop %v4274
          %v4276 = vmul.f32 %v4270, 1.442695
          %v4277 = vpow.pop %v4276
          %v4278 = vmul.f32 %v4271, 1.442695
          %v4279 = vpow.pop %v4278
          %4280 = vadd.xlane.f32.xlu0 %v4273
          %v4281 = vpop.xlane.xlu0 %4280
          %4282 = vadd.xlane.f32.xlu0 %v4275
          %v4283 = vpop.xlane.xlu0 %4282
          %4284 = vadd.xlane.f32.xlu0 %v4277
          %v4285 = vpop.xlane.xlu0 %4284
          %4286 = vadd.xlane.f32.xlu0 %v4279
          %v4287 = vpop.xlane.xlu0 %4286
          %v4288 = vrcp.pop %v4281
          %v4289 = vmul.f32 %v4281, %v4288
          %v4290 = vsub.f32 1.0, %v4289
          %v4291 = vmul.f32 %v4288, %v4290
          %v4292 = vadd.f32 %v4288, %v4291
          %vm4293 = vweird.f32 %v4281
          %vm4294 = vweird.f32 %v4288
          %vm4295 = vmor %vm4293, %vm4294
          %v4296 = vsel %vm4295, %v4288, %v4292
          %v4297 = vand.u32 2147483647, %v4281
          %vm4298 = vcmp.eq.f32.partialorder %v4297, 8.507059e+37
          %v4299 = vand.u32 %v4281, 2147483648
          %v4300 = vor.u32 1.1754944e-38, %v4299
          %v4301 = vsel %vm4298, %v4300, %v4296
          %v4302 = vrcp.pop %v4283
          %v4303 = vmul.f32 %v4283, %v4302
          %v4304 = vsub.f32 1.0, %v4303
          %v4305 = vmul.f32 %v4302, %v4304
          %v4306 = vadd.f32 %v4302, %v4305
          %vm4307 = vweird.f32 %v4283
          %vm4308 = vweird.f32 %v4302
          %vm4309 = vmor %vm4307, %vm4308
          %v4310 = vsel %vm4309, %v4302, %v4306
          %v4311 = vand.u32 2147483647, %v4283
          %vm4312 = vcmp.eq.f32.partialorder %v4311, 8.507059e+37
          %v4313 = vand.u32 %v4283, 2147483648
          %v4314 = vor.u32 1.1754944e-38, %v4313
          %v4315 = vsel %vm4312, %v4314, %v4310
          %v4316 = vrcp.pop %v4285
          %v4317 = vmul.f32 %v4285, %v4316
          %v4318 = vsub.f32 1.0, %v4317
          %v4319 = vmul.f32 %v4316, %v4318
          %v4320 = vadd.f32 %v4316, %v4319
          %vm4321 = vweird.f32 %v4285
          %vm4322 = vweird.f32 %v4316
          %vm4323 = vmor %vm4321, %vm4322
          %v4324 = vsel %vm4323, %v4316, %v4320
          %v4325 = vand.u32 2147483647, %v4285
          %vm4326 = vcmp.eq.f32.partialorder %v4325, 8.507059e+37
          %v4327 = vand.u32 %v4285, 2147483648
          %v4328 = vor.u32 1.1754944e-38, %v4327
          %v4329 = vsel %vm4326, %v4328, %v4324
          %v4330 = vrcp.pop %v4287
          %v4331 = vmul.f32 %v4287, %v4330
          %v4332 = vsub.f32 1.0, %v4331
          %v4333 = vmul.f32 %v4330, %v4332
          %v4334 = vadd.f32 %v4330, %v4333
          %vm4335 = vweird.f32 %v4287
          %vm4336 = vweird.f32 %v4330
          %vm4337 = vmor %vm4335, %vm4336
          %v4338 = vsel %vm4337, %v4330, %v4334
          %v4339 = vand.u32 2147483647, %v4287
          %vm4340 = vcmp.eq.f32.partialorder %v4339, 8.507059e+37
          %v4341 = vand.u32 %v4287, 2147483648
          %v4342 = vor.u32 1.1754944e-38, %v4341
          %v4343 = vsel %vm4340, %v4342, %v4338
          %v4344 = vmul.f32 %v4273, %v4301
          %v4345 = vmul.f32 %v4275, %v4315
          %v4346 = vmul.f32 %v4277, %v4329
          %v4347 = vmul.f32 %v4279, %v4343
          %4348 = vst [vmem:[%s201] sm:$0xff] %v4344
          %4349 = vst [vmem:[%s201 + $0x8] sm:$0xff] %v4345
          %4350 = vst [vmem:[%s201 + $0x10] sm:$0xff] %v4346
          %4351 = vst [vmem:[%s201 + $0x18] sm:$0xff] %v4347
        $region44: #{tpu_custom_call.1} parent=31 // pred_fallthru
          _
        %s4352 = sand.u32 %s111, 1
        %s4353 = scalar_lea.sflag [#allocation4], %s4352
        %s4354 = sand.u32 %s111, 1
        %s4355 = smul.addr %s4354, 32
        %s4356 = scalar_lea.vmem [#allocation5], %s4355
        // Predicated region
        $region45: #{tpu_custom_call.1} parent=31 // pred_check
          %p4357 = pneg %p121
        $region46: #{tpu_custom_call.1} parent=31 // pred_check_branch
          %4359 = sbr.rel (%p4357) target = $region48
        $region47: #{tpu_custom_call.1} parent=31 // pred_region
          %s4360 = smul.u32 4, %s22
          %4362 = vsyncadd %s4353, 0
          %s4363 = smul.addr %s4360, 8
          %s4364 = scalar_lea.hbm %s3, %s4363
          %s4365 = sshll.u32 %s4356, 4
          %s4366 = int_to_ptr.vmem [resolvable:$true] %s4365
          %s4367 = sshll.u32 %s4364, 4
          %s4368 = int_to_ptr.hbm [resolvable:$true] %s4367
          %4373 = dma.vmem_to_hbm [thread:$0]  %s4366, 512, %s4368, %s4353, 128, 128, 8
        $region48: #{tpu_custom_call.1} parent=31 // pred_fallthru
          _
      $region32: #{tpu_custom_call.1} parent=5 // pred_fallthru
        _
      %p4374 = scmp.le.s32.totalorder 2, %s13
      // Predicated region
      $region49: #{tpu_custom_call.1} parent=5 // pred_check
        %p4375 = pneg %p4374
      $region50: #{tpu_custom_call.1} parent=5 // pred_check_branch
        %4377 = sbr.rel (%p4375) target = $region52
      $region51: #{tpu_custom_call.1} parent=5 // pred_region
        %s4378 = ssub.s32 %s13, 2
        // Predicated region
        $region53: #{tpu_custom_call.1} parent=51 // pred_check
          %p4379 = pneg %p127
        $region54: #{tpu_custom_call.1} parent=51 // pred_check_branch
          %4381 = sbr.rel (%p4379) target = $region56
        $region55: #{tpu_custom_call.1} parent=51 // pred_region
          %s4382 = sand.u32 %s112, 1
          %s4383 = scalar_lea.sflag [#allocation4], %s4382
          %s4384 = sand.u32 %s112, 1
          %s4385 = smul.addr %s4384, 32
          %s4386 = scalar_lea.vmem [#allocation5], %s4385
          %4388 = dma.done %s4383, 512
        $region56: #{tpu_custom_call.1} parent=51 // pred_fallthru
          _
      $region52: #{tpu_custom_call.1} parent=5 // pred_fallthru
        _
    $region6: #{tpu_custom_call.1} parent=1 // loop_footer
      %s17 = sadd.s32 1, %s13
    $region7: #{tpu_custom_call.1} parent=1 // loop_footer_branch
      %12 = sbr.rel target = $region3
    $region8: #{tpu_custom_call.1} parent=1 // loop_exit
      _
    %4389 = vsyncpa [#allocation3], 1
    %s4390 = scalar_lea.sflag [#allocation3], 1
    %4391 = vsyncpa %s4390, 1
    %4392 = vsyncpa [#allocation4], 1
    %s4393 = scalar_lea.sflag [#allocation4], 1
    %4394 = vsyncpa %s4393, 1

</llo_original>
